<compile_context>
chip_gen: v7x
topology: tpu7x:2x2x1
jax: 0.10.0
libtpu: 0.0.40
codegen_flags: <defaults>
</compile_context>

<pallas_src>
import functools

import numpy as np

import jax
import jax.numpy as jnp
from jax.experimental import pallas as pl
from jax.experimental.pallas import tpu as pltpu


# ----------------------------------------------------------------------------
# Static architecture config (Python ints only - never traced)
# ----------------------------------------------------------------------------
class Configs:
    input_channels = 4
    kernel_size = 8
    stride = 1
    final_out_channels = 16
    features_len = 6      # temporal length after the 3 blocks for seq_len = 32
    num_classes = 5


_OUT_CHANNELS = (32, 64, Configs.final_out_channels)
_KERNEL_SIZES = (Configs.kernel_size, 8, 8)
_PADDINGS = (Configs.kernel_size // 2, 4, 4)
_BN_EPS = 1e-5
_DATA_OFF = 8     # per-segment data offset (>= conv pad + 1 keeps the pool pad row in-segment)
_HEAD_SEG = 8     # per-batch row budget of the final feature slab (>= features_len)


def _round_up(x, m):
    return -(-x // m) * m


# ----------------------------------------------------------------------------
# pltpu.roll direction probe (runs once at import, OUTSIDE any jit trace).
# A wrong shift sign would silently flip the conv taps, so detect it explicitly.
# ----------------------------------------------------------------------------
def _detect_roll_mode():
    def kernel(x_ref, o_ref):
        o_ref[...] = pltpu.roll(x_ref[...], shift=1, axis=0)

    try:
        x = jnp.broadcast_to(jnp.arange(8, dtype=jnp.float32)[:, None], (8, 128))
        y = pl.pallas_call(
            kernel,
            out_shape=jax.ShapeDtypeStruct((8, 128), jnp.float32),
            in_specs=[pl.BlockSpec(memory_space=pltpu.MemorySpace.VMEM)],
            out_specs=pl.BlockSpec(memory_space=pltpu.MemorySpace.VMEM),
        )(x)
        v = float(y[0, 0])
    except Exception:                      # roll unavailable -> slower concat fallback
        return "emulate"
    if v == 7.0:
        return "jnp"                       # roll(x, s)[r] == x[(r - s) % n]  (jnp.roll)
    if v == 1.0:
        return "flipped"                   # roll(x, s)[r] == x[(r + s) % n]
    return "emulate"


_ROLL_MODE = _detect_roll_mode()


def _shift_up(x, k):
    """Circular shift so that result[r] == x[(r + k) % rows]  (k is a static int > 0)."""
    rows = x.shape[0]
    if _ROLL_MODE == "jnp":
        return pltpu.roll(x, shift=rows - k, axis=0)
    if _ROLL_MODE == "flipped":
        return pltpu.roll(x, shift=k, axis=0)
    return jnp.concatenate([x[k:], x[:k]], axis=0)   # fallback path


# ----------------------------------------------------------------------------
# Static slab layout + 0/1 layout matrices (all compile-time constants)
# ----------------------------------------------------------------------------
@functools.lru_cache(maxsize=None)
def _plan(batch, length, n_cls):
    blocks = []
    cur_len = length
    for i in range(3):
        ksz, pad = _KERNEL_SIZES[i], _PADDINGS[i]
        off = _DATA_OFF
        assert off >= pad + 1, "data offset must cover conv pad + pool pad"
        seg = _round_up(off + cur_len + pad, 8)         # 8-aligned per-batch segment
        conv_len = cur_len + 2 * pad - ksz + 1          # stride-1 conv output length
        pool_len = conv_len // 2 + 1                    # MaxPool1d(2, 2, padding=1)
        blocks.append(dict(ksz=ksz, pad=pad, off=off, oc=off - pad, seg=seg,
                           rows=batch * seg, conv_len=conv_len, pool_len=pool_len))
        cur_len = pool_len

    masks, sels = [], []
    for i, blk in enumerate(blocks):
        # 1.0 on valid conv-output rows (used for BN stats and to zero garbage rows).
        mask = np.zeros((blk['rows'], 1), np.float32)
        for b in range(batch):
            s = b * blk['seg'] + blk['oc']
            mask[s:s + blk['conv_len'], 0] = 1.0
        masks.append(mask)

        # 0/1 selection: picks pooled window rows (row oc-1+2j of z = max(y[r], y[r+1]))
        # and places them (plus exact-zero padding) into the next block's slab layout.
        if i + 1 < len(blocks):
            seg_n, off_n, rows_n = (blocks[i + 1]['seg'], blocks[i + 1]['off'],
                                    blocks[i + 1]['rows'])
        else:
            seg_n, off_n, rows_n = _HEAD_SEG, 0, batch * _HEAD_SEG
        sel = np.zeros((rows_n, blk['rows']), np.float32)
        for b in range(batch):
            for j in range(blk['pool_len']):
                sel[b * seg_n + off_n + j,
                    b * blk['seg'] + blk['oc'] - 1 + 2 * j] = 1.0
        sels.append(sel)

    # Head constants.  Feature slab row p = b*8 + j holds feat[b, j, :].
    #   G  = F @ Whf            (row p, col j*n_cls + n  ->  <feat_p, W[:, c*L + j]>)
    #   Gd = G * mdiag          (keep only column block j == p % 8)
    #   H  = Gd @ ssum          (sum the 8 column blocks -> n_cls columns)
    #   logits = segsel @ H + b (sum each batch's 8 rows)
    mdiag = np.zeros((batch * _HEAD_SEG, _HEAD_SEG * n_cls), np.float32)
    for p in range(batch * _HEAD_SEG):
        j = p % _HEAD_SEG
        mdiag[p, j * n_cls:(j + 1) * n_cls] = 1.0
    ssum = np.zeros((_HEAD_SEG * n_cls, n_cls), np.float32)
    for j in range(_HEAD_SEG):
        ssum[j * n_cls:(j + 1) * n_cls, :] = np.eye(n_cls, dtype=np.float32)
    segsel = np.zeros((batch, batch * _HEAD_SEG), np.float32)
    for b in range(batch):
        segsel[b, b * _HEAD_SEG:(b + 1) * _HEAD_SEG] = 1.0

    return blocks, masks, sels, mdiag, ssum, segsel


# ----------------------------------------------------------------------------
# Fused kernel
# ----------------------------------------------------------------------------
def _fused_kernel(x_ref,
                  w1_ref, g1_ref, b1_ref, m1_ref, e1_ref,
                  w2_ref, g2_ref, b2_ref, m2_ref, e2_ref,
                  w3_ref, g3_ref, b3_ref, m3_ref, e3_ref,
                  whf_ref, mdiag_ref, ssum_ref, segsel_ref, bias_ref,
                  logits_ref, feats_ref, *, n_valid):
    """Whole forward pass; all intermediates stay in vregs/VMEM."""

    def conv_bn_relu_pool(x, w_ref, g_ref, b_ref, m_ref, e_ref, n_rows_valid):
        rows = x.shape[0]
        taps = w_ref.shape[0]

        # Conv1d as `taps` accumulated full-slab matmuls; tap shift = sublane rotation.
        acc = jnp.dot(x, w_ref[0], preferred_element_type=jnp.float32)
        for k in range(1, taps):
            acc = acc + jnp.dot(_shift_up(x, k), w_ref[k],
                                preferred_element_type=jnp.float32)

        # BatchNorm (batch statistics, biased variance), one pass over the masked slab.
        mask = m_ref[...]                                    # (rows, 1)
        inv_n = 1.0 / n_rows_valid
        am = acc * mask
        mean = jnp.sum(am, axis=0, keepdims=True) * inv_n    # (1, C_out)
        ex2 = jnp.sum(am * acc, axis=0, keepdims=True) * inv_n
        var = ex2 - mean * mean
        scale = g_ref[...] * jax.lax.rsqrt(var + _BN_EPS)
        shift = b_ref[...] - mean * scale
        y = jnp.maximum(acc * scale + shift, 0.0) * mask     # BN + ReLU, garbage rows -> 0

        # MaxPool1d(2, 2, padding=1): window j = max(rows 2j-1, 2j); zero rows stand in for
        # the pool padding (exact because y >= 0 post-ReLU).  The 0/1 selection matmul then
        # de-interleaves the window rows into the next block's slab (pad rows exactly zero).
        z = jnp.maximum(y, _shift_up(y, 1))                  # z[r] = max(y[r], y[r+1])
        return jnp.dot(e_ref[...], z, preferred_element_type=jnp.float32)

    x = conv_bn_relu_pool(x_ref[...], w1_ref, g1_ref, b1_ref, m1_ref, e1_ref, n_valid[0])
    x = conv_bn_relu_pool(x, w2_ref, g2_ref, b2_ref, m2_ref, e2_ref, n_valid[1])
    f = conv_bn_relu_pool(x, w3_ref, g3_ref, b3_ref, m3_ref, e3_ref, n_valid[2])

    feats_ref[...] = f                                       # (B*8, C3), one full store

    # Linear head (channel-major flatten f = c*L + j), no slices / concats:
    g = jnp.dot(f, whf_ref[...], preferred_element_type=jnp.float32)        # (B*8, 8*ncls)
    h = jnp.dot(g * mdiag_ref[...], ssum_ref[...],
                preferred_element_type=jnp.float32)                          # (B*8, ncls)
    logits_ref[...] = (jnp.dot(segsel_ref[...], h, preferred_element_type=jnp.float32)
                       + bias_ref[...])


# ----------------------------------------------------------------------------
# Parameters & forward wrapper
# ----------------------------------------------------------------------------
def init_params(key, cfg):
    """Parameters in PyTorch layouts (Conv1d: (C_out, C_in, K); Linear: (N, C*L)).
    NOTE: ad-hoc 0.1*normal init - port real weights for numerical parity with PyTorch."""
    keys = jax.random.split(key, 5)
    params = {'conv_w': [], 'bn_gamma': [], 'bn_beta': []}
    in_c = cfg.input_channels
    for i in range(3):
        w = 0.1 * jax.random.normal(
            keys[i], (_OUT_CHANNELS[i], in_c, _KERNEL_SIZES[i]), jnp.float32)
        params['conv_w'].append(w)
        params['bn_gamma'].append(jnp.ones((_OUT_CHANNELS[i],), jnp.float32))
        params['bn_beta'].append(jnp.zeros((_OUT_CHANNELS[i],), jnp.float32))
        in_c = _OUT_CHANNELS[i]
    flat_dim = cfg.features_len * cfg.final_out_channels
    params['lin_w'] = 0.1 * jax.random.normal(
        keys[3], (cfg.num_classes, flat_dim), jnp.float32)
    params['lin_b'] = 0.1 * jax.random.normal(keys[4], (cfg.num_classes,), jnp.float32)
    return params


def forward(params, x_ncl):
    """x_ncl: (B, C_in, L) like the PyTorch module. Returns (logits, features_ncl)."""
    batch, c_in, length = x_ncl.shape
    n_cls, flat_dim = params['lin_w'].shape
    c3 = _OUT_CHANNELS[-1]

    blocks, masks, sels, mdiag, ssum, segsel = _plan(batch, length, n_cls)
    lp3 = blocks[-1]['pool_len']
    assert lp3 <= _HEAD_SEG and lp3 * c3 == flat_dim, \
        "features_len mismatch with input length"

    # Weight re-layout (tiny, done once by XLA).
    w_taps = [jnp.transpose(w, (2, 1, 0)) for w in params['conv_w']]   # (K, C_in, C_out)
    gammas = [g.reshape(1, -1) for g in params['bn_gamma']]
    betas = [b.reshape(1, -1) for b in params['bn_beta']]
    # Head weight: whf[c, j*n_cls + n] = W_lin[n, c*lp3 + j]  (rows 6,7 zero-padded).
    whf = jnp.transpose(params['lin_w'].reshape(n_cls, c3, lp3), (1, 2, 0))
    whf = jnp.pad(whf, ((0, 0), (0, _HEAD_SEG - lp3), (0, 0)))
    whf = whf.reshape(c3, _HEAD_SEG * n_cls)
    bias = params['lin_b'].reshape(1, n_cls)

    # Block-1 input slab (B*seg1, C_in): channels-last, conv padding already in place.
    blk1 = blocks[0]
    x_cl = jnp.transpose(x_ncl, (0, 2, 1))
    x_slab = jnp.pad(
        x_cl, ((0, 0), (blk1['off'], blk1['seg'] - blk1['off'] - length), (0, 0)))
    x_slab = x_slab.reshape(batch * blk1['seg'], c_in)

    operands = (
        x_slab,
        w_taps[0], gammas[0], betas[0], jnp.asarray(masks[0]), jnp.asarray(sels[0]),
        w_taps[1], gammas[1], betas[1], jnp.asarray(masks[1]), jnp.asarray(sels[1]),
        w_taps[2], gammas[2], betas[2], jnp.asarray(masks[2]), jnp.asarray(sels[2]),
        whf, jnp.asarray(mdiag), jnp.asarray(ssum), jnp.asarray(segsel), bias,
    )
    vmem = pl.BlockSpec(memory_space=pltpu.MemorySpace.VMEM)
    kernel = functools.partial(
        _fused_kernel,
        n_valid=tuple(float(batch * blk['conv_len']) for blk in blocks))

    logits, feats_slab = pl.pallas_call(
        kernel,
        out_shape=(jax.ShapeDtypeStruct((batch, n_cls), jnp.float32),
                   jax.ShapeDtypeStruct((batch * _HEAD_SEG, c3), jnp.float32)),
        in_specs=[vmem] * len(operands),
        out_specs=(vmem, vmem),
    )(*operands)

    feats = feats_slab.reshape(batch, _HEAD_SEG, c3)[:, :lp3, :]
    feats_ncl = jnp.transpose(feats, (0, 2, 1))               # (B, C_final, L_final)
    return logits, feats_ncl


if __name__ == "__main__":
    cfg = Configs()
    key = jax.random.PRNGKey(0)
    pkey, xkey = jax.random.split(key)

    params = init_params(pkey, cfg)
    batch, length = 2, 32
    x_in = jax.random.normal(xkey, (batch, cfg.input_channels, length), jnp.float32)

    logits, feats = jax.jit(forward)(params, x_in)
    jax.block_until_ready((logits, feats))

    assert logits.shape == (batch, cfg.num_classes), logits.shape
    assert feats.shape == (batch, cfg.final_out_channels, cfg.features_len), feats.shape
    print("KERNEL_OK")
</pallas_src>

<mosaic_0001>
module attributes {stable_mosaic.version = 11 : i64} {
  func.func @kernel(%arg0: memref<8x128xf32, #tpu.memory_space<vmem>>, %arg1: memref<8x128xf32, #tpu.memory_space<vmem>>) attributes {dimension_semantics = [], scalar_prefetch = 0 : i64, scratch_operands = 0 : i64, tpu.core_type = #tpu.core_type<tc>} {
    %c0 = arith.constant 0 : index
    %c0_0 = arith.constant 0 : index
    %0 = vector.load %arg0[%c0, %c0_0] : memref<8x128xf32, #tpu.memory_space<vmem>>, vector<8x128xf32>
    %c1_i32 = arith.constant 1 : i32
    %1 = tpu.dynamic_rotate %0 by %c1_i32 dim 0 : vector<8x128xf32>, i32 -> vector<8x128xf32>
    %c0_1 = arith.constant 0 : index
    %c0_2 = arith.constant 0 : index
    %2 = vector.load %arg1[%c0_1, %c0_2] : memref<8x128xf32, #tpu.memory_space<vmem>>, vector<8x128xf32>
    tpu.vector_store %arg1[%c0_1, %c0_2], %1 {strides = array<i32>} : memref<8x128xf32, #tpu.memory_space<vmem>>, vector<8x128xf32>,
    return
  }
}

module attributes {stable_mosaic.version = 11 : i64} {
  func.func @_fused_kernel(%arg0: memref<96x4xf32, #tpu.memory_space<vmem>>, %arg1: memref<8x4x32xf32, #tpu.memory_space<vmem>>, %arg2: memref<1x32xf32, #tpu.memory_space<vmem>>, %arg3: memref<1x32xf32, #tpu.memory_space<vmem>>, %arg4: memref<96x1xf32, #tpu.memory_space<vmem>>, %arg5: memref<64x96xf32, #tpu.memory_space<vmem>>, %arg6: memref<8x32x64xf32, #tpu.memory_space<vmem>>, %arg7: memref<1x64xf32, #tpu.memory_space<vmem>>, %arg8: memref<1x64xf32, #tpu.memory_space<vmem>>, %arg9: memref<64x1xf32, #tpu.memory_space<vmem>>, %arg10: memref<48x64xf32, #tpu.memory_space<vmem>>, %arg11: memref<8x64x16xf32, #tpu.memory_space<vmem>>, %arg12: memref<1x16xf32, #tpu.memory_space<vmem>>, %arg13: memref<1x16xf32, #tpu.memory_space<vmem>>, %arg14: memref<48x1xf32, #tpu.memory_space<vmem>>, %arg15: memref<16x48xf32, #tpu.memory_space<vmem>>, %arg16: memref<16x40xf32, #tpu.memory_space<vmem>>, %arg17: memref<16x40xf32, #tpu.memory_space<vmem>>, %arg18: memref<40x5xf32, #tpu.memory_space<vmem>>, %arg19: memref<2x16xf32, #tpu.memory_space<vmem>>, %arg20: memref<1x5xf32, #tpu.memory_space<vmem>>, %arg21: memref<2x5xf32, #tpu.memory_space<vmem>>, %arg22: memref<16x16xf32, #tpu.memory_space<vmem>>) attributes {dimension_semantics = [], scalar_prefetch = 0 : i64, scratch_operands = 0 : i64, tpu.core_type = #tpu.core_type<tc>} {
    %c0 = arith.constant 0 : index
    %c0_0 = arith.constant 0 : index
    %0 = vector.load %arg0[%c0, %c0_0] : memref<96x4xf32, #tpu.memory_space<vmem>>, vector<96x4xf32>
    %c0_1 = arith.constant 0 : index
    %c0_2 = arith.constant 0 : index
    %c0_3 = arith.constant 0 : index
    %1 = vector.load %arg1[%c0_1, %c0_2, %c0_3] : memref<8x4x32xf32, #tpu.memory_space<vmem>>, vector<1x4x32xf32>
    %2 = vector.shape_cast %1 : vector<1x4x32xf32> to vector<4x32xf32>
    %cst = arith.constant dense<0.000000e+00> : vector<96x32xf32>
    %3 = tpu.matmul %0, %2, %cst {dimension_numbers = #tpu.dot_dimension_numbers<[1], [0], [0], [1], [0, 0, 1, 1], [], []>} : vector<96x4xf32>, vector<4x32xf32>, vector<96x32xf32> -> vector<96x32xf32>
    %4 = vector.extract_strided_slice %0 {offsets = [1, 0], sizes = [95, 4], strides = [1, 1]} : vector<96x4xf32> to vector<95x4xf32>
    %5 = vector.extract_strided_slice %0 {offsets = [0, 0], sizes = [1, 4], strides = [1, 1]} : vector<96x4xf32> to vector<1x4xf32>
    %6 = tpu.concatenate %4, %5 in 0 : vector<95x4xf32>, vector<1x4xf32> -> vector<96x4xf32>
    %c1 = arith.constant 1 : index
    %c0_4 = arith.constant 0 : index
    %c0_5 = arith.constant 0 : index
    %7 = vector.load %arg1[%c1, %c0_4, %c0_5] : memref<8x4x32xf32, #tpu.memory_space<vmem>>, vector<1x4x32xf32>
    %8 = vector.shape_cast %7 : vector<1x4x32xf32> to vector<4x32xf32>
    %cst_6 = arith.constant dense<0.000000e+00> : vector<96x32xf32>
    %9 = tpu.matmul %6, %8, %cst_6 {dimension_numbers = #tpu.dot_dimension_numbers<[1], [0], [0], [1], [0, 0, 1, 1], [], []>} : vector<96x4xf32>, vector<4x32xf32>, vector<96x32xf32> -> vector<96x32xf32>
    %10 = arith.addf %3, %9 : vector<96x32xf32>
    %11 = vector.extract_strided_slice %0 {offsets = [2, 0], sizes = [94, 4], strides = [1, 1]} : vector<96x4xf32> to vector<94x4xf32>
    %12 = vector.extract_strided_slice %0 {offsets = [0, 0], sizes = [2, 4], strides = [1, 1]} : vector<96x4xf32> to vector<2x4xf32>
    %13 = tpu.concatenate %11, %12 in 0 : vector<94x4xf32>, vector<2x4xf32> -> vector<96x4xf32>
    %c2 = arith.constant 2 : index
    %c0_7 = arith.constant 0 : index
    %c0_8 = arith.constant 0 : index
    %14 = vector.load %arg1[%c2, %c0_7, %c0_8] : memref<8x4x32xf32, #tpu.memory_space<vmem>>, vector<1x4x32xf32>
    %15 = vector.shape_cast %14 : vector<1x4x32xf32> to vector<4x32xf32>
    %cst_9 = arith.constant dense<0.000000e+00> : vector<96x32xf32>
    %16 = tpu.matmul %13, %15, %cst_9 {dimension_numbers = #tpu.dot_dimension_numbers<[1], [0], [0], [1], [0, 0, 1, 1], [], []>} : vector<96x4xf32>, vector<4x32xf32>, vector<96x32xf32> -> vector<96x32xf32>
    %17 = arith.addf %10, %16 : vector<96x32xf32>
    %18 = vector.extract_strided_slice %0 {offsets = [3, 0], sizes = [93, 4], strides = [1, 1]} : vector<96x4xf32> to vector<93x4xf32>
    %19 = vector.extract_strided_slice %0 {offsets = [0, 0], sizes = [3, 4], strides = [1, 1]} : vector<96x4xf32> to vector<3x4xf32>
    %20 = tpu.concatenate %18, %19 in 0 : vector<93x4xf32>, vector<3x4xf32> -> vector<96x4xf32>
    %c3 = arith.constant 3 : index
    %c0_10 = arith.constant 0 : index
    %c0_11 = arith.constant 0 : index
    %21 = vector.load %arg1[%c3, %c0_10, %c0_11] : memref<8x4x32xf32, #tpu.memory_space<vmem>>, vector<1x4x32xf32>
    %22 = vector.shape_cast %21 : vector<1x4x32xf32> to vector<4x32xf32>
    %cst_12 = arith.constant dense<0.000000e+00> : vector<96x32xf32>
    %23 = tpu.matmul %20, %22, %cst_12 {dimension_numbers = #tpu.dot_dimension_numbers<[1], [0], [0], [1], [0, 0, 1, 1], [], []>} : vector<96x4xf32>, vector<4x32xf32>, vector<96x32xf32> -> vector<96x32xf32>
    %24 = arith.addf %17, %23 : vector<96x32xf32>
    %25 = vector.extract_strided_slice %0 {offsets = [4, 0], sizes = [92, 4], strides = [1, 1]} : vector<96x4xf32> to vector<92x4xf32>
    %26 = vector.extract_strided_slice %0 {offsets = [0, 0], sizes = [4, 4], strides = [1, 1]} : vector<96x4xf32> to vector<4x4xf32>
    %27 = tpu.concatenate %25, %26 in 0 : vector<92x4xf32>, vector<4x4xf32> -> vector<96x4xf32>
    %c4 = arith.constant 4 : index
    %c0_13 = arith.constant 0 : index
    %c0_14 = arith.constant 0 : index
    %28 = vector.load %arg1[%c4, %c0_13, %c0_14] : memref<8x4x32xf32, #tpu.memory_space<vmem>>, vector<1x4x32xf32>
    %29 = vector.shape_cast %28 : vector<1x4x32xf32> to vector<4x32xf32>
    %cst_15 = arith.constant dense<0.000000e+00> : vector<96x32xf32>
    %30 = tpu.matmul %27, %29, %cst_15 {dimension_numbers = #tpu.dot_dimension_numbers<[1], [0], [0], [1], [0, 0, 1, 1], [], []>} : vector<96x4xf32>, vector<4x32xf32>, vector<96x32xf32> -> vector<96x32xf32>
    %31 = arith.addf %24, %30 : vector<96x32xf32>
    %32 = vector.extract_strided_slice %0 {offsets = [5, 0], sizes = [91, 4], strides = [1, 1]} : vector<96x4xf32> to vector<91x4xf32>
    %33 = vector.extract_strided_slice %0 {offsets = [0, 0], sizes = [5, 4], strides = [1, 1]} : vector<96x4xf32> to vector<5x4xf32>
    %34 = tpu.concatenate %32, %33 in 0 : vector<91x4xf32>, vector<5x4xf32> -> vector<96x4xf32>
    %c5 = arith.constant 5 : index
    %c0_16 = arith.constant 0 : index
    %c0_17 = arith.constant 0 : index
    %35 = vector.load %arg1[%c5, %c0_16, %c0_17] : memref<8x4x32xf32, #tpu.memory_space<vmem>>, vector<1x4x32xf32>
    %36 = vector.shape_cast %35 : vector<1x4x32xf32> to vector<4x32xf32>
    %cst_18 = arith.constant dense<0.000000e+00> : vector<96x32xf32>
    %37 = tpu.matmul %34, %36, %cst_18 {dimension_numbers = #tpu.dot_dimension_numbers<[1], [0], [0], [1], [0, 0, 1, 1], [], []>} : vector<96x4xf32>, vector<4x32xf32>, vector<96x32xf32> -> vector<96x32xf32>
    %38 = arith.addf %31, %37 : vector<96x32xf32>
    %39 = vector.extract_strided_slice %0 {offsets = [6, 0], sizes = [90, 4], strides = [1, 1]} : vector<96x4xf32> to vector<90x4xf32>
    %40 = vector.extract_strided_slice %0 {offsets = [0, 0], sizes = [6, 4], strides = [1, 1]} : vector<96x4xf32> to vector<6x4xf32>
    %41 = tpu.concatenate %39, %40 in 0 : vector<90x4xf32>, vector<6x4xf32> -> vector<96x4xf32>
    %c6 = arith.constant 6 : index
    %c0_19 = arith.constant 0 : index
    %c0_20 = arith.constant 0 : index
    %42 = vector.load %arg1[%c6, %c0_19, %c0_20] : memref<8x4x32xf32, #tpu.memory_space<vmem>>, vector<1x4x32xf32>
    %43 = vector.shape_cast %42 : vector<1x4x32xf32> to vector<4x32xf32>
    %cst_21 = arith.constant dense<0.000000e+00> : vector<96x32xf32>
    %44 = tpu.matmul %41, %43, %cst_21 {dimension_numbers = #tpu.dot_dimension_numbers<[1], [0], [0], [1], [0, 0, 1, 1], [], []>} : vector<96x4xf32>, vector<4x32xf32>, vector<96x32xf32> -> vector<96x32xf32>
    %45 = arith.addf %38, %44 : vector<96x32xf32>
    %46 = vector.extract_strided_slice %0 {offsets = [7, 0], sizes = [89, 4], strides = [1, 1]} : vector<96x4xf32> to vector<89x4xf32>
    %47 = vector.extract_strided_slice %0 {offsets = [0, 0], sizes = [7, 4], strides = [1, 1]} : vector<96x4xf32> to vector<7x4xf32>
    %48 = tpu.concatenate %46, %47 in 0 : vector<89x4xf32>, vector<7x4xf32> -> vector<96x4xf32>
    %c7 = arith.constant 7 : index
    %c0_22 = arith.constant 0 : index
    %c0_23 = arith.constant 0 : index
    %49 = vector.load %arg1[%c7, %c0_22, %c0_23] : memref<8x4x32xf32, #tpu.memory_space<vmem>>, vector<1x4x32xf32>
    %50 = vector.shape_cast %49 : vector<1x4x32xf32> to vector<4x32xf32>
    %cst_24 = arith.constant dense<0.000000e+00> : vector<96x32xf32>
    %51 = tpu.matmul %48, %50, %cst_24 {dimension_numbers = #tpu.dot_dimension_numbers<[1], [0], [0], [1], [0, 0, 1, 1], [], []>} : vector<96x4xf32>, vector<4x32xf32>, vector<96x32xf32> -> vector<96x32xf32>
    %52 = arith.addf %45, %51 : vector<96x32xf32>
    %c0_25 = arith.constant 0 : index
    %c0_26 = arith.constant 0 : index
    %53 = vector.load %arg4[%c0_25, %c0_26] : memref<96x1xf32, #tpu.memory_space<vmem>>, vector<96x1xf32>
    %54 = vector.broadcast %53 : vector<96x1xf32> to vector<96x32xf32>
    %55 = arith.mulf %52, %54 : vector<96x32xf32>
    %cst_27 = arith.constant dense<0.000000e+00> : vector<32xf32>
    %56 = vector.multi_reduction <add>, %55, %cst_27 [0] : vector<96x32xf32> to vector<32xf32>
    %57 = vector.shape_cast %56 : vector<32xf32> to vector<1x32xf32>
    %cst_28 = arith.constant 0.0151515156 : f32
    %58 = vector.broadcast %cst_28 : f32 to vector<1x32xf32>
    %59 = arith.mulf %57, %58 : vector<1x32xf32>
    %60 = arith.mulf %55, %52 : vector<96x32xf32>
    %cst_29 = arith.constant dense<0.000000e+00> : vector<32xf32>
    %61 = vector.multi_reduction <add>, %60, %cst_29 [0] : vector<96x32xf32> to vector<32xf32>
    %62 = vector.shape_cast %61 : vector<32xf32> to vector<1x32xf32>
    %cst_30 = arith.constant 0.0151515156 : f32
    %63 = vector.broadcast %cst_30 : f32 to vector<1x32xf32>
    %64 = arith.mulf %62, %63 : vector<1x32xf32>
    %65 = arith.mulf %59, %59 : vector<1x32xf32>
    %66 = arith.subf %64, %65 : vector<1x32xf32>
    %c0_31 = arith.constant 0 : index
    %c0_32 = arith.constant 0 : index
    %67 = vector.load %arg2[%c0_31, %c0_32] : memref<1x32xf32, #tpu.memory_space<vmem>>, vector<1x32xf32>
    %cst_33 = arith.constant 9.99999974E-6 : f32
    %68 = vector.broadcast %cst_33 : f32 to vector<1x32xf32>
    %69 = arith.addf %66, %68 : vector<1x32xf32>
    %70 = math.rsqrt %69 : vector<1x32xf32>
    %71 = arith.mulf %67, %70 : vector<1x32xf32>
    %c0_34 = arith.constant 0 : index
    %c0_35 = arith.constant 0 : index
    %72 = vector.load %arg3[%c0_34, %c0_35] : memref<1x32xf32, #tpu.memory_space<vmem>>, vector<1x32xf32>
    %73 = arith.mulf %59, %71 : vector<1x32xf32>
    %74 = arith.subf %72, %73 : vector<1x32xf32>
    %75 = vector.broadcast %71 : vector<1x32xf32> to vector<96x32xf32>
    %76 = arith.mulf %52, %75 : vector<96x32xf32>
    %77 = vector.broadcast %74 : vector<1x32xf32> to vector<96x32xf32>
    %78 = arith.addf %76, %77 : vector<96x32xf32>
    %cst_36 = arith.constant 0.000000e+00 : f32
    %79 = vector.broadcast %cst_36 : f32 to vector<96x32xf32>
    %80 = arith.maximumf %78, %79 : vector<96x32xf32>
    %81 = vector.broadcast %53 : vector<96x1xf32> to vector<96x32xf32>
    %82 = arith.mulf %80, %81 : vector<96x32xf32>
    %83 = vector.extract_strided_slice %82 {offsets = [1, 0], sizes = [95, 32], strides = [1, 1]} : vector<96x32xf32> to vector<95x32xf32>
    %84 = vector.extract_strided_slice %82 {offsets = [0, 0], sizes = [1, 32], strides = [1, 1]} : vector<96x32xf32> to vector<1x32xf32>
    %85 = tpu.concatenate %83, %84 in 0 : vector<95x32xf32>, vector<1x32xf32> -> vector<96x32xf32>
    %86 = arith.maximumf %82, %85 : vector<96x32xf32>
    %c0_37 = arith.constant 0 : index
    %c0_38 = arith.constant 0 : index
    %87 = vector.load %arg5[%c0_37, %c0_38] : memref<64x96xf32, #tpu.memory_space<vmem>>, vector<64x96xf32>
    %cst_39 = arith.constant dense<0.000000e+00> : vector<64x32xf32>
    %88 = tpu.matmul %87, %86, %cst_39 {dimension_numbers = #tpu.dot_dimension_numbers<[1], [0], [0], [1], [0, 0, 1, 1], [], []>} : vector<64x96xf32>, vector<96x32xf32>, vector<64x32xf32> -> vector<64x32xf32>
    %c0_40 = arith.constant 0 : index
    %c0_41 = arith.constant 0 : index
    %c0_42 = arith.constant 0 : index
    %89 = vector.load %arg6[%c0_40, %c0_41, %c0_42] : memref<8x32x64xf32, #tpu.memory_space<vmem>>, vector<1x32x64xf32>
    %90 = vector.shape_cast %89 : vector<1x32x64xf32> to vector<32x64xf32>
    %cst_43 = arith.constant dense<0.000000e+00> : vector<64x64xf32>
    %91 = tpu.matmul %88, %90, %cst_43 {dimension_numbers = #tpu.dot_dimension_numbers<[1], [0], [0], [1], [0, 0, 1, 1], [], []>} : vector<64x32xf32>, vector<32x64xf32>, vector<64x64xf32> -> vector<64x64xf32>
    %92 = vector.extract_strided_slice %88 {offsets = [1, 0], sizes = [63, 32], strides = [1, 1]} : vector<64x32xf32> to vector<63x32xf32>
    %93 = vector.extract_strided_slice %88 {offsets = [0, 0], sizes = [1, 32], strides = [1, 1]} : vector<64x32xf32> to vector<1x32xf32>
    %94 = tpu.concatenate %92, %93 in 0 : vector<63x32xf32>, vector<1x32xf32> -> vector<64x32xf32>
    %c1_44 = arith.constant 1 : index
    %c0_45 = arith.constant 0 : index
    %c0_46 = arith.constant 0 : index
    %95 = vector.load %arg6[%c1_44, %c0_45, %c0_46] : memref<8x32x64xf32, #tpu.memory_space<vmem>>, vector<1x32x64xf32>
    %96 = vector.shape_cast %95 : vector<1x32x64xf32> to vector<32x64xf32>
    %cst_47 = arith.constant dense<0.000000e+00> : vector<64x64xf32>
    %97 = tpu.matmul %94, %96, %cst_47 {dimension_numbers = #tpu.dot_dimension_numbers<[1], [0], [0], [1], [0, 0, 1, 1], [], []>} : vector<64x32xf32>, vector<32x64xf32>, vector<64x64xf32> -> vector<64x64xf32>
    %98 = arith.addf %91, %97 : vector<64x64xf32>
    %99 = vector.extract_strided_slice %88 {offsets = [2, 0], sizes = [62, 32], strides = [1, 1]} : vector<64x32xf32> to vector<62x32xf32>
    %100 = vector.extract_strided_slice %88 {offsets = [0, 0], sizes = [2, 32], strides = [1, 1]} : vector<64x32xf32> to vector<2x32xf32>
    %101 = tpu.concatenate %99, %100 in 0 : vector<62x32xf32>, vector<2x32xf32> -> vector<64x32xf32>
    %c2_48 = arith.constant 2 : index
    %c0_49 = arith.constant 0 : index
    %c0_50 = arith.constant 0 : index
    %102 = vector.load %arg6[%c2_48, %c0_49, %c0_50] : memref<8x32x64xf32, #tpu.memory_space<vmem>>, vector<1x32x64xf32>
    %103 = vector.shape_cast %102 : vector<1x32x64xf32> to vector<32x64xf32>
    %cst_51 = arith.constant dense<0.000000e+00> : vector<64x64xf32>
    %104 = tpu.matmul %101, %103, %cst_51 {dimension_numbers = #tpu.dot_dimension_numbers<[1], [0], [0], [1], [0, 0, 1, 1], [], []>} : vector<64x32xf32>, vector<32x64xf32>, vector<64x64xf32> -> vector<64x64xf32>
    %105 = arith.addf %98, %104 : vector<64x64xf32>
    %106 = vector.extract_strided_slice %88 {offsets = [3, 0], sizes = [61, 32], strides = [1, 1]} : vector<64x32xf32> to vector<61x32xf32>
    %107 = vector.extract_strided_slice %88 {offsets = [0, 0], sizes = [3, 32], strides = [1, 1]} : vector<64x32xf32> to vector<3x32xf32>
    %108 = tpu.concatenate %106, %107 in 0 : vector<61x32xf32>, vector<3x32xf32> -> vector<64x32xf32>
    %c3_52 = arith.constant 3 : index
    %c0_53 = arith.constant 0 : index
    %c0_54 = arith.constant 0 : index
    %109 = vector.load %arg6[%c3_52, %c0_53, %c0_54] : memref<8x32x64xf32, #tpu.memory_space<vmem>>, vector<1x32x64xf32>
    %110 = vector.shape_cast %109 : vector<1x32x64xf32> to vector<32x64xf32>
    %cst_55 = arith.constant dense<0.000000e+00> : vector<64x64xf32>
    %111 = tpu.matmul %108, %110, %cst_55 {dimension_numbers = #tpu.dot_dimension_numbers<[1], [0], [0], [1], [0, 0, 1, 1], [], []>} : vector<64x32xf32>, vector<32x64xf32>, vector<64x64xf32> -> vector<64x64xf32>
    %112 = arith.addf %105, %111 : vector<64x64xf32>
    %113 = vector.extract_strided_slice %88 {offsets = [4, 0], sizes = [60, 32], strides = [1, 1]} : vector<64x32xf32> to vector<60x32xf32>
    %114 = vector.extract_strided_slice %88 {offsets = [0, 0], sizes = [4, 32], strides = [1, 1]} : vector<64x32xf32> to vector<4x32xf32>
    %115 = tpu.concatenate %113, %114 in 0 : vector<60x32xf32>, vector<4x32xf32> -> vector<64x32xf32>
    %c4_56 = arith.constant 4 : index
    %c0_57 = arith.constant 0 : index
    %c0_58 = arith.constant 0 : index
    %116 = vector.load %arg6[%c4_56, %c0_57, %c0_58] : memref<8x32x64xf32, #tpu.memory_space<vmem>>, vector<1x32x64xf32>
    %117 = vector.shape_cast %116 : vector<1x32x64xf32> to vector<32x64xf32>
    %cst_59 = arith.constant dense<0.000000e+00> : vector<64x64xf32>
    %118 = tpu.matmul %115, %117, %cst_59 {dimension_numbers = #tpu.dot_dimension_numbers<[1], [0], [0], [1], [0, 0, 1, 1], [], []>} : vector<64x32xf32>, vector<32x64xf32>, vector<64x64xf32> -> vector<64x64xf32>
    %119 = arith.addf %112, %118 : vector<64x64xf32>
    %120 = vector.extract_strided_slice %88 {offsets = [5, 0], sizes = [59, 32], strides = [1, 1]} : vector<64x32xf32> to vector<59x32xf32>
    %121 = vector.extract_strided_slice %88 {offsets = [0, 0], sizes = [5, 32], strides = [1, 1]} : vector<64x32xf32> to vector<5x32xf32>
    %122 = tpu.concatenate %120, %121 in 0 : vector<59x32xf32>, vector<5x32xf32> -> vector<64x32xf32>
    %c5_60 = arith.constant 5 : index
    %c0_61 = arith.constant 0 : index
    %c0_62 = arith.constant 0 : index
    %123 = vector.load %arg6[%c5_60, %c0_61, %c0_62] : memref<8x32x64xf32, #tpu.memory_space<vmem>>, vector<1x32x64xf32>
    %124 = vector.shape_cast %123 : vector<1x32x64xf32> to vector<32x64xf32>
    %cst_63 = arith.constant dense<0.000000e+00> : vector<64x64xf32>
    %125 = tpu.matmul %122, %124, %cst_63 {dimension_numbers = #tpu.dot_dimension_numbers<[1], [0], [0], [1], [0, 0, 1, 1], [], []>} : vector<64x32xf32>, vector<32x64xf32>, vector<64x64xf32> -> vector<64x64xf32>
    %126 = arith.addf %119, %125 : vector<64x64xf32>
    %127 = vector.extract_strided_slice %88 {offsets = [6, 0], sizes = [58, 32], strides = [1, 1]} : vector<64x32xf32> to vector<58x32xf32>
    %128 = vector.extract_strided_slice %88 {offsets = [0, 0], sizes = [6, 32], strides = [1, 1]} : vector<64x32xf32> to vector<6x32xf32>
    %129 = tpu.concatenate %127, %128 in 0 : vector<58x32xf32>, vector<6x32xf32> -> vector<64x32xf32>
    %c6_64 = arith.constant 6 : index
    %c0_65 = arith.constant 0 : index
    %c0_66 = arith.constant 0 : index
    %130 = vector.load %arg6[%c6_64, %c0_65, %c0_66] : memref<8x32x64xf32, #tpu.memory_space<vmem>>, vector<1x32x64xf32>
    %131 = vector.shape_cast %130 : vector<1x32x64xf32> to vector<32x64xf32>
    %cst_67 = arith.constant dense<0.000000e+00> : vector<64x64xf32>
    %132 = tpu.matmul %129, %131, %cst_67 {dimension_numbers = #tpu.dot_dimension_numbers<[1], [0], [0], [1], [0, 0, 1, 1], [], []>} : vector<64x32xf32>, vector<32x64xf32>, vector<64x64xf32> -> vector<64x64xf32>
    %133 = arith.addf %126, %132 : vector<64x64xf32>
    %134 = vector.extract_strided_slice %88 {offsets = [7, 0], sizes = [57, 32], strides = [1, 1]} : vector<64x32xf32> to vector<57x32xf32>
    %135 = vector.extract_strided_slice %88 {offsets = [0, 0], sizes = [7, 32], strides = [1, 1]} : vector<64x32xf32> to vector<7x32xf32>
    %136 = tpu.concatenate %134, %135 in 0 : vector<57x32xf32>, vector<7x32xf32> -> vector<64x32xf32>
    %c7_68 = arith.constant 7 : index
    %c0_69 = arith.constant 0 : index
    %c0_70 = arith.constant 0 : index
    %137 = vector.load %arg6[%c7_68, %c0_69, %c0_70] : memref<8x32x64xf32, #tpu.memory_space<vmem>>, vector<1x32x64xf32>
    %138 = vector.shape_cast %137 : vector<1x32x64xf32> to vector<32x64xf32>
    %cst_71 = arith.constant dense<0.000000e+00> : vector<64x64xf32>
    %139 = tpu.matmul %136, %138, %cst_71 {dimension_numbers = #tpu.dot_dimension_numbers<[1], [0], [0], [1], [0, 0, 1, 1], [], []>} : vector<64x32xf32>, vector<32x64xf32>, vector<64x64xf32> -> vector<64x64xf32>
    %140 = arith.addf %133, %139 : vector<64x64xf32>
    %c0_72 = arith.constant 0 : index
    %c0_73 = arith.constant 0 : index
    %141 = vector.load %arg9[%c0_72, %c0_73] : memref<64x1xf32, #tpu.memory_space<vmem>>, vector<64x1xf32>
    %142 = vector.broadcast %141 : vector<64x1xf32> to vector<64x64xf32>
    %143 = arith.mulf %140, %142 : vector<64x64xf32>
    %cst_74 = arith.constant dense<0.000000e+00> : vector<64xf32>
    %144 = vector.multi_reduction <add>, %143, %cst_74 [0] : vector<64x64xf32> to vector<64xf32>
    %145 = vector.shape_cast %144 : vector<64xf32> to vector<1x64xf32>
    %cst_75 = arith.constant 0.027777778 : f32
    %146 = vector.broadcast %cst_75 : f32 to vector<1x64xf32>
    %147 = arith.mulf %145, %146 : vector<1x64xf32>
    %148 = arith.mulf %143, %140 : vector<64x64xf32>
    %cst_76 = arith.constant dense<0.000000e+00> : vector<64xf32>
    %149 = vector.multi_reduction <add>, %148, %cst_76 [0] : vector<64x64xf32> to vector<64xf32>
    %150 = vector.shape_cast %149 : vector<64xf32> to vector<1x64xf32>
    %cst_77 = arith.constant 0.027777778 : f32
    %151 = vector.broadcast %cst_77 : f32 to vector<1x64xf32>
    %152 = arith.mulf %150, %151 : vector<1x64xf32>
    %153 = arith.mulf %147, %147 : vector<1x64xf32>
    %154 = arith.subf %152, %153 : vector<1x64xf32>
    %c0_78 = arith.constant 0 : index
    %c0_79 = arith.constant 0 : index
    %155 = vector.load %arg7[%c0_78, %c0_79] : memref<1x64xf32, #tpu.memory_space<vmem>>, vector<1x64xf32>
    %cst_80 = arith.constant 9.99999974E-6 : f32
    %156 = vector.broadcast %cst_80 : f32 to vector<1x64xf32>
    %157 = arith.addf %154, %156 : vector<1x64xf32>
    %158 = math.rsqrt %157 : vector<1x64xf32>
    %159 = arith.mulf %155, %158 : vector<1x64xf32>
    %c0_81 = arith.constant 0 : index
    %c0_82 = arith.constant 0 : index
    %160 = vector.load %arg8[%c0_81, %c0_82] : memref<1x64xf32, #tpu.memory_space<vmem>>, vector<1x64xf32>
    %161 = arith.mulf %147, %159 : vector<1x64xf32>
    %162 = arith.subf %160, %161 : vector<1x64xf32>
    %163 = vector.broadcast %159 : vector<1x64xf32> to vector<64x64xf32>
    %164 = arith.mulf %140, %163 : vector<64x64xf32>
    %165 = vector.broadcast %162 : vector<1x64xf32> to vector<64x64xf32>
    %166 = arith.addf %164, %165 : vector<64x64xf32>
    %cst_83 = arith.constant 0.000000e+00 : f32
    %167 = vector.broadcast %cst_83 : f32 to vector<64x64xf32>
    %168 = arith.maximumf %166, %167 : vector<64x64xf32>
    %169 = vector.broadcast %141 : vector<64x1xf32> to vector<64x64xf32>
    %170 = arith.mulf %168, %169 : vector<64x64xf32>
    %171 = vector.extract_strided_slice %170 {offsets = [1, 0], sizes = [63, 64], strides = [1, 1]} : vector<64x64xf32> to vector<63x64xf32>
    %172 = vector.extract_strided_slice %170 {offsets = [0, 0], sizes = [1, 64], strides = [1, 1]} : vector<64x64xf32> to vector<1x64xf32>
    %173 = tpu.concatenate %171, %172 in 0 : vector<63x64xf32>, vector<1x64xf32> -> vector<64x64xf32>
    %174 = arith.maximumf %170, %173 : vector<64x64xf32>
    %c0_84 = arith.constant 0 : index
    %c0_85 = arith.constant 0 : index
    %175 = vector.load %arg10[%c0_84, %c0_85] : memref<48x64xf32, #tpu.memory_space<vmem>>, vector<48x64xf32>
    %cst_86 = arith.constant dense<0.000000e+00> : vector<48x64xf32>
    %176 = tpu.matmul %175, %174, %cst_86 {dimension_numbers = #tpu.dot_dimension_numbers<[1], [0], [0], [1], [0, 0, 1, 1], [], []>} : vector<48x64xf32>, vector<64x64xf32>, vector<48x64xf32> -> vector<48x64xf32>
    %c0_87 = arith.constant 0 : index
    %c0_88 = arith.constant 0 : index
    %c0_89 = arith.constant 0 : index
    %177 = vector.load %arg11[%c0_87, %c0_88, %c0_89] : memref<8x64x16xf32, #tpu.memory_space<vmem>>, vector<1x64x16xf32>
    %178 = vector.shape_cast %177 : vector<1x64x16xf32> to vector<64x16xf32>
    %cst_90 = arith.constant dense<0.000000e+00> : vector<48x16xf32>
    %179 = tpu.matmul %176, %178, %cst_90 {dimension_numbers = #tpu.dot_dimension_numbers<[1], [0], [0], [1], [0, 0, 1, 1], [], []>} : vector<48x64xf32>, vector<64x16xf32>, vector<48x16xf32> -> vector<48x16xf32>
    %180 = vector.extract_strided_slice %176 {offsets = [1, 0], sizes = [47, 64], strides = [1, 1]} : vector<48x64xf32> to vector<47x64xf32>
    %181 = vector.extract_strided_slice %176 {offsets = [0, 0], sizes = [1, 64], strides = [1, 1]} : vector<48x64xf32> to vector<1x64xf32>
    %182 = tpu.concatenate %180, %181 in 0 : vector<47x64xf32>, vector<1x64xf32> -> vector<48x64xf32>
    %c1_91 = arith.constant 1 : index
    %c0_92 = arith.constant 0 : index
    %c0_93 = arith.constant 0 : index
    %183 = vector.load %arg11[%c1_91, %c0_92, %c0_93] : memref<8x64x16xf32, #tpu.memory_space<vmem>>, vector<1x64x16xf32>
    %184 = vector.shape_cast %183 : vector<1x64x16xf32> to vector<64x16xf32>
    %cst_94 = arith.constant dense<0.000000e+00> : vector<48x16xf32>
    %185 = tpu.matmul %182, %184, %cst_94 {dimension_numbers = #tpu.dot_dimension_numbers<[1], [0], [0], [1], [0, 0, 1, 1], [], []>} : vector<48x64xf32>, vector<64x16xf32>, vector<48x16xf32> -> vector<48x16xf32>
    %186 = arith.addf %179, %185 : vector<48x16xf32>
    %187 = vector.extract_strided_slice %176 {offsets = [2, 0], sizes = [46, 64], strides = [1, 1]} : vector<48x64xf32> to vector<46x64xf32>
    %188 = vector.extract_strided_slice %176 {offsets = [0, 0], sizes = [2, 64], strides = [1, 1]} : vector<48x64xf32> to vector<2x64xf32>
    %189 = tpu.concatenate %187, %188 in 0 : vector<46x64xf32>, vector<2x64xf32> -> vector<48x64xf32>
    %c2_95 = arith.constant 2 : index
    %c0_96 = arith.constant 0 : index
    %c0_97 = arith.constant 0 : index
    %190 = vector.load %arg11[%c2_95, %c0_96, %c0_97] : memref<8x64x16xf32, #tpu.memory_space<vmem>>, vector<1x64x16xf32>
    %191 = vector.shape_cast %190 : vector<1x64x16xf32> to vector<64x16xf32>
    %cst_98 = arith.constant dense<0.000000e+00> : vector<48x16xf32>
    %192 = tpu.matmul %189, %191, %cst_98 {dimension_numbers = #tpu.dot_dimension_numbers<[1], [0], [0], [1], [0, 0, 1, 1], [], []>} : vector<48x64xf32>, vector<64x16xf32>, vector<48x16xf32> -> vector<48x16xf32>
    %193 = arith.addf %186, %192 : vector<48x16xf32>
    %194 = vector.extract_strided_slice %176 {offsets = [3, 0], sizes = [45, 64], strides = [1, 1]} : vector<48x64xf32> to vector<45x64xf32>
    %195 = vector.extract_strided_slice %176 {offsets = [0, 0], sizes = [3, 64], strides = [1, 1]} : vector<48x64xf32> to vector<3x64xf32>
    %196 = tpu.concatenate %194, %195 in 0 : vector<45x64xf32>, vector<3x64xf32> -> vector<48x64xf32>
    %c3_99 = arith.constant 3 : index
    %c0_100 = arith.constant 0 : index
    %c0_101 = arith.constant 0 : index
    %197 = vector.load %arg11[%c3_99, %c0_100, %c0_101] : memref<8x64x16xf32, #tpu.memory_space<vmem>>, vector<1x64x16xf32>
    %198 = vector.shape_cast %197 : vector<1x64x16xf32> to vector<64x16xf32>
    %cst_102 = arith.constant dense<0.000000e+00> : vector<48x16xf32>
    %199 = tpu.matmul %196, %198, %cst_102 {dimension_numbers = #tpu.dot_dimension_numbers<[1], [0], [0], [1], [0, 0, 1, 1], [], []>} : vector<48x64xf32>, vector<64x16xf32>, vector<48x16xf32> -> vector<48x16xf32>
    %200 = arith.addf %193, %199 : vector<48x16xf32>
    %201 = vector.extract_strided_slice %176 {offsets = [4, 0], sizes = [44, 64], strides = [1, 1]} : vector<48x64xf32> to vector<44x64xf32>
    %202 = vector.extract_strided_slice %176 {offsets = [0, 0], sizes = [4, 64], strides = [1, 1]} : vector<48x64xf32> to vector<4x64xf32>
    %203 = tpu.concatenate %201, %202 in 0 : vector<44x64xf32>, vector<4x64xf32> -> vector<48x64xf32>
    %c4_103 = arith.constant 4 : index
    %c0_104 = arith.constant 0 : index
    %c0_105 = arith.constant 0 : index
    %204 = vector.load %arg11[%c4_103, %c0_104, %c0_105] : memref<8x64x16xf32, #tpu.memory_space<vmem>>, vector<1x64x16xf32>
    %205 = vector.shape_cast %204 : vector<1x64x16xf32> to vector<64x16xf32>
    %cst_106 = arith.constant dense<0.000000e+00> : vector<48x16xf32>
    %206 = tpu.matmul %203, %205, %cst_106 {dimension_numbers = #tpu.dot_dimension_numbers<[1], [0], [0], [1], [0, 0, 1, 1], [], []>} : vector<48x64xf32>, vector<64x16xf32>, vector<48x16xf32> -> vector<48x16xf32>
    %207 = arith.addf %200, %206 : vector<48x16xf32>
    %208 = vector.extract_strided_slice %176 {offsets = [5, 0], sizes = [43, 64], strides = [1, 1]} : vector<48x64xf32> to vector<43x64xf32>
    %209 = vector.extract_strided_slice %176 {offsets = [0, 0], sizes = [5, 64], strides = [1, 1]} : vector<48x64xf32> to vector<5x64xf32>
    %210 = tpu.concatenate %208, %209 in 0 : vector<43x64xf32>, vector<5x64xf32> -> vector<48x64xf32>
    %c5_107 = arith.constant 5 : index
    %c0_108 = arith.constant 0 : index
    %c0_109 = arith.constant 0 : index
    %211 = vector.load %arg11[%c5_107, %c0_108, %c0_109] : memref<8x64x16xf32, #tpu.memory_space<vmem>>, vector<1x64x16xf32>
    %212 = vector.shape_cast %211 : vector<1x64x16xf32> to vector<64x16xf32>
    %cst_110 = arith.constant dense<0.000000e+00> : vector<48x16xf32>
    %213 = tpu.matmul %210, %212, %cst_110 {dimension_numbers = #tpu.dot_dimension_numbers<[1], [0], [0], [1], [0, 0, 1, 1], [], []>} : vector<48x64xf32>, vector<64x16xf32>, vector<48x16xf32> -> vector<48x16xf32>
    %214 = arith.addf %207, %213 : vector<48x16xf32>
    %215 = vector.extract_strided_slice %176 {offsets = [6, 0], sizes = [42, 64], strides = [1, 1]} : vector<48x64xf32> to vector<42x64xf32>
    %216 = vector.extract_strided_slice %176 {offsets = [0, 0], sizes = [6, 64], strides = [1, 1]} : vector<48x64xf32> to vector<6x64xf32>
    %217 = tpu.concatenate %215, %216 in 0 : vector<42x64xf32>, vector<6x64xf32> -> vector<48x64xf32>
    %c6_111 = arith.constant 6 : index
    %c0_112 = arith.constant 0 : index
    %c0_113 = arith.constant 0 : index
    %218 = vector.load %arg11[%c6_111, %c0_112, %c0_113] : memref<8x64x16xf32, #tpu.memory_space<vmem>>, vector<1x64x16xf32>
    %219 = vector.shape_cast %218 : vector<1x64x16xf32> to vector<64x16xf32>
    %cst_114 = arith.constant dense<0.000000e+00> : vector<48x16xf32>
    %220 = tpu.matmul %217, %219, %cst_114 {dimension_numbers = #tpu.dot_dimension_numbers<[1], [0], [0], [1], [0, 0, 1, 1], [], []>} : vector<48x64xf32>, vector<64x16xf32>, vector<48x16xf32> -> vector<48x16xf32>
    %221 = arith.addf %214, %220 : vector<48x16xf32>
    %222 = vector.extract_strided_slice %176 {offsets = [7, 0], sizes = [41, 64], strides = [1, 1]} : vector<48x64xf32> to vector<41x64xf32>
    %223 = vector.extract_strided_slice %176 {offsets = [0, 0], sizes = [7, 64], strides = [1, 1]} : vector<48x64xf32> to vector<7x64xf32>
    %224 = tpu.concatenate %222, %223 in 0 : vector<41x64xf32>, vector<7x64xf32> -> vector<48x64xf32>
    %c7_115 = arith.constant 7 : index
    %c0_116 = arith.constant 0 : index
    %c0_117 = arith.constant 0 : index
    %225 = vector.load %arg11[%c7_115, %c0_116, %c0_117] : memref<8x64x16xf32, #tpu.memory_space<vmem>>, vector<1x64x16xf32>
    %226 = vector.shape_cast %225 : vector<1x64x16xf32> to vector<64x16xf32>
    %cst_118 = arith.constant dense<0.000000e+00> : vector<48x16xf32>
    %227 = tpu.matmul %224, %226, %cst_118 {dimension_numbers = #tpu.dot_dimension_numbers<[1], [0], [0], [1], [0, 0, 1, 1], [], []>} : vector<48x64xf32>, vector<64x16xf32>, vector<48x16xf32> -> vector<48x16xf32>
    %228 = arith.addf %221, %227 : vector<48x16xf32>
    %c0_119 = arith.constant 0 : index
    %c0_120 = arith.constant 0 : index
    %229 = vector.load %arg14[%c0_119, %c0_120] : memref<48x1xf32, #tpu.memory_space<vmem>>, vector<48x1xf32>
    %230 = vector.broadcast %229 : vector<48x1xf32> to vector<48x16xf32>
    %231 = arith.mulf %228, %230 : vector<48x16xf32>
    %cst_121 = arith.constant dense<0.000000e+00> : vector<16xf32>
    %232 = vector.multi_reduction <add>, %231, %cst_121 [0] : vector<48x16xf32> to vector<16xf32>
    %233 = vector.shape_cast %232 : vector<16xf32> to vector<1x16xf32>
    %cst_122 = arith.constant 0.0454545468 : f32
    %234 = vector.broadcast %cst_122 : f32 to vector<1x16xf32>
    %235 = arith.mulf %233, %234 : vector<1x16xf32>
    %236 = arith.mulf %231, %228 : vector<48x16xf32>
    %cst_123 = arith.constant dense<0.000000e+00> : vector<16xf32>
    %237 = vector.multi_reduction <add>, %236, %cst_123 [0] : vector<48x16xf32> to vector<16xf32>
    %238 = vector.shape_cast %237 : vector<16xf32> to vector<1x16xf32>
    %cst_124 = arith.constant 0.0454545468 : f32
    %239 = vector.broadcast %cst_124 : f32 to vector<1x16xf32>
    %240 = arith.mulf %238, %239 : vector<1x16xf32>
    %241 = arith.mulf %235, %235 : vector<1x16xf32>
    %242 = arith.subf %240, %241 : vector<1x16xf32>
    %c0_125 = arith.constant 0 : index
    %c0_126 = arith.constant 0 : index
    %243 = vector.load %arg12[%c0_125, %c0_126] : memref<1x16xf32, #tpu.memory_space<vmem>>, vector<1x16xf32>
    %cst_127 = arith.constant 9.99999974E-6 : f32
    %244 = vector.broadcast %cst_127 : f32 to vector<1x16xf32>
    %245 = arith.addf %242, %244 : vector<1x16xf32>
    %246 = math.rsqrt %245 : vector<1x16xf32>
    %247 = arith.mulf %243, %246 : vector<1x16xf32>
    %c0_128 = arith.constant 0 : index
    %c0_129 = arith.constant 0 : index
    %248 = vector.load %arg13[%c0_128, %c0_129] : memref<1x16xf32, #tpu.memory_space<vmem>>, vector<1x16xf32>
    %249 = arith.mulf %235, %247 : vector<1x16xf32>
    %250 = arith.subf %248, %249 : vector<1x16xf32>
    %251 = vector.broadcast %247 : vector<1x16xf32> to vector<48x16xf32>
    %252 = arith.mulf %228, %251 : vector<48x16xf32>
    %253 = vector.broadcast %250 : vector<1x16xf32> to vector<48x16xf32>
    %254 = arith.addf %252, %253 : vector<48x16xf32>
    %cst_130 = arith.constant 0.000000e+00 : f32
    %255 = vector.broadcast %cst_130 : f32 to vector<48x16xf32>
    %256 = arith.maximumf %254, %255 : vector<48x16xf32>
    %257 = vector.broadcast %229 : vector<48x1xf32> to vector<48x16xf32>
    %258 = arith.mulf %256, %257 : vector<48x16xf32>
    %259 = vector.extract_strided_slice %258 {offsets = [1, 0], sizes = [47, 16], strides = [1, 1]} : vector<48x16xf32> to vector<47x16xf32>
    %260 = vector.extract_strided_slice %258 {offsets = [0, 0], sizes = [1, 16], strides = [1, 1]} : vector<48x16xf32> to vector<1x16xf32>
    %261 = tpu.concatenate %259, %260 in 0 : vector<47x16xf32>, vector<1x16xf32> -> vector<48x16xf32>
    %262 = arith.maximumf %258, %261 : vector<48x16xf32>
    %c0_131 = arith.constant 0 : index
    %c0_132 = arith.constant 0 : index
    %263 = vector.load %arg15[%c0_131, %c0_132] : memref<16x48xf32, #tpu.memory_space<vmem>>, vector<16x48xf32>
    %cst_133 = arith.constant dense<0.000000e+00> : vector<16x16xf32>
    %264 = tpu.matmul %263, %262, %cst_133 {dimension_numbers = #tpu.dot_dimension_numbers<[1], [0], [0], [1], [0, 0, 1, 1], [], []>} : vector<16x48xf32>, vector<48x16xf32>, vector<16x16xf32> -> vector<16x16xf32>
    %c0_134 = arith.constant 0 : index
    %c0_135 = arith.constant 0 : index
    %265 = vector.load %arg22[%c0_134, %c0_135] : memref<16x16xf32, #tpu.memory_space<vmem>>, vector<16x16xf32>
    tpu.vector_store %arg22[%c0_134, %c0_135], %264 {strides = array<i32>} : memref<16x16xf32, #tpu.memory_space<vmem>>, vector<16x16xf32>,
    %c0_136 = arith.constant 0 : index
    %c0_137 = arith.constant 0 : index
    %266 = vector.load %arg16[%c0_136, %c0_137] : memref<16x40xf32, #tpu.memory_space<vmem>>, vector<16x40xf32>
    %cst_138 = arith.constant dense<0.000000e+00> : vector<16x40xf32>
    %267 = tpu.matmul %264, %266, %cst_138 {dimension_numbers = #tpu.dot_dimension_numbers<[1], [0], [0], [1], [0, 0, 1, 1], [], []>} : vector<16x16xf32>, vector<16x40xf32>, vector<16x40xf32> -> vector<16x40xf32>
    %c0_139 = arith.constant 0 : index
    %c0_140 = arith.constant 0 : index
    %268 = vector.load %arg17[%c0_139, %c0_140] : memref<16x40xf32, #tpu.memory_space<vmem>>, vector<16x40xf32>
    %269 = arith.mulf %267, %268 : vector<16x40xf32>
    %c0_141 = arith.constant 0 : index
    %c0_142 = arith.constant 0 : index
    %270 = vector.load %arg18[%c0_141, %c0_142] : memref<40x5xf32, #tpu.memory_space<vmem>>, vector<40x5xf32>
    %cst_143 = arith.constant dense<0.000000e+00> : vector<16x5xf32>
    %271 = tpu.matmul %269, %270, %cst_143 {dimension_numbers = #tpu.dot_dimension_numbers<[1], [0], [0], [1], [0, 0, 1, 1], [], []>} : vector<16x40xf32>, vector<40x5xf32>, vector<16x5xf32> -> vector<16x5xf32>
    %c0_144 = arith.constant 0 : index
    %c0_145 = arith.constant 0 : index
    %272 = vector.load %arg19[%c0_144, %c0_145] : memref<2x16xf32, #tpu.memory_space<vmem>>, vector<2x16xf32>
    %cst_146 = arith.constant dense<0.000000e+00> : vector<2x5xf32>
    %273 = tpu.matmul %272, %271, %cst_146 {dimension_numbers = #tpu.dot_dimension_numbers<[1], [0], [0], [1], [0, 0, 1, 1], [], []>} : vector<2x16xf32>, vector<16x5xf32>, vector<2x5xf32> -> vector<2x5xf32>
    %c0_147 = arith.constant 0 : index
    %c0_148 = arith.constant 0 : index
    %274 = vector.load %arg20[%c0_147, %c0_148] : memref<1x5xf32, #tpu.memory_space<vmem>>, vector<1x5xf32>
    %275 = vector.broadcast %274 : vector<1x5xf32> to vector<2x5xf32>
    %276 = arith.addf %273, %275 : vector<2x5xf32>
    %c0_149 = arith.constant 0 : index
    %c0_150 = arith.constant 0 : index
    %277 = vector.load %arg21[%c0_149, %c0_150] : memref<2x5xf32, #tpu.memory_space<vmem>>, vector<2x5xf32>
    tpu.vector_store %arg21[%c0_149, %c0_150], %276 {strides = array<i32>} : memref<2x5xf32, #tpu.memory_space<vmem>>, vector<2x5xf32>,
    return
  }
}

</mosaic_0001>

<llo_original>
// kernel: tpu_custom_call.1
$region0: #{tpu_custom_call.1}
  #allocation0 [shape = 'u32[]', space=smem, size = 0x4, offset = 0x4, fixed_abs, tag = 'smem constant byte address 0x4 - core index']
  #allocation1 [shape = 'u32[144,128]{1,0:T(1,128)}', space=vmem, size = 0x12000, scoped, tag = 'internal scratch']
  %s0 = inlined_call_operand.hbm [shape: f32[8,128], index: 0, kind: input, shape index: {}]
  %s1 = inlined_call_operand.hbm [shape: f32[8,128], index: 1, kind: output, shape index: {}]
  %s2 = sld [smem:[#allocation0]]
  $region18: #{tpu_custom_call.1} parent=0
    _
  %s4 = ssub.s32 1, %s2
  %s5 = scalar_select 0, %s4, %s2
  $region1: #{tpu_custom_call.1} parent=0
    #allocation2 [shape = 'u8[4096]{0}', space=vmem, size = 0x1000, scoped, tag = 'input window, operand 0, single buffered']
    #allocation3 [shape = 's32[1]{0}', space=sflag, size = 0x4, scoped, tag = 'scoped memory for tpu_custom_call.1']
    #allocation4 [shape = 's32[1]{0}', space=sflag, size = 0x4, scoped, tag = 'scoped memory for tpu_custom_call.1']
    #allocation5 [shape = 'u8[4096]{0}', space=vmem, size = 0x1000, scoped, tag = 'output window, operand 0, single buffered']
    %6 = vsyncpa [#allocation3], 0
    %7 = vsyncpa [#allocation4], 0
    // Predicated region
    $region2: #{tpu_custom_call.1} parent=1 // pred_check
      _
    $region3: #{tpu_custom_call.1} parent=1 // pred_check_branch
      %9 = sbr.rel (0) target = $region5
    $region4: #{tpu_custom_call.1} parent=1 // pred_region
      %s11 = ssub.s32 128, 128
      %12 = vsyncadd [#allocation3], %s11
      %s14 = sshll.u32 [#allocation2], 4
      %s15 = int_to_ptr.vmem [resolvable:$true] %s14
      %17 = dma.hbm_to_vmem [thread:$0]  %s0, 128, %s15, [#allocation3]
    $region5: #{tpu_custom_call.1} parent=1 // pred_fallthru
      _
    // Predicated region
    $region6: #{tpu_custom_call.1} parent=1 // pred_check
      _
    $region7: #{tpu_custom_call.1} parent=1 // pred_check_branch
      %19 = sbr.rel (0) target = $region9
    $region8: #{tpu_custom_call.1} parent=1 // pred_region
      %20 = dma.done [#allocation3], 128
    $region9: #{tpu_custom_call.1} parent=1 // pred_fallthru
      _
    %v21 = vld [vmem:[#allocation2] sm:$0xff]
    %v22 = vrot.slane %v21, 7
    %23 = vst [vmem:[#allocation5] sm:$0xff] %v22
    // Predicated region
    $region10: #{tpu_custom_call.1} parent=1 // pred_check
      _
    $region11: #{tpu_custom_call.1} parent=1 // pred_check_branch
      %25 = sbr.rel (0) target = $region13
    $region12: #{tpu_custom_call.1} parent=1 // pred_region
      %s27 = ssub.s32 128, 128
      %28 = vsyncadd [#allocation4], %s27
      %s30 = sshll.u32 [#allocation5], 4
      %s31 = int_to_ptr.vmem [resolvable:$true] %s30
      %33 = dma.vmem_to_hbm [thread:$0]  %s31, 128, %s1, [#allocation4]
    $region13: #{tpu_custom_call.1} parent=1 // pred_fallthru
      _
    // Predicated region
    $region14: #{tpu_custom_call.1} parent=1 // pred_check
      _
    $region15: #{tpu_custom_call.1} parent=1 // pred_check_branch
      %35 = sbr.rel (0) target = $region17
    $region16: #{tpu_custom_call.1} parent=1 // pred_region
      %36 = dma.done [#allocation4], 128
    $region17: #{tpu_custom_call.1} parent=1 // pred_fallthru
      _
    %37 = vsyncpa [#allocation3], 1
    %38 = vsyncpa [#allocation4], 1

// kernel: forward.1
$region0: #{forward.1}
  #allocation0 [shape = 'u32[]', space=smem, size = 0x4, offset = 0x4, fixed_abs, tag = 'smem constant byte address 0x4 - core index']
  #allocation1 [shape = 'u32[144,128]{1,0:T(1,128)}', space=vmem, size = 0x12000, scoped, tag = 'internal scratch']
  %s0 = inlined_call_operand.vmem [shape: f32[96,4], index: 0, kind: input, shape index: {}]
  %s1 = inlined_call_operand.vmem [shape: f32[8,4,32], index: 1, kind: input, shape index: {}]
  %s2 = inlined_call_operand.vmem [shape: f32[1,32], index: 2, kind: input, shape index: {}]
  %s3 = inlined_call_operand.vmem [shape: f32[1,32], index: 3, kind: input, shape index: {}]
  %s4 = inlined_call_operand.vmem [shape: f32[96,1], index: 4, kind: input, shape index: {}]
  %s5 = inlined_call_operand.vmem [shape: f32[64,96], index: 5, kind: input, shape index: {}]
  %s6 = inlined_call_operand.vmem [shape: f32[8,32,64], index: 6, kind: input, shape index: {}]
  %s7 = inlined_call_operand.vmem [shape: f32[1,64], index: 7, kind: input, shape index: {}]
  %s8 = inlined_call_operand.vmem [shape: f32[1,64], index: 8, kind: input, shape index: {}]
  %s9 = inlined_call_operand.vmem [shape: f32[64,1], index: 9, kind: input, shape index: {}]
  %s10 = inlined_call_operand.vmem [shape: f32[48,64], index: 10, kind: input, shape index: {}]
  %s11 = inlined_call_operand.vmem [shape: f32[8,64,16], index: 11, kind: input, shape index: {}]
  %s12 = inlined_call_operand.vmem [shape: f32[1,16], index: 12, kind: input, shape index: {}]
  %s13 = inlined_call_operand.vmem [shape: f32[1,16], index: 13, kind: input, shape index: {}]
  %s14 = inlined_call_operand.vmem [shape: f32[48,1], index: 14, kind: input, shape index: {}]
  %s15 = inlined_call_operand.vmem [shape: f32[16,48], index: 15, kind: input, shape index: {}]
  %s16 = inlined_call_operand.vmem [shape: f32[16,40], index: 16, kind: input, shape index: {}]
  %s17 = inlined_call_operand.vmem [shape: f32[16,40], index: 17, kind: input, shape index: {}]
  %s18 = inlined_call_operand.vmem [shape: f32[40,5], index: 18, kind: input, shape index: {}]
  %s19 = inlined_call_operand.vmem [shape: f32[2,16], index: 19, kind: input, shape index: {}]
  %s20 = inlined_call_operand.vmem [shape: f32[1,5], index: 20, kind: input, shape index: {}]
  %s21 = inlined_call_operand.hbm [shape: f32[2,5], index: 21, kind: output, shape index: {0}]
  %s22 = inlined_call_operand.vmem [shape: f32[16,16], index: 22, kind: output, shape index: {1}]
  %23 = xla_tuple %s21, %s22
  %s24 = sld [smem:[#allocation0]]
  $region102: #{forward.1} parent=0
    _
  %s26 = ssub.s32 1, %s24
  %s27 = scalar_select 0, %s26, %s24
  $region1: #{forward.1} parent=0
    #allocation2 [shape = 'u8[1024]{0}', space=vmem, size = 0x400, scoped, tag = 'output window, operand 0, single buffered']
    #allocation3 [shape = 's32[1]{0}', space=sflag, size = 0x4, scoped, tag = 'scoped memory for forward.1']
    %28 = vsyncpa [#allocation3], 0
    // Predicated region
    $region2: #{forward.1} parent=1 // pred_check
      _
    $region3: #{forward.1} parent=1 // pred_check_branch
      %30 = sbr.rel (0) target = $region5
    $region4: #{forward.1} parent=1 // pred_region
      _
    $region5: #{forward.1} parent=1 // pred_fallthru
      _
    // Predicated region
    $region6: #{forward.1} parent=1 // pred_check
      _
    $region7: #{forward.1} parent=1 // pred_check_branch
      %32 = sbr.rel (0) target = $region9
    $region8: #{forward.1} parent=1 // pred_region
      _
    $region9: #{forward.1} parent=1 // pred_fallthru
      _
    // Predicated region
    $region10: #{forward.1} parent=1 // pred_check
      _
    $region11: #{forward.1} parent=1 // pred_check_branch
      %34 = sbr.rel (0) target = $region13
    $region12: #{forward.1} parent=1 // pred_region
      _
    $region13: #{forward.1} parent=1 // pred_fallthru
      _
    // Predicated region
    $region14: #{forward.1} parent=1 // pred_check
      _
    $region15: #{forward.1} parent=1 // pred_check_branch
      %36 = sbr.rel (0) target = $region17
    $region16: #{forward.1} parent=1 // pred_region
      _
    $region17: #{forward.1} parent=1 // pred_fallthru
      _
    // Predicated region
    $region18: #{forward.1} parent=1 // pred_check
      _
    $region19: #{forward.1} parent=1 // pred_check_branch
      %38 = sbr.rel (0) target = $region21
    $region20: #{forward.1} parent=1 // pred_region
      _
    $region21: #{forward.1} parent=1 // pred_fallthru
      _
    // Predicated region
    $region22: #{forward.1} parent=1 // pred_check
      _
    $region23: #{forward.1} parent=1 // pred_check_branch
      %40 = sbr.rel (0) target = $region25
    $region24: #{forward.1} parent=1 // pred_region
      _
    $region25: #{forward.1} parent=1 // pred_fallthru
      _
    // Predicated region
    $region26: #{forward.1} parent=1 // pred_check
      _
    $region27: #{forward.1} parent=1 // pred_check_branch
      %42 = sbr.rel (0) target = $region29
    $region28: #{forward.1} parent=1 // pred_region
      _
    $region29: #{forward.1} parent=1 // pred_fallthru
      _
    // Predicated region
    $region30: #{forward.1} parent=1 // pred_check
      _
    $region31: #{forward.1} parent=1 // pred_check_branch
      %44 = sbr.rel (0) target = $region33
    $region32: #{forward.1} parent=1 // pred_region
      _
    $region33: #{forward.1} parent=1 // pred_fallthru
      _
    // Predicated region
    $region34: #{forward.1} parent=1 // pred_check
      _
    $region35: #{forward.1} parent=1 // pred_check_branch
      %46 = sbr.rel (0) target = $region37
    $region36: #{forward.1} parent=1 // pred_region
      _
    $region37: #{forward.1} parent=1 // pred_fallthru
      _
    // Predicated region
    $region38: #{forward.1} parent=1 // pred_check
      _
    $region39: #{forward.1} parent=1 // pred_check_branch
      %48 = sbr.rel (0) target = $region41
    $region40: #{forward.1} parent=1 // pred_region
      _
    $region41: #{forward.1} parent=1 // pred_fallthru
      _
    // Predicated region
    $region42: #{forward.1} parent=1 // pred_check
      _
    $region43: #{forward.1} parent=1 // pred_check_branch
      %50 = sbr.rel (0) target = $region45
    $region44: #{forward.1} parent=1 // pred_region
      _
    $region45: #{forward.1} parent=1 // pred_fallthru
      _
    // Predicated region
    $region46: #{forward.1} parent=1 // pred_check
      _
    $region47: #{forward.1} parent=1 // pred_check_branch
      %52 = sbr.rel (0) target = $region49
    $region48: #{forward.1} parent=1 // pred_region
      _
    $region49: #{forward.1} parent=1 // pred_fallthru
      _
    // Predicated region
    $region50: #{forward.1} parent=1 // pred_check
      _
    $region51: #{forward.1} parent=1 // pred_check_branch
      %54 = sbr.rel (0) target = $region53
    $region52: #{forward.1} parent=1 // pred_region
      _
    $region53: #{forward.1} parent=1 // pred_fallthru
      _
    // Predicated region
    $region54: #{forward.1} parent=1 // pred_check
      _
    $region55: #{forward.1} parent=1 // pred_check_branch
      %56 = sbr.rel (0) target = $region57
    $region56: #{forward.1} parent=1 // pred_region
      _
    $region57: #{forward.1} parent=1 // pred_fallthru
      _
    // Predicated region
    $region58: #{forward.1} parent=1 // pred_check
      _
    $region59: #{forward.1} parent=1 // pred_check_branch
      %58 = sbr.rel (0) target = $region61
    $region60: #{forward.1} parent=1 // pred_region
      _
    $region61: #{forward.1} parent=1 // pred_fallthru
      _
    // Predicated region
    $region62: #{forward.1} parent=1 // pred_check
      _
    $region63: #{forward.1} parent=1 // pred_check_branch
      %60 = sbr.rel (0) target = $region65
    $region64: #{forward.1} parent=1 // pred_region
      _
    $region65: #{forward.1} parent=1 // pred_fallthru
      _
    // Predicated region
    $region66: #{forward.1} parent=1 // pred_check
      _
    $region67: #{forward.1} parent=1 // pred_check_branch
      %62 = sbr.rel (0) target = $region69
    $region68: #{forward.1} parent=1 // pred_region
      _
    $region69: #{forward.1} parent=1 // pred_fallthru
      _
    // Predicated region
    $region70: #{forward.1} parent=1 // pred_check
      _
    $region71: #{forward.1} parent=1 // pred_check_branch
      %64 = sbr.rel (0) target = $region73
    $region72: #{forward.1} parent=1 // pred_region
      _
    $region73: #{forward.1} parent=1 // pred_fallthru
      _
    // Predicated region
    $region74: #{forward.1} parent=1 // pred_check
      _
    $region75: #{forward.1} parent=1 // pred_check_branch
      %66 = sbr.rel (0) target = $region77
    $region76: #{forward.1} parent=1 // pred_region
      _
    $region77: #{forward.1} parent=1 // pred_fallthru
      _
    // Predicated region
    $region78: #{forward.1} parent=1 // pred_check
      _
    $region79: #{forward.1} parent=1 // pred_check_branch
      %68 = sbr.rel (0) target = $region81
    $region80: #{forward.1} parent=1 // pred_region
      _
    $region81: #{forward.1} parent=1 // pred_fallthru
      _
    // Predicated region
    $region82: #{forward.1} parent=1 // pred_check
      _
    $region83: #{forward.1} parent=1 // pred_check_branch
      %70 = sbr.rel (0) target = $region85
    $region84: #{forward.1} parent=1 // pred_region
      _
    $region85: #{forward.1} parent=1 // pred_fallthru
      _
    %v71 = vld [vmem:[%s0] sm:$0xff]
    %v72 = vld [vmem:[%s0 + $0x8] sm:$0xff]
    %v73 = vld [vmem:[%s0 + $0x10] sm:$0xff]
    %v74 = vld [vmem:[%s0 + $0x18] sm:$0xff]
    %v75 = vld [vmem:[%s0 + $0x20] sm:$0xff]
    %v76 = vld [vmem:[%s0 + $0x28] sm:$0xff]
    %v77 = vld [vmem:[%s0 + $0x30] sm:$0xff]
    %v78 = vld [vmem:[%s0 + $0x38] sm:$0xff]
    %v79 = vld [vmem:[%s0 + $0x40] sm:$0xff]
    %v80 = vld [vmem:[%s0 + $0x48] sm:$0xff]
    %v81 = vld [vmem:[%s0 + $0x50] sm:$0xff]
    %v82 = vld [vmem:[%s0 + $0x58] sm:$0xff]
    %v83 = vld [vmem:[%s1] sm:$0xf]
    %vm96 = vcmask 1046528
    %v97 = vrot.slane %v71, 1
    %v98 = vrot.slane %v72, 1
    %v99 = vsel %vm96, %v97, %v98
    %v100 = vrot.slane %v73, 1
    %v101 = vsel %vm96, %v98, %v100
    %v102 = vrot.slane %v74, 1
    %v103 = vsel %vm96, %v100, %v102
    %v104 = vrot.slane %v75, 1
    %v105 = vsel %vm96, %v102, %v104
    %v106 = vrot.slane %v76, 1
    %v107 = vsel %vm96, %v104, %v106
    %v108 = vrot.slane %v77, 1
    %v109 = vsel %vm96, %v106, %v108
    %v110 = vrot.slane %v78, 1
    %v111 = vsel %vm96, %v108, %v110
    %v112 = vrot.slane %v79, 1
    %v113 = vsel %vm96, %v110, %v112
    %v114 = vrot.slane %v80, 1
    %v115 = vsel %vm96, %v112, %v114
    %v116 = vrot.slane %v81, 1
    %v117 = vsel %vm96, %v114, %v116
    %v118 = vrot.slane %v82, 1
    %v119 = vsel %vm96, %v116, %v118
    %v122 = vsel %vm96, %v118, %v97
    %s123 = scalar_lea.vmem %s1, 4
    %v124 = vld [vmem:[%s123] sm:$0xf]
    %vm125 = vcmask 31744
    %v126 = vsel %vm125, %v99, 0
    %v128 = vsel %vm125, %v101, 0
    %v130 = vsel %vm125, %v103, 0
    %v132 = vsel %vm125, %v105, 0
    %v134 = vsel %vm125, %v107, 0
    %v136 = vsel %vm125, %v109, 0
    %v138 = vsel %vm125, %v111, 0
    %v140 = vsel %vm125, %v113, 0
    %v142 = vsel %vm125, %v115, 0
    %v144 = vsel %vm125, %v117, 0
    %v146 = vsel %vm125, %v119, 0
    %v149 = vsel %vm125, %v122, 0
    %vm151 = vcmask 1043456
    %v153 = vsel %vm151, %v124, 0
    %155 = vmatprep.subr.mxu0 0.0
    %156 = vmatpush1.msra.mxu0 %v153
    %157 = vmatprep.subr.mxu0 0.0
    %158 = vmatpush1.msra.mxu0 0.0
    %159 = vmatprep.subr.mxu0 0.0
    %160 = vmatpush1.msra.mxu0 0.0
    %161 = vmatprep.subr.mxu0 0.0
    %162 = vmatpush1.msra.mxu0 0.0
    %163 = vmatprep.subr.mxu0 0.0
    %164 = vmatpush1.msra.mxu0 0.0
    %165 = vmatprep.subr.mxu0 0.0
    %166 = vmatpush1.msra.mxu0 0.0
    %167 = vmatprep.subr.mxu0 0.0
    %168 = vmatpush1.msra.mxu0 0.0
    %169 = vmatprep.subr.mxu0 0.0
    %170 = vmatpush1.msra.mxu0 0.0
    %171 = vmatprep.subr.mxu0 0.0
    %172 = vmatpush1.msra.mxu0 0.0
    %173 = vmatprep.subr.mxu0 0.0
    %174 = vmatpush1.msra.mxu0 0.0
    %175 = vmatprep.subr.mxu0 0.0
    %176 = vmatpush1.msra.mxu0 0.0
    %177 = vmatprep.subr.mxu0 0.0
    %178 = vmatpush1.msra.mxu0 0.0
    %179 = vmatprep.subr.mxu0 0.0
    %180 = vmatpush1.msra.mxu0 0.0
    %181 = vmatprep.subr.mxu0 0.0
    %182 = vmatpush1.msra.mxu0 0.0
    %183 = vmatprep.subr.mxu0 0.0
    %184 = vmatpush1.msra.mxu0 0.0
    %185 = vmatprep.subr.mxu0 0.0
    %186 = vmatpush1.msra.mxu0 0.0
    %187 = vmatprep.subr.mxu0 0.0
    %188 = vmatpush1.msra.mxu0 0.0
    %189 = vmatprep.subr.mxu0 0.0
    %190 = vmatpush1.msra.mxu0 0.0
    %191 = vmatprep.subr.mxu0 0.0
    %192 = vmatpush1.msra.mxu0 0.0
    %193 = vmatprep.subr.mxu0 0.0
    %194 = vmatpush1.msra.mxu0 0.0
    %195 = vmatprep.subr.mxu0 0.0
    %196 = vmatpush1.msra.mxu0 0.0
    %197 = vmatprep.subr.mxu0 0.0
    %198 = vmatpush1.msra.mxu0 0.0
    %199 = vmatprep.subr.mxu0 0.0
    %200 = vmatpush1.msra.mxu0 0.0
    %201 = vmatprep.subr.mxu0 0.0
    %202 = vmatpush1.msra.mxu0 0.0
    %203 = vmatprep.subr.mxu0 0.0
    %204 = vmatpush1.msra.mxu0 0.0
    %205 = vmatprep.subr.mxu0 0.0
    %206 = vmatpush1.msra.mxu0 0.0
    %207 = vmatprep.subr.mxu0 0.0
    %208 = vmatpush1.msra.mxu0 0.0
    %209 = vmatprep.subr.mxu0 0.0
    %210 = vmatpush1.msra.mxu0 0.0
    %211 = vmatprep.subr.mxu0 0.0
    %212 = vmatpush1.msra.mxu0 0.0
    %213 = vmatprep.subr.mxu0 0.0
    %214 = vmatpush1.msra.mxu0 0.0
    %215 = vmatprep.subr.mxu0 0.0
    %216 = vmatpush1.msra.mxu0 0.0
    %217 = vmatprep.subr.mxu0 0.0
    %218 = vmatpush1.msra.mxu0 0.0
    %219 = vmatprep.mubr.f32.mxu0 0.0
    %220 = vmatmul.mubr.f32.gmra.mrb[0].mxu0 %v126
    %v221 = vpop.f32.mrb[0].mxu0
    %v222 = vadd.f32 0.0, %v221
    %v223 = vpop.f32.mrb[0].mxu0
    %224 = vmatprep.mubr.f32.mxu0 0.0
    %225 = vmatmul.mubr.f32.gmra.mrb[0].mxu0 %v128
    %v226 = vpop.f32.mrb[0].mxu0
    %v227 = vadd.f32 0.0, %v226
    %v228 = vpop.f32.mrb[0].mxu0
    %229 = vmatprep.mubr.f32.mxu0 0.0
    %230 = vmatmul.mubr.f32.gmra.mrb[0].mxu0 %v130
    %v231 = vpop.f32.mrb[0].mxu0
    %v232 = vadd.f32 0.0, %v231
    %v233 = vpop.f32.mrb[0].mxu0
    %234 = vmatprep.mubr.f32.mxu0 0.0
    %235 = vmatmul.mubr.f32.gmra.mrb[0].mxu0 %v132
    %v236 = vpop.f32.mrb[0].mxu0
    %v237 = vadd.f32 0.0, %v236
    %v238 = vpop.f32.mrb[0].mxu0
    %239 = vmatprep.mubr.f32.mxu0 0.0
    %240 = vmatmul.mubr.f32.gmra.mrb[0].mxu0 %v134
    %v241 = vpop.f32.mrb[0].mxu0
    %v242 = vadd.f32 0.0, %v241
    %v243 = vpop.f32.mrb[0].mxu0
    %244 = vmatprep.mubr.f32.mxu0 0.0
    %245 = vmatmul.mubr.f32.gmra.mrb[0].mxu0 %v136
    %v246 = vpop.f32.mrb[0].mxu0
    %v247 = vadd.f32 0.0, %v246
    %v248 = vpop.f32.mrb[0].mxu0
    %249 = vmatprep.mubr.f32.mxu0 0.0
    %250 = vmatmul.mubr.f32.gmra.mrb[0].mxu0 %v138
    %v251 = vpop.f32.mrb[0].mxu0
    %v252 = vadd.f32 0.0, %v251
    %v253 = vpop.f32.mrb[0].mxu0
    %254 = vmatprep.mubr.f32.mxu0 0.0
    %255 = vmatmul.mubr.f32.gmra.mrb[0].mxu0 %v140
    %v256 = vpop.f32.mrb[0].mxu0
    %v257 = vadd.f32 0.0, %v256
    %v258 = vpop.f32.mrb[0].mxu0
    %259 = vmatprep.mubr.f32.mxu0 0.0
    %260 = vmatmul.mubr.f32.gmra.mrb[0].mxu0 %v142
    %v261 = vpop.f32.mrb[0].mxu0
    %v262 = vadd.f32 0.0, %v261
    %v263 = vpop.f32.mrb[0].mxu0
    %264 = vmatprep.mubr.f32.mxu0 0.0
    %265 = vmatmul.mubr.f32.gmra.mrb[0].mxu0 %v144
    %v266 = vpop.f32.mrb[0].mxu0
    %v267 = vadd.f32 0.0, %v266
    %v268 = vpop.f32.mrb[0].mxu0
    %269 = vmatprep.mubr.f32.mxu0 0.0
    %270 = vmatmul.mubr.f32.gmra.mrb[0].mxu0 %v146
    %v271 = vpop.f32.mrb[0].mxu0
    %v272 = vadd.f32 0.0, %v271
    %v273 = vpop.f32.mrb[0].mxu0
    %274 = vmatprep.mubr.f32.mxu0 0.0
    %275 = vmatmul.mubr.f32.gmra.mrb[0].mxu0 %v149
    %v276 = vpop.f32.mrb[0].mxu0
    %v277 = vadd.f32 0.0, %v276
    %v278 = vpop.f32.mrb[0].mxu0
    %279 = vdwg.mxu0
    %v280 = vsel %vm125, %v71, 0
    %v282 = vsel %vm125, %v72, 0
    %v284 = vsel %vm125, %v73, 0
    %v286 = vsel %vm125, %v74, 0
    %v288 = vsel %vm125, %v75, 0
    %v290 = vsel %vm125, %v76, 0
    %v292 = vsel %vm125, %v77, 0
    %v294 = vsel %vm125, %v78, 0
    %v296 = vsel %vm125, %v79, 0
    %v298 = vsel %vm125, %v80, 0
    %v300 = vsel %vm125, %v81, 0
    %v302 = vsel %vm125, %v82, 0
    %v305 = vsel %vm151, %v83, 0
    %307 = vmatprep.subr.mxu0 0.0
    %308 = vmatpush1.msra.mxu0 %v305
    %309 = vmatprep.subr.mxu0 0.0
    %310 = vmatpush1.msra.mxu0 0.0
    %311 = vmatprep.subr.mxu0 0.0
    %312 = vmatpush1.msra.mxu0 0.0
    %313 = vmatprep.subr.mxu0 0.0
    %314 = vmatpush1.msra.mxu0 0.0
    %315 = vmatprep.subr.mxu0 0.0
    %316 = vmatpush1.msra.mxu0 0.0
    %317 = vmatprep.subr.mxu0 0.0
    %318 = vmatpush1.msra.mxu0 0.0
    %319 = vmatprep.subr.mxu0 0.0
    %320 = vmatpush1.msra.mxu0 0.0
    %321 = vmatprep.subr.mxu0 0.0
    %322 = vmatpush1.msra.mxu0 0.0
    %323 = vmatprep.subr.mxu0 0.0
    %324 = vmatpush1.msra.mxu0 0.0
    %325 = vmatprep.subr.mxu0 0.0
    %326 = vmatpush1.msra.mxu0 0.0
    %327 = vmatprep.subr.mxu0 0.0
    %328 = vmatpush1.msra.mxu0 0.0
    %329 = vmatprep.subr.mxu0 0.0
    %330 = vmatpush1.msra.mxu0 0.0
    %331 = vmatprep.subr.mxu0 0.0
    %332 = vmatpush1.msra.mxu0 0.0
    %333 = vmatprep.subr.mxu0 0.0
    %334 = vmatpush1.msra.mxu0 0.0
    %335 = vmatprep.subr.mxu0 0.0
    %336 = vmatpush1.msra.mxu0 0.0
    %337 = vmatprep.subr.mxu0 0.0
    %338 = vmatpush1.msra.mxu0 0.0
    %339 = vmatprep.subr.mxu0 0.0
    %340 = vmatpush1.msra.mxu0 0.0
    %341 = vmatprep.subr.mxu0 0.0
    %342 = vmatpush1.msra.mxu0 0.0
    %343 = vmatprep.subr.mxu0 0.0
    %344 = vmatpush1.msra.mxu0 0.0
    %345 = vmatprep.subr.mxu0 0.0
    %346 = vmatpush1.msra.mxu0 0.0
    %347 = vmatprep.subr.mxu0 0.0
    %348 = vmatpush1.msra.mxu0 0.0
    %349 = vmatprep.subr.mxu0 0.0
    %350 = vmatpush1.msra.mxu0 0.0
    %351 = vmatprep.subr.mxu0 0.0
    %352 = vmatpush1.msra.mxu0 0.0
    %353 = vmatprep.subr.mxu0 0.0
    %354 = vmatpush1.msra.mxu0 0.0
    %355 = vmatprep.subr.mxu0 0.0
    %356 = vmatpush1.msra.mxu0 0.0
    %357 = vmatprep.subr.mxu0 0.0
    %358 = vmatpush1.msra.mxu0 0.0
    %359 = vmatprep.subr.mxu0 0.0
    %360 = vmatpush1.msra.mxu0 0.0
    %361 = vmatprep.subr.mxu0 0.0
    %362 = vmatpush1.msra.mxu0 0.0
    %363 = vmatprep.subr.mxu0 0.0
    %364 = vmatpush1.msra.mxu0 0.0
    %365 = vmatprep.subr.mxu0 0.0
    %366 = vmatpush1.msra.mxu0 0.0
    %367 = vmatprep.subr.mxu0 0.0
    %368 = vmatpush1.msra.mxu0 0.0
    %369 = vmatprep.subr.mxu0 0.0
    %370 = vmatpush1.msra.mxu0 0.0
    %371 = vmatprep.mubr.f32.mxu0 0.0
    %372 = vmatmul.mubr.f32.gmra.mrb[0].mxu0 %v280
    %v373 = vpop.f32.mrb[0].mxu0
    %v374 = vadd.f32 %v222, %v373
    %v375 = vpop.f32.mrb[0].mxu0
    %376 = vmatprep.mubr.f32.mxu0 0.0
    %377 = vmatmul.mubr.f32.gmra.mrb[0].mxu0 %v282
    %v378 = vpop.f32.mrb[0].mxu0
    %v379 = vadd.f32 %v227, %v378
    %v380 = vpop.f32.mrb[0].mxu0
    %381 = vmatprep.mubr.f32.mxu0 0.0
    %382 = vmatmul.mubr.f32.gmra.mrb[0].mxu0 %v284
    %v383 = vpop.f32.mrb[0].mxu0
    %v384 = vadd.f32 %v232, %v383
    %v385 = vpop.f32.mrb[0].mxu0
    %386 = vmatprep.mubr.f32.mxu0 0.0
    %387 = vmatmul.mubr.f32.gmra.mrb[0].mxu0 %v286
    %v388 = vpop.f32.mrb[0].mxu0
    %v389 = vadd.f32 %v237, %v388
    %v390 = vpop.f32.mrb[0].mxu0
    %391 = vmatprep.mubr.f32.mxu0 0.0
    %392 = vmatmul.mubr.f32.gmra.mrb[0].mxu0 %v288
    %v393 = vpop.f32.mrb[0].mxu0
    %v394 = vadd.f32 %v242, %v393
    %v395 = vpop.f32.mrb[0].mxu0
    %396 = vmatprep.mubr.f32.mxu0 0.0
    %397 = vmatmul.mubr.f32.gmra.mrb[0].mxu0 %v290
    %v398 = vpop.f32.mrb[0].mxu0
    %v399 = vadd.f32 %v247, %v398
    %v400 = vpop.f32.mrb[0].mxu0
    %401 = vmatprep.mubr.f32.mxu0 0.0
    %402 = vmatmul.mubr.f32.gmra.mrb[0].mxu0 %v292
    %v403 = vpop.f32.mrb[0].mxu0
    %v404 = vadd.f32 %v252, %v403
    %v405 = vpop.f32.mrb[0].mxu0
    %406 = vmatprep.mubr.f32.mxu0 0.0
    %407 = vmatmul.mubr.f32.gmra.mrb[0].mxu0 %v294
    %v408 = vpop.f32.mrb[0].mxu0
    %v409 = vadd.f32 %v257, %v408
    %v410 = vpop.f32.mrb[0].mxu0
    %411 = vmatprep.mubr.f32.mxu0 0.0
    %412 = vmatmul.mubr.f32.gmra.mrb[0].mxu0 %v296
    %v413 = vpop.f32.mrb[0].mxu0
    %v414 = vadd.f32 %v262, %v413
    %v415 = vpop.f32.mrb[0].mxu0
    %416 = vmatprep.mubr.f32.mxu0 0.0
    %417 = vmatmul.mubr.f32.gmra.mrb[0].mxu0 %v298
    %v418 = vpop.f32.mrb[0].mxu0
    %v419 = vadd.f32 %v267, %v418
    %v420 = vpop.f32.mrb[0].mxu0
    %421 = vmatprep.mubr.f32.mxu0 0.0
    %422 = vmatmul.mubr.f32.gmra.mrb[0].mxu0 %v300
    %v423 = vpop.f32.mrb[0].mxu0
    %v424 = vadd.f32 %v272, %v423
    %v425 = vpop.f32.mrb[0].mxu0
    %426 = vmatprep.mubr.f32.mxu0 0.0
    %427 = vmatmul.mubr.f32.gmra.mrb[0].mxu0 %v302
    %v428 = vpop.f32.mrb[0].mxu0
    %v429 = vadd.f32 %v277, %v428
    %v430 = vpop.f32.mrb[0].mxu0
    %431 = vdwg.mxu0
    %vm432 = vcmask 1045504
    %v433 = vrot.slane %v71, 2
    %v434 = vrot.slane %v72, 2
    %v435 = vsel %vm432, %v433, %v434
    %v436 = vrot.slane %v73, 2
    %v437 = vsel %vm432, %v434, %v436
    %v438 = vrot.slane %v74, 2
    %v439 = vsel %vm432, %v436, %v438
    %v440 = vrot.slane %v75, 2
    %v441 = vsel %vm432, %v438, %v440
    %v442 = vrot.slane %v76, 2
    %v443 = vsel %vm432, %v440, %v442
    %v444 = vrot.slane %v77, 2
    %v445 = vsel %vm432, %v442, %v444
    %v446 = vrot.slane %v78, 2
    %v447 = vsel %vm432, %v444, %v446
    %v448 = vrot.slane %v79, 2
    %v449 = vsel %vm432, %v446, %v448
    %v450 = vrot.slane %v80, 2
    %v451 = vsel %vm432, %v448, %v450
    %v452 = vrot.slane %v81, 2
    %v453 = vsel %vm432, %v450, %v452
    %v454 = vrot.slane %v82, 2
    %v455 = vsel %vm432, %v452, %v454
    %v458 = vsel %vm432, %v454, %v433
    %s459 = scalar_lea.vmem %s1, 8
    %v460 = vld [vmem:[%s459] sm:$0xf]
    %v461 = vsel %vm125, %v435, 0
    %v463 = vsel %vm125, %v437, 0
    %v465 = vsel %vm125, %v439, 0
    %v467 = vsel %vm125, %v441, 0
    %v469 = vsel %vm125, %v443, 0
    %v471 = vsel %vm125, %v445, 0
    %v473 = vsel %vm125, %v447, 0
    %v475 = vsel %vm125, %v449, 0
    %v477 = vsel %vm125, %v451, 0
    %v479 = vsel %vm125, %v453, 0
    %v481 = vsel %vm125, %v455, 0
    %v484 = vsel %vm125, %v458, 0
    %v487 = vsel %vm151, %v460, 0
    %489 = vmatprep.subr.mxu0 0.0
    %490 = vmatpush1.msra.mxu0 %v487
    %491 = vmatprep.subr.mxu0 0.0
    %492 = vmatpush1.msra.mxu0 0.0
    %493 = vmatprep.subr.mxu0 0.0
    %494 = vmatpush1.msra.mxu0 0.0
    %495 = vmatprep.subr.mxu0 0.0
    %496 = vmatpush1.msra.mxu0 0.0
    %497 = vmatprep.subr.mxu0 0.0
    %498 = vmatpush1.msra.mxu0 0.0
    %499 = vmatprep.subr.mxu0 0.0
    %500 = vmatpush1.msra.mxu0 0.0
    %501 = vmatprep.subr.mxu0 0.0
    %502 = vmatpush1.msra.mxu0 0.0
    %503 = vmatprep.subr.mxu0 0.0
    %504 = vmatpush1.msra.mxu0 0.0
    %505 = vmatprep.subr.mxu0 0.0
    %506 = vmatpush1.msra.mxu0 0.0
    %507 = vmatprep.subr.mxu0 0.0
    %508 = vmatpush1.msra.mxu0 0.0
    %509 = vmatprep.subr.mxu0 0.0
    %510 = vmatpush1.msra.mxu0 0.0
    %511 = vmatprep.subr.mxu0 0.0
    %512 = vmatpush1.msra.mxu0 0.0
    %513 = vmatprep.subr.mxu0 0.0
    %514 = vmatpush1.msra.mxu0 0.0
    %515 = vmatprep.subr.mxu0 0.0
    %516 = vmatpush1.msra.mxu0 0.0
    %517 = vmatprep.subr.mxu0 0.0
    %518 = vmatpush1.msra.mxu0 0.0
    %519 = vmatprep.subr.mxu0 0.0
    %520 = vmatpush1.msra.mxu0 0.0
    %521 = vmatprep.subr.mxu0 0.0
    %522 = vmatpush1.msra.mxu0 0.0
    %523 = vmatprep.subr.mxu0 0.0
    %524 = vmatpush1.msra.mxu0 0.0
    %525 = vmatprep.subr.mxu0 0.0
    %526 = vmatpush1.msra.mxu0 0.0
    %527 = vmatprep.subr.mxu0 0.0
    %528 = vmatpush1.msra.mxu0 0.0
    %529 = vmatprep.subr.mxu0 0.0
    %530 = vmatpush1.msra.mxu0 0.0
    %531 = vmatprep.subr.mxu0 0.0
    %532 = vmatpush1.msra.mxu0 0.0
    %533 = vmatprep.subr.mxu0 0.0
    %534 = vmatpush1.msra.mxu0 0.0
    %535 = vmatprep.subr.mxu0 0.0
    %536 = vmatpush1.msra.mxu0 0.0
    %537 = vmatprep.subr.mxu0 0.0
    %538 = vmatpush1.msra.mxu0 0.0
    %539 = vmatprep.subr.mxu0 0.0
    %540 = vmatpush1.msra.mxu0 0.0
    %541 = vmatprep.subr.mxu0 0.0
    %542 = vmatpush1.msra.mxu0 0.0
    %543 = vmatprep.subr.mxu0 0.0
    %544 = vmatpush1.msra.mxu0 0.0
    %545 = vmatprep.subr.mxu0 0.0
    %546 = vmatpush1.msra.mxu0 0.0
    %547 = vmatprep.subr.mxu0 0.0
    %548 = vmatpush1.msra.mxu0 0.0
    %549 = vmatprep.subr.mxu0 0.0
    %550 = vmatpush1.msra.mxu0 0.0
    %551 = vmatprep.subr.mxu0 0.0
    %552 = vmatpush1.msra.mxu0 0.0
    %553 = vmatprep.mubr.f32.mxu0 0.0
    %554 = vmatmul.mubr.f32.gmra.mrb[0].mxu0 %v461
    %v555 = vpop.f32.mrb[0].mxu0
    %v556 = vadd.f32 0.0, %v555
    %v557 = vpop.f32.mrb[0].mxu0
    %558 = vmatprep.mubr.f32.mxu0 0.0
    %559 = vmatmul.mubr.f32.gmra.mrb[0].mxu0 %v463
    %v560 = vpop.f32.mrb[0].mxu0
    %v561 = vadd.f32 0.0, %v560
    %v562 = vpop.f32.mrb[0].mxu0
    %563 = vmatprep.mubr.f32.mxu0 0.0
    %564 = vmatmul.mubr.f32.gmra.mrb[0].mxu0 %v465
    %v565 = vpop.f32.mrb[0].mxu0
    %v566 = vadd.f32 0.0, %v565
    %v567 = vpop.f32.mrb[0].mxu0
    %568 = vmatprep.mubr.f32.mxu0 0.0
    %569 = vmatmul.mubr.f32.gmra.mrb[0].mxu0 %v467
    %v570 = vpop.f32.mrb[0].mxu0
    %v571 = vadd.f32 0.0, %v570
    %v572 = vpop.f32.mrb[0].mxu0
    %573 = vmatprep.mubr.f32.mxu0 0.0
    %574 = vmatmul.mubr.f32.gmra.mrb[0].mxu0 %v469
    %v575 = vpop.f32.mrb[0].mxu0
    %v576 = vadd.f32 0.0, %v575
    %v577 = vpop.f32.mrb[0].mxu0
    %578 = vmatprep.mubr.f32.mxu0 0.0
    %579 = vmatmul.mubr.f32.gmra.mrb[0].mxu0 %v471
    %v580 = vpop.f32.mrb[0].mxu0
    %v581 = vadd.f32 0.0, %v580
    %v582 = vpop.f32.mrb[0].mxu0
    %583 = vmatprep.mubr.f32.mxu0 0.0
    %584 = vmatmul.mubr.f32.gmra.mrb[0].mxu0 %v473
    %v585 = vpop.f32.mrb[0].mxu0
    %v586 = vadd.f32 0.0, %v585
    %v587 = vpop.f32.mrb[0].mxu0
    %588 = vmatprep.mubr.f32.mxu0 0.0
    %589 = vmatmul.mubr.f32.gmra.mrb[0].mxu0 %v475
    %v590 = vpop.f32.mrb[0].mxu0
    %v591 = vadd.f32 0.0, %v590
    %v592 = vpop.f32.mrb[0].mxu0
    %593 = vmatprep.mubr.f32.mxu0 0.0
    %594 = vmatmul.mubr.f32.gmra.mrb[0].mxu0 %v477
    %v595 = vpop.f32.mrb[0].mxu0
    %v596 = vadd.f32 0.0, %v595
    %v597 = vpop.f32.mrb[0].mxu0
    %598 = vmatprep.mubr.f32.mxu0 0.0
    %599 = vmatmul.mubr.f32.gmra.mrb[0].mxu0 %v479
    %v600 = vpop.f32.mrb[0].mxu0
    %v601 = vadd.f32 0.0, %v600
    %v602 = vpop.f32.mrb[0].mxu0
    %603 = vmatprep.mubr.f32.mxu0 0.0
    %604 = vmatmul.mubr.f32.gmra.mrb[0].mxu0 %v481
    %v605 = vpop.f32.mrb[0].mxu0
    %v606 = vadd.f32 0.0, %v605
    %v607 = vpop.f32.mrb[0].mxu0
    %608 = vmatprep.mubr.f32.mxu0 0.0
    %609 = vmatmul.mubr.f32.gmra.mrb[0].mxu0 %v484
    %v610 = vpop.f32.mrb[0].mxu0
    %v611 = vadd.f32 0.0, %v610
    %v612 = vpop.f32.mrb[0].mxu0
    %613 = vdwg.mxu0
    %v614 = vadd.f32 %v374, %v556
    %v615 = vadd.f32 %v379, %v561
    %v616 = vadd.f32 %v384, %v566
    %v617 = vadd.f32 %v389, %v571
    %v618 = vadd.f32 %v394, %v576
    %v619 = vadd.f32 %v399, %v581
    %v620 = vadd.f32 %v404, %v586
    %v621 = vadd.f32 %v409, %v591
    %v622 = vadd.f32 %v414, %v596
    %v623 = vadd.f32 %v419, %v601
    %v624 = vadd.f32 %v424, %v606
    %v625 = vadd.f32 %v429, %v611
    %vm626 = vcmask 1044480
    %v627 = vrot.slane %v71, 3
    %v628 = vrot.slane %v72, 3
    %v629 = vsel %vm626, %v627, %v628
    %v630 = vrot.slane %v73, 3
    %v631 = vsel %vm626, %v628, %v630
    %v632 = vrot.slane %v74, 3
    %v633 = vsel %vm626, %v630, %v632
    %v634 = vrot.slane %v75, 3
    %v635 = vsel %vm626, %v632, %v634
    %v636 = vrot.slane %v76, 3
    %v637 = vsel %vm626, %v634, %v636
    %v638 = vrot.slane %v77, 3
    %v639 = vsel %vm626, %v636, %v638
    %v640 = vrot.slane %v78, 3
    %v641 = vsel %vm626, %v638, %v640
    %v642 = vrot.slane %v79, 3
    %v643 = vsel %vm626, %v640, %v642
    %v644 = vrot.slane %v80, 3
    %v645 = vsel %vm626, %v642, %v644
    %v646 = vrot.slane %v81, 3
    %v647 = vsel %vm626, %v644, %v646
    %v648 = vrot.slane %v82, 3
    %v649 = vsel %vm626, %v646, %v648
    %v652 = vsel %vm626, %v648, %v627
    %s653 = scalar_lea.vmem %s1, 12
    %v654 = vld [vmem:[%s653] sm:$0xf]
    %v655 = vsel %vm125, %v629, 0
    %v657 = vsel %vm125, %v631, 0
    %v659 = vsel %vm125, %v633, 0
    %v661 = vsel %vm125, %v635, 0
    %v663 = vsel %vm125, %v637, 0
    %v665 = vsel %vm125, %v639, 0
    %v667 = vsel %vm125, %v641, 0
    %v669 = vsel %vm125, %v643, 0
    %v671 = vsel %vm125, %v645, 0
    %v673 = vsel %vm125, %v647, 0
    %v675 = vsel %vm125, %v649, 0
    %v678 = vsel %vm125, %v652, 0
    %v681 = vsel %vm151, %v654, 0
    %683 = vmatprep.subr.mxu0 0.0
    %684 = vmatpush1.msra.mxu0 %v681
    %685 = vmatprep.subr.mxu0 0.0
    %686 = vmatpush1.msra.mxu0 0.0
    %687 = vmatprep.subr.mxu0 0.0
    %688 = vmatpush1.msra.mxu0 0.0
    %689 = vmatprep.subr.mxu0 0.0
    %690 = vmatpush1.msra.mxu0 0.0
    %691 = vmatprep.subr.mxu0 0.0
    %692 = vmatpush1.msra.mxu0 0.0
    %693 = vmatprep.subr.mxu0 0.0
    %694 = vmatpush1.msra.mxu0 0.0
    %695 = vmatprep.subr.mxu0 0.0
    %696 = vmatpush1.msra.mxu0 0.0
    %697 = vmatprep.subr.mxu0 0.0
    %698 = vmatpush1.msra.mxu0 0.0
    %699 = vmatprep.subr.mxu0 0.0
    %700 = vmatpush1.msra.mxu0 0.0
    %701 = vmatprep.subr.mxu0 0.0
    %702 = vmatpush1.msra.mxu0 0.0
    %703 = vmatprep.subr.mxu0 0.0
    %704 = vmatpush1.msra.mxu0 0.0
    %705 = vmatprep.subr.mxu0 0.0
    %706 = vmatpush1.msra.mxu0 0.0
    %707 = vmatprep.subr.mxu0 0.0
    %708 = vmatpush1.msra.mxu0 0.0
    %709 = vmatprep.subr.mxu0 0.0
    %710 = vmatpush1.msra.mxu0 0.0
    %711 = vmatprep.subr.mxu0 0.0
    %712 = vmatpush1.msra.mxu0 0.0
    %713 = vmatprep.subr.mxu0 0.0
    %714 = vmatpush1.msra.mxu0 0.0
    %715 = vmatprep.subr.mxu0 0.0
    %716 = vmatpush1.msra.mxu0 0.0
    %717 = vmatprep.subr.mxu0 0.0
    %718 = vmatpush1.msra.mxu0 0.0
    %719 = vmatprep.subr.mxu0 0.0
    %720 = vmatpush1.msra.mxu0 0.0
    %721 = vmatprep.subr.mxu0 0.0
    %722 = vmatpush1.msra.mxu0 0.0
    %723 = vmatprep.subr.mxu0 0.0
    %724 = vmatpush1.msra.mxu0 0.0
    %725 = vmatprep.subr.mxu0 0.0
    %726 = vmatpush1.msra.mxu0 0.0
    %727 = vmatprep.subr.mxu0 0.0
    %728 = vmatpush1.msra.mxu0 0.0
    %729 = vmatprep.subr.mxu0 0.0
    %730 = vmatpush1.msra.mxu0 0.0
    %731 = vmatprep.subr.mxu0 0.0
    %732 = vmatpush1.msra.mxu0 0.0
    %733 = vmatprep.subr.mxu0 0.0
    %734 = vmatpush1.msra.mxu0 0.0
    %735 = vmatprep.subr.mxu0 0.0
    %736 = vmatpush1.msra.mxu0 0.0
    %737 = vmatprep.subr.mxu0 0.0
    %738 = vmatpush1.msra.mxu0 0.0
    %739 = vmatprep.subr.mxu0 0.0
    %740 = vmatpush1.msra.mxu0 0.0
    %741 = vmatprep.subr.mxu0 0.0
    %742 = vmatpush1.msra.mxu0 0.0
    %743 = vmatprep.subr.mxu0 0.0
    %744 = vmatpush1.msra.mxu0 0.0
    %745 = vmatprep.subr.mxu0 0.0
    %746 = vmatpush1.msra.mxu0 0.0
    %747 = vmatprep.mubr.f32.mxu0 0.0
    %748 = vmatmul.mubr.f32.gmra.mrb[0].mxu0 %v655
    %v749 = vpop.f32.mrb[0].mxu0
    %v750 = vadd.f32 0.0, %v749
    %v751 = vpop.f32.mrb[0].mxu0
    %752 = vmatprep.mubr.f32.mxu0 0.0
    %753 = vmatmul.mubr.f32.gmra.mrb[0].mxu0 %v657
    %v754 = vpop.f32.mrb[0].mxu0
    %v755 = vadd.f32 0.0, %v754
    %v756 = vpop.f32.mrb[0].mxu0
    %757 = vmatprep.mubr.f32.mxu0 0.0
    %758 = vmatmul.mubr.f32.gmra.mrb[0].mxu0 %v659
    %v759 = vpop.f32.mrb[0].mxu0
    %v760 = vadd.f32 0.0, %v759
    %v761 = vpop.f32.mrb[0].mxu0
    %762 = vmatprep.mubr.f32.mxu0 0.0
    %763 = vmatmul.mubr.f32.gmra.mrb[0].mxu0 %v661
    %v764 = vpop.f32.mrb[0].mxu0
    %v765 = vadd.f32 0.0, %v764
    %v766 = vpop.f32.mrb[0].mxu0
    %767 = vmatprep.mubr.f32.mxu0 0.0
    %768 = vmatmul.mubr.f32.gmra.mrb[0].mxu0 %v663
    %v769 = vpop.f32.mrb[0].mxu0
    %v770 = vadd.f32 0.0, %v769
    %v771 = vpop.f32.mrb[0].mxu0
    %772 = vmatprep.mubr.f32.mxu0 0.0
    %773 = vmatmul.mubr.f32.gmra.mrb[0].mxu0 %v665
    %v774 = vpop.f32.mrb[0].mxu0
    %v775 = vadd.f32 0.0, %v774
    %v776 = vpop.f32.mrb[0].mxu0
    %777 = vmatprep.mubr.f32.mxu0 0.0
    %778 = vmatmul.mubr.f32.gmra.mrb[0].mxu0 %v667
    %v779 = vpop.f32.mrb[0].mxu0
    %v780 = vadd.f32 0.0, %v779
    %v781 = vpop.f32.mrb[0].mxu0
    %782 = vmatprep.mubr.f32.mxu0 0.0
    %783 = vmatmul.mubr.f32.gmra.mrb[0].mxu0 %v669
    %v784 = vpop.f32.mrb[0].mxu0
    %v785 = vadd.f32 0.0, %v784
    %v786 = vpop.f32.mrb[0].mxu0
    %787 = vmatprep.mubr.f32.mxu0 0.0
    %788 = vmatmul.mubr.f32.gmra.mrb[0].mxu0 %v671
    %v789 = vpop.f32.mrb[0].mxu0
    %v790 = vadd.f32 0.0, %v789
    %v791 = vpop.f32.mrb[0].mxu0
    %792 = vmatprep.mubr.f32.mxu0 0.0
    %793 = vmatmul.mubr.f32.gmra.mrb[0].mxu0 %v673
    %v794 = vpop.f32.mrb[0].mxu0
    %v795 = vadd.f32 0.0, %v794
    %v796 = vpop.f32.mrb[0].mxu0
    %797 = vmatprep.mubr.f32.mxu0 0.0
    %798 = vmatmul.mubr.f32.gmra.mrb[0].mxu0 %v675
    %v799 = vpop.f32.mrb[0].mxu0
    %v800 = vadd.f32 0.0, %v799
    %v801 = vpop.f32.mrb[0].mxu0
    %802 = vmatprep.mubr.f32.mxu0 0.0
    %803 = vmatmul.mubr.f32.gmra.mrb[0].mxu0 %v678
    %v804 = vpop.f32.mrb[0].mxu0
    %v805 = vadd.f32 0.0, %v804
    %v806 = vpop.f32.mrb[0].mxu0
    %807 = vdwg.mxu0
    %v808 = vadd.f32 %v614, %v750
    %v809 = vadd.f32 %v615, %v755
    %v810 = vadd.f32 %v616, %v760
    %v811 = vadd.f32 %v617, %v765
    %v812 = vadd.f32 %v618, %v770
    %v813 = vadd.f32 %v619, %v775
    %v814 = vadd.f32 %v620, %v780
    %v815 = vadd.f32 %v621, %v785
    %v816 = vadd.f32 %v622, %v790
    %v817 = vadd.f32 %v623, %v795
    %v818 = vadd.f32 %v624, %v800
    %v819 = vadd.f32 %v625, %v805
    %v820 = vrot.slane %v71, 4
    %v821 = vrot.slane %v72, 4
    %v822 = vsel %vm151, %v820, %v821
    %v823 = vrot.slane %v73, 4
    %v824 = vsel %vm151, %v821, %v823
    %v825 = vrot.slane %v74, 4
    %v826 = vsel %vm151, %v823, %v825
    %v827 = vrot.slane %v75, 4
    %v828 = vsel %vm151, %v825, %v827
    %v829 = vrot.slane %v76, 4
    %v830 = vsel %vm151, %v827, %v829
    %v831 = vrot.slane %v77, 4
    %v832 = vsel %vm151, %v829, %v831
    %v833 = vrot.slane %v78, 4
    %v834 = vsel %vm151, %v831, %v833
    %v835 = vrot.slane %v79, 4
    %v836 = vsel %vm151, %v833, %v835
    %v837 = vrot.slane %v80, 4
    %v838 = vsel %vm151, %v835, %v837
    %v839 = vrot.slane %v81, 4
    %v840 = vsel %vm151, %v837, %v839
    %v841 = vrot.slane %v82, 4
    %v842 = vsel %vm151, %v839, %v841
    %v845 = vsel %vm151, %v841, %v820
    %s846 = scalar_lea.vmem %s1, 16
    %v847 = vld [vmem:[%s846] sm:$0xf]
    %v848 = vsel %vm125, %v822, 0
    %v850 = vsel %vm125, %v824, 0
    %v852 = vsel %vm125, %v826, 0
    %v854 = vsel %vm125, %v828, 0
    %v856 = vsel %vm125, %v830, 0
    %v858 = vsel %vm125, %v832, 0
    %v860 = vsel %vm125, %v834, 0
    %v862 = vsel %vm125, %v836, 0
    %v864 = vsel %vm125, %v838, 0
    %v866 = vsel %vm125, %v840, 0
    %v868 = vsel %vm125, %v842, 0
    %v871 = vsel %vm125, %v845, 0
    %v874 = vsel %vm151, %v847, 0
    %876 = vmatprep.subr.mxu0 0.0
    %877 = vmatpush1.msra.mxu0 %v874
    %878 = vmatprep.subr.mxu0 0.0
    %879 = vmatpush1.msra.mxu0 0.0
    %880 = vmatprep.subr.mxu0 0.0
    %881 = vmatpush1.msra.mxu0 0.0
    %882 = vmatprep.subr.mxu0 0.0
    %883 = vmatpush1.msra.mxu0 0.0
    %884 = vmatprep.subr.mxu0 0.0
    %885 = vmatpush1.msra.mxu0 0.0
    %886 = vmatprep.subr.mxu0 0.0
    %887 = vmatpush1.msra.mxu0 0.0
    %888 = vmatprep.subr.mxu0 0.0
    %889 = vmatpush1.msra.mxu0 0.0
    %890 = vmatprep.subr.mxu0 0.0
    %891 = vmatpush1.msra.mxu0 0.0
    %892 = vmatprep.subr.mxu0 0.0
    %893 = vmatpush1.msra.mxu0 0.0
    %894 = vmatprep.subr.mxu0 0.0
    %895 = vmatpush1.msra.mxu0 0.0
    %896 = vmatprep.subr.mxu0 0.0
    %897 = vmatpush1.msra.mxu0 0.0
    %898 = vmatprep.subr.mxu0 0.0
    %899 = vmatpush1.msra.mxu0 0.0
    %900 = vmatprep.subr.mxu0 0.0
    %901 = vmatpush1.msra.mxu0 0.0
    %902 = vmatprep.subr.mxu0 0.0
    %903 = vmatpush1.msra.mxu0 0.0
    %904 = vmatprep.subr.mxu0 0.0
    %905 = vmatpush1.msra.mxu0 0.0
    %906 = vmatprep.subr.mxu0 0.0
    %907 = vmatpush1.msra.mxu0 0.0
    %908 = vmatprep.subr.mxu0 0.0
    %909 = vmatpush1.msra.mxu0 0.0
    %910 = vmatprep.subr.mxu0 0.0
    %911 = vmatpush1.msra.mxu0 0.0
    %912 = vmatprep.subr.mxu0 0.0
    %913 = vmatpush1.msra.mxu0 0.0
    %914 = vmatprep.subr.mxu0 0.0
    %915 = vmatpush1.msra.mxu0 0.0
    %916 = vmatprep.subr.mxu0 0.0
    %917 = vmatpush1.msra.mxu0 0.0
    %918 = vmatprep.subr.mxu0 0.0
    %919 = vmatpush1.msra.mxu0 0.0
    %920 = vmatprep.subr.mxu0 0.0
    %921 = vmatpush1.msra.mxu0 0.0
    %922 = vmatprep.subr.mxu0 0.0
    %923 = vmatpush1.msra.mxu0 0.0
    %924 = vmatprep.subr.mxu0 0.0
    %925 = vmatpush1.msra.mxu0 0.0
    %926 = vmatprep.subr.mxu0 0.0
    %927 = vmatpush1.msra.mxu0 0.0
    %928 = vmatprep.subr.mxu0 0.0
    %929 = vmatpush1.msra.mxu0 0.0
    %930 = vmatprep.subr.mxu0 0.0
    %931 = vmatpush1.msra.mxu0 0.0
    %932 = vmatprep.subr.mxu0 0.0
    %933 = vmatpush1.msra.mxu0 0.0
    %934 = vmatprep.subr.mxu0 0.0
    %935 = vmatpush1.msra.mxu0 0.0
    %936 = vmatprep.subr.mxu0 0.0
    %937 = vmatpush1.msra.mxu0 0.0
    %938 = vmatprep.subr.mxu0 0.0
    %939 = vmatpush1.msra.mxu0 0.0
    %940 = vmatprep.mubr.f32.mxu0 0.0
    %941 = vmatmul.mubr.f32.gmra.mrb[0].mxu0 %v848
    %v942 = vpop.f32.mrb[0].mxu0
    %v943 = vadd.f32 0.0, %v942
    %v944 = vpop.f32.mrb[0].mxu0
    %945 = vmatprep.mubr.f32.mxu0 0.0
    %946 = vmatmul.mubr.f32.gmra.mrb[0].mxu0 %v850
    %v947 = vpop.f32.mrb[0].mxu0
    %v948 = vadd.f32 0.0, %v947
    %v949 = vpop.f32.mrb[0].mxu0
    %950 = vmatprep.mubr.f32.mxu0 0.0
    %951 = vmatmul.mubr.f32.gmra.mrb[0].mxu0 %v852
    %v952 = vpop.f32.mrb[0].mxu0
    %v953 = vadd.f32 0.0, %v952
    %v954 = vpop.f32.mrb[0].mxu0
    %955 = vmatprep.mubr.f32.mxu0 0.0
    %956 = vmatmul.mubr.f32.gmra.mrb[0].mxu0 %v854
    %v957 = vpop.f32.mrb[0].mxu0
    %v958 = vadd.f32 0.0, %v957
    %v959 = vpop.f32.mrb[0].mxu0
    %960 = vmatprep.mubr.f32.mxu0 0.0
    %961 = vmatmul.mubr.f32.gmra.mrb[0].mxu0 %v856
    %v962 = vpop.f32.mrb[0].mxu0
    %v963 = vadd.f32 0.0, %v962
    %v964 = vpop.f32.mrb[0].mxu0
    %965 = vmatprep.mubr.f32.mxu0 0.0
    %966 = vmatmul.mubr.f32.gmra.mrb[0].mxu0 %v858
    %v967 = vpop.f32.mrb[0].mxu0
    %v968 = vadd.f32 0.0, %v967
    %v969 = vpop.f32.mrb[0].mxu0
    %970 = vmatprep.mubr.f32.mxu0 0.0
    %971 = vmatmul.mubr.f32.gmra.mrb[0].mxu0 %v860
    %v972 = vpop.f32.mrb[0].mxu0
    %v973 = vadd.f32 0.0, %v972
    %v974 = vpop.f32.mrb[0].mxu0
    %975 = vmatprep.mubr.f32.mxu0 0.0
    %976 = vmatmul.mubr.f32.gmra.mrb[0].mxu0 %v862
    %v977 = vpop.f32.mrb[0].mxu0
    %v978 = vadd.f32 0.0, %v977
    %v979 = vpop.f32.mrb[0].mxu0
    %980 = vmatprep.mubr.f32.mxu0 0.0
    %981 = vmatmul.mubr.f32.gmra.mrb[0].mxu0 %v864
    %v982 = vpop.f32.mrb[0].mxu0
    %v983 = vadd.f32 0.0, %v982
    %v984 = vpop.f32.mrb[0].mxu0
    %985 = vmatprep.mubr.f32.mxu0 0.0
    %986 = vmatmul.mubr.f32.gmra.mrb[0].mxu0 %v866
    %v987 = vpop.f32.mrb[0].mxu0
    %v988 = vadd.f32 0.0, %v987
    %v989 = vpop.f32.mrb[0].mxu0
    %990 = vmatprep.mubr.f32.mxu0 0.0
    %991 = vmatmul.mubr.f32.gmra.mrb[0].mxu0 %v868
    %v992 = vpop.f32.mrb[0].mxu0
    %v993 = vadd.f32 0.0, %v992
    %v994 = vpop.f32.mrb[0].mxu0
    %995 = vmatprep.mubr.f32.mxu0 0.0
    %996 = vmatmul.mubr.f32.gmra.mrb[0].mxu0 %v871
    %v997 = vpop.f32.mrb[0].mxu0
    %v998 = vadd.f32 0.0, %v997
    %v999 = vpop.f32.mrb[0].mxu0
    %1000 = vdwg.mxu0
    %v1001 = vadd.f32 %v808, %v943
    %v1002 = vadd.f32 %v809, %v948
    %v1003 = vadd.f32 %v810, %v953
    %v1004 = vadd.f32 %v811, %v958
    %v1005 = vadd.f32 %v812, %v963
    %v1006 = vadd.f32 %v813, %v968
    %v1007 = vadd.f32 %v814, %v973
    %v1008 = vadd.f32 %v815, %v978
    %v1009 = vadd.f32 %v816, %v983
    %v1010 = vadd.f32 %v817, %v988
    %v1011 = vadd.f32 %v818, %v993
    %v1012 = vadd.f32 %v819, %v998
    %vm1013 = vcmask 1042432
    %v1014 = vrot.slane %v71, 5
    %v1015 = vrot.slane %v72, 5
    %v1016 = vsel %vm1013, %v1014, %v1015
    %v1017 = vrot.slane %v73, 5
    %v1018 = vsel %vm1013, %v1015, %v1017
    %v1019 = vrot.slane %v74, 5
    %v1020 = vsel %vm1013, %v1017, %v1019
    %v1021 = vrot.slane %v75, 5
    %v1022 = vsel %vm1013, %v1019, %v1021
    %v1023 = vrot.slane %v76, 5
    %v1024 = vsel %vm1013, %v1021, %v1023
    %v1025 = vrot.slane %v77, 5
    %v1026 = vsel %vm1013, %v1023, %v1025
    %v1027 = vrot.slane %v78, 5
    %v1028 = vsel %vm1013, %v1025, %v1027
    %v1029 = vrot.slane %v79, 5
    %v1030 = vsel %vm1013, %v1027, %v1029
    %v1031 = vrot.slane %v80, 5
    %v1032 = vsel %vm1013, %v1029, %v1031
    %v1033 = vrot.slane %v81, 5
    %v1034 = vsel %vm1013, %v1031, %v1033
    %v1035 = vrot.slane %v82, 5
    %v1036 = vsel %vm1013, %v1033, %v1035
    %v1039 = vsel %vm1013, %v1035, %v1014
    %s1040 = scalar_lea.vmem %s1, 20
    %v1041 = vld [vmem:[%s1040] sm:$0xf]
    %v1042 = vsel %vm125, %v1016, 0
    %v1044 = vsel %vm125, %v1018, 0
    %v1046 = vsel %vm125, %v1020, 0
    %v1048 = vsel %vm125, %v1022, 0
    %v1050 = vsel %vm125, %v1024, 0
    %v1052 = vsel %vm125, %v1026, 0
    %v1054 = vsel %vm125, %v1028, 0
    %v1056 = vsel %vm125, %v1030, 0
    %v1058 = vsel %vm125, %v1032, 0
    %v1060 = vsel %vm125, %v1034, 0
    %v1062 = vsel %vm125, %v1036, 0
    %v1065 = vsel %vm125, %v1039, 0
    %v1068 = vsel %vm151, %v1041, 0
    %1070 = vmatprep.subr.mxu0 0.0
    %1071 = vmatpush1.msra.mxu0 %v1068
    %1072 = vmatprep.subr.mxu0 0.0
    %1073 = vmatpush1.msra.mxu0 0.0
    %1074 = vmatprep.subr.mxu0 0.0
    %1075 = vmatpush1.msra.mxu0 0.0
    %1076 = vmatprep.subr.mxu0 0.0
    %1077 = vmatpush1.msra.mxu0 0.0
    %1078 = vmatprep.subr.mxu0 0.0
    %1079 = vmatpush1.msra.mxu0 0.0
    %1080 = vmatprep.subr.mxu0 0.0
    %1081 = vmatpush1.msra.mxu0 0.0
    %1082 = vmatprep.subr.mxu0 0.0
    %1083 = vmatpush1.msra.mxu0 0.0
    %1084 = vmatprep.subr.mxu0 0.0
    %1085 = vmatpush1.msra.mxu0 0.0
    %1086 = vmatprep.subr.mxu0 0.0
    %1087 = vmatpush1.msra.mxu0 0.0
    %1088 = vmatprep.subr.mxu0 0.0
    %1089 = vmatpush1.msra.mxu0 0.0
    %1090 = vmatprep.subr.mxu0 0.0
    %1091 = vmatpush1.msra.mxu0 0.0
    %1092 = vmatprep.subr.mxu0 0.0
    %1093 = vmatpush1.msra.mxu0 0.0
    %1094 = vmatprep.subr.mxu0 0.0
    %1095 = vmatpush1.msra.mxu0 0.0
    %1096 = vmatprep.subr.mxu0 0.0
    %1097 = vmatpush1.msra.mxu0 0.0
    %1098 = vmatprep.subr.mxu0 0.0
    %1099 = vmatpush1.msra.mxu0 0.0
    %1100 = vmatprep.subr.mxu0 0.0
    %1101 = vmatpush1.msra.mxu0 0.0
    %1102 = vmatprep.subr.mxu0 0.0
    %1103 = vmatpush1.msra.mxu0 0.0
    %1104 = vmatprep.subr.mxu0 0.0
    %1105 = vmatpush1.msra.mxu0 0.0
    %1106 = vmatprep.subr.mxu0 0.0
    %1107 = vmatpush1.msra.mxu0 0.0
    %1108 = vmatprep.subr.mxu0 0.0
    %1109 = vmatpush1.msra.mxu0 0.0
    %1110 = vmatprep.subr.mxu0 0.0
    %1111 = vmatpush1.msra.mxu0 0.0
    %1112 = vmatprep.subr.mxu0 0.0
    %1113 = vmatpush1.msra.mxu0 0.0
    %1114 = vmatprep.subr.mxu0 0.0
    %1115 = vmatpush1.msra.mxu0 0.0
    %1116 = vmatprep.subr.mxu0 0.0
    %1117 = vmatpush1.msra.mxu0 0.0
    %1118 = vmatprep.subr.mxu0 0.0
    %1119 = vmatpush1.msra.mxu0 0.0
    %1120 = vmatprep.subr.mxu0 0.0
    %1121 = vmatpush1.msra.mxu0 0.0
    %1122 = vmatprep.subr.mxu0 0.0
    %1123 = vmatpush1.msra.mxu0 0.0
    %1124 = vmatprep.subr.mxu0 0.0
    %1125 = vmatpush1.msra.mxu0 0.0
    %1126 = vmatprep.subr.mxu0 0.0
    %1127 = vmatpush1.msra.mxu0 0.0
    %1128 = vmatprep.subr.mxu0 0.0
    %1129 = vmatpush1.msra.mxu0 0.0
    %1130 = vmatprep.subr.mxu0 0.0
    %1131 = vmatpush1.msra.mxu0 0.0
    %1132 = vmatprep.subr.mxu0 0.0
    %1133 = vmatpush1.msra.mxu0 0.0
    %1134 = vmatprep.mubr.f32.mxu0 0.0
    %1135 = vmatmul.mubr.f32.gmra.mrb[0].mxu0 %v1042
    %v1136 = vpop.f32.mrb[0].mxu0
    %v1137 = vadd.f32 0.0, %v1136
    %v1138 = vpop.f32.mrb[0].mxu0
    %1139 = vmatprep.mubr.f32.mxu0 0.0
    %1140 = vmatmul.mubr.f32.gmra.mrb[0].mxu0 %v1044
    %v1141 = vpop.f32.mrb[0].mxu0
    %v1142 = vadd.f32 0.0, %v1141
    %v1143 = vpop.f32.mrb[0].mxu0
    %1144 = vmatprep.mubr.f32.mxu0 0.0
    %1145 = vmatmul.mubr.f32.gmra.mrb[0].mxu0 %v1046
    %v1146 = vpop.f32.mrb[0].mxu0
    %v1147 = vadd.f32 0.0, %v1146
    %v1148 = vpop.f32.mrb[0].mxu0
    %1149 = vmatprep.mubr.f32.mxu0 0.0
    %1150 = vmatmul.mubr.f32.gmra.mrb[0].mxu0 %v1048
    %v1151 = vpop.f32.mrb[0].mxu0
    %v1152 = vadd.f32 0.0, %v1151
    %v1153 = vpop.f32.mrb[0].mxu0
    %1154 = vmatprep.mubr.f32.mxu0 0.0
    %1155 = vmatmul.mubr.f32.gmra.mrb[0].mxu0 %v1050
    %v1156 = vpop.f32.mrb[0].mxu0
    %v1157 = vadd.f32 0.0, %v1156
    %v1158 = vpop.f32.mrb[0].mxu0
    %1159 = vmatprep.mubr.f32.mxu0 0.0
    %1160 = vmatmul.mubr.f32.gmra.mrb[0].mxu0 %v1052
    %v1161 = vpop.f32.mrb[0].mxu0
    %v1162 = vadd.f32 0.0, %v1161
    %v1163 = vpop.f32.mrb[0].mxu0
    %1164 = vmatprep.mubr.f32.mxu0 0.0
    %1165 = vmatmul.mubr.f32.gmra.mrb[0].mxu0 %v1054
    %v1166 = vpop.f32.mrb[0].mxu0
    %v1167 = vadd.f32 0.0, %v1166
    %v1168 = vpop.f32.mrb[0].mxu0
    %1169 = vmatprep.mubr.f32.mxu0 0.0
    %1170 = vmatmul.mubr.f32.gmra.mrb[0].mxu0 %v1056
    %v1171 = vpop.f32.mrb[0].mxu0
    %v1172 = vadd.f32 0.0, %v1171
    %v1173 = vpop.f32.mrb[0].mxu0
    %1174 = vmatprep.mubr.f32.mxu0 0.0
    %1175 = vmatmul.mubr.f32.gmra.mrb[0].mxu0 %v1058
    %v1176 = vpop.f32.mrb[0].mxu0
    %v1177 = vadd.f32 0.0, %v1176
    %v1178 = vpop.f32.mrb[0].mxu0
    %1179 = vmatprep.mubr.f32.mxu0 0.0
    %1180 = vmatmul.mubr.f32.gmra.mrb[0].mxu0 %v1060
    %v1181 = vpop.f32.mrb[0].mxu0
    %v1182 = vadd.f32 0.0, %v1181
    %v1183 = vpop.f32.mrb[0].mxu0
    %1184 = vmatprep.mubr.f32.mxu0 0.0
    %1185 = vmatmul.mubr.f32.gmra.mrb[0].mxu0 %v1062
    %v1186 = vpop.f32.mrb[0].mxu0
    %v1187 = vadd.f32 0.0, %v1186
    %v1188 = vpop.f32.mrb[0].mxu0
    %1189 = vmatprep.mubr.f32.mxu0 0.0
    %1190 = vmatmul.mubr.f32.gmra.mrb[0].mxu0 %v1065
    %v1191 = vpop.f32.mrb[0].mxu0
    %v1192 = vadd.f32 0.0, %v1191
    %v1193 = vpop.f32.mrb[0].mxu0
    %1194 = vdwg.mxu0
    %v1195 = vadd.f32 %v1001, %v1137
    %v1196 = vadd.f32 %v1002, %v1142
    %v1197 = vadd.f32 %v1003, %v1147
    %v1198 = vadd.f32 %v1004, %v1152
    %v1199 = vadd.f32 %v1005, %v1157
    %v1200 = vadd.f32 %v1006, %v1162
    %v1201 = vadd.f32 %v1007, %v1167
    %v1202 = vadd.f32 %v1008, %v1172
    %v1203 = vadd.f32 %v1009, %v1177
    %v1204 = vadd.f32 %v1010, %v1182
    %v1205 = vadd.f32 %v1011, %v1187
    %v1206 = vadd.f32 %v1012, %v1192
    %vm1207 = vcmask 1041408
    %v1208 = vrot.slane %v71, 6
    %v1209 = vrot.slane %v72, 6
    %v1210 = vsel %vm1207, %v1208, %v1209
    %v1211 = vrot.slane %v73, 6
    %v1212 = vsel %vm1207, %v1209, %v1211
    %v1213 = vrot.slane %v74, 6
    %v1214 = vsel %vm1207, %v1211, %v1213
    %v1215 = vrot.slane %v75, 6
    %v1216 = vsel %vm1207, %v1213, %v1215
    %v1217 = vrot.slane %v76, 6
    %v1218 = vsel %vm1207, %v1215, %v1217
    %v1219 = vrot.slane %v77, 6
    %v1220 = vsel %vm1207, %v1217, %v1219
    %v1221 = vrot.slane %v78, 6
    %v1222 = vsel %vm1207, %v1219, %v1221
    %v1223 = vrot.slane %v79, 6
    %v1224 = vsel %vm1207, %v1221, %v1223
    %v1225 = vrot.slane %v80, 6
    %v1226 = vsel %vm1207, %v1223, %v1225
    %v1227 = vrot.slane %v81, 6
    %v1228 = vsel %vm1207, %v1225, %v1227
    %v1229 = vrot.slane %v82, 6
    %v1230 = vsel %vm1207, %v1227, %v1229
    %v1233 = vsel %vm1207, %v1229, %v1208
    %s1234 = scalar_lea.vmem %s1, 24
    %v1235 = vld [vmem:[%s1234] sm:$0xf]
    %v1236 = vsel %vm125, %v1210, 0
    %v1238 = vsel %vm125, %v1212, 0
    %v1240 = vsel %vm125, %v1214, 0
    %v1242 = vsel %vm125, %v1216, 0
    %v1244 = vsel %vm125, %v1218, 0
    %v1246 = vsel %vm125, %v1220, 0
    %v1248 = vsel %vm125, %v1222, 0
    %v1250 = vsel %vm125, %v1224, 0
    %v1252 = vsel %vm125, %v1226, 0
    %v1254 = vsel %vm125, %v1228, 0
    %v1256 = vsel %vm125, %v1230, 0
    %v1259 = vsel %vm125, %v1233, 0
    %v1262 = vsel %vm151, %v1235, 0
    %1264 = vmatprep.subr.mxu0 0.0
    %1265 = vmatpush1.msra.mxu0 %v1262
    %1266 = vmatprep.subr.mxu0 0.0
    %1267 = vmatpush1.msra.mxu0 0.0
    %1268 = vmatprep.subr.mxu0 0.0
    %1269 = vmatpush1.msra.mxu0 0.0
    %1270 = vmatprep.subr.mxu0 0.0
    %1271 = vmatpush1.msra.mxu0 0.0
    %1272 = vmatprep.subr.mxu0 0.0
    %1273 = vmatpush1.msra.mxu0 0.0
    %1274 = vmatprep.subr.mxu0 0.0
    %1275 = vmatpush1.msra.mxu0 0.0
    %1276 = vmatprep.subr.mxu0 0.0
    %1277 = vmatpush1.msra.mxu0 0.0
    %1278 = vmatprep.subr.mxu0 0.0
    %1279 = vmatpush1.msra.mxu0 0.0
    %1280 = vmatprep.subr.mxu0 0.0
    %1281 = vmatpush1.msra.mxu0 0.0
    %1282 = vmatprep.subr.mxu0 0.0
    %1283 = vmatpush1.msra.mxu0 0.0
    %1284 = vmatprep.subr.mxu0 0.0
    %1285 = vmatpush1.msra.mxu0 0.0
    %1286 = vmatprep.subr.mxu0 0.0
    %1287 = vmatpush1.msra.mxu0 0.0
    %1288 = vmatprep.subr.mxu0 0.0
    %1289 = vmatpush1.msra.mxu0 0.0
    %1290 = vmatprep.subr.mxu0 0.0
    %1291 = vmatpush1.msra.mxu0 0.0
    %1292 = vmatprep.subr.mxu0 0.0
    %1293 = vmatpush1.msra.mxu0 0.0
    %1294 = vmatprep.subr.mxu0 0.0
    %1295 = vmatpush1.msra.mxu0 0.0
    %1296 = vmatprep.subr.mxu0 0.0
    %1297 = vmatpush1.msra.mxu0 0.0
    %1298 = vmatprep.subr.mxu0 0.0
    %1299 = vmatpush1.msra.mxu0 0.0
    %1300 = vmatprep.subr.mxu0 0.0
    %1301 = vmatpush1.msra.mxu0 0.0
    %1302 = vmatprep.subr.mxu0 0.0
    %1303 = vmatpush1.msra.mxu0 0.0
    %1304 = vmatprep.subr.mxu0 0.0
    %1305 = vmatpush1.msra.mxu0 0.0
    %1306 = vmatprep.subr.mxu0 0.0
    %1307 = vmatpush1.msra.mxu0 0.0
    %1308 = vmatprep.subr.mxu0 0.0
    %1309 = vmatpush1.msra.mxu0 0.0
    %1310 = vmatprep.subr.mxu0 0.0
    %1311 = vmatpush1.msra.mxu0 0.0
    %1312 = vmatprep.subr.mxu0 0.0
    %1313 = vmatpush1.msra.mxu0 0.0
    %1314 = vmatprep.subr.mxu0 0.0
    %1315 = vmatpush1.msra.mxu0 0.0
    %1316 = vmatprep.subr.mxu0 0.0
    %1317 = vmatpush1.msra.mxu0 0.0
    %1318 = vmatprep.subr.mxu0 0.0
    %1319 = vmatpush1.msra.mxu0 0.0
    %1320 = vmatprep.subr.mxu0 0.0
    %1321 = vmatpush1.msra.mxu0 0.0
    %1322 = vmatprep.subr.mxu0 0.0
    %1323 = vmatpush1.msra.mxu0 0.0
    %1324 = vmatprep.subr.mxu0 0.0
    %1325 = vmatpush1.msra.mxu0 0.0
    %1326 = vmatprep.subr.mxu0 0.0
    %1327 = vmatpush1.msra.mxu0 0.0
    %1328 = vmatprep.mubr.f32.mxu0 0.0
    %1329 = vmatmul.mubr.f32.gmra.mrb[0].mxu0 %v1236
    %v1330 = vpop.f32.mrb[0].mxu0
    %v1331 = vadd.f32 0.0, %v1330
    %v1332 = vpop.f32.mrb[0].mxu0
    %1333 = vmatprep.mubr.f32.mxu0 0.0
    %1334 = vmatmul.mubr.f32.gmra.mrb[0].mxu0 %v1238
    %v1335 = vpop.f32.mrb[0].mxu0
    %v1336 = vadd.f32 0.0, %v1335
    %v1337 = vpop.f32.mrb[0].mxu0
    %1338 = vmatprep.mubr.f32.mxu0 0.0
    %1339 = vmatmul.mubr.f32.gmra.mrb[0].mxu0 %v1240
    %v1340 = vpop.f32.mrb[0].mxu0
    %v1341 = vadd.f32 0.0, %v1340
    %v1342 = vpop.f32.mrb[0].mxu0
    %1343 = vmatprep.mubr.f32.mxu0 0.0
    %1344 = vmatmul.mubr.f32.gmra.mrb[0].mxu0 %v1242
    %v1345 = vpop.f32.mrb[0].mxu0
    %v1346 = vadd.f32 0.0, %v1345
    %v1347 = vpop.f32.mrb[0].mxu0
    %1348 = vmatprep.mubr.f32.mxu0 0.0
    %1349 = vmatmul.mubr.f32.gmra.mrb[0].mxu0 %v1244
    %v1350 = vpop.f32.mrb[0].mxu0
    %v1351 = vadd.f32 0.0, %v1350
    %v1352 = vpop.f32.mrb[0].mxu0
    %1353 = vmatprep.mubr.f32.mxu0 0.0
    %1354 = vmatmul.mubr.f32.gmra.mrb[0].mxu0 %v1246
    %v1355 = vpop.f32.mrb[0].mxu0
    %v1356 = vadd.f32 0.0, %v1355
    %v1357 = vpop.f32.mrb[0].mxu0
    %1358 = vmatprep.mubr.f32.mxu0 0.0
    %1359 = vmatmul.mubr.f32.gmra.mrb[0].mxu0 %v1248
    %v1360 = vpop.f32.mrb[0].mxu0
    %v1361 = vadd.f32 0.0, %v1360
    %v1362 = vpop.f32.mrb[0].mxu0
    %1363 = vmatprep.mubr.f32.mxu0 0.0
    %1364 = vmatmul.mubr.f32.gmra.mrb[0].mxu0 %v1250
    %v1365 = vpop.f32.mrb[0].mxu0
    %v1366 = vadd.f32 0.0, %v1365
    %v1367 = vpop.f32.mrb[0].mxu0
    %1368 = vmatprep.mubr.f32.mxu0 0.0
    %1369 = vmatmul.mubr.f32.gmra.mrb[0].mxu0 %v1252
    %v1370 = vpop.f32.mrb[0].mxu0
    %v1371 = vadd.f32 0.0, %v1370
    %v1372 = vpop.f32.mrb[0].mxu0
    %1373 = vmatprep.mubr.f32.mxu0 0.0
    %1374 = vmatmul.mubr.f32.gmra.mrb[0].mxu0 %v1254
    %v1375 = vpop.f32.mrb[0].mxu0
    %v1376 = vadd.f32 0.0, %v1375
    %v1377 = vpop.f32.mrb[0].mxu0
    %1378 = vmatprep.mubr.f32.mxu0 0.0
    %1379 = vmatmul.mubr.f32.gmra.mrb[0].mxu0 %v1256
    %v1380 = vpop.f32.mrb[0].mxu0
    %v1381 = vadd.f32 0.0, %v1380
    %v1382 = vpop.f32.mrb[0].mxu0
    %1383 = vmatprep.mubr.f32.mxu0 0.0
    %1384 = vmatmul.mubr.f32.gmra.mrb[0].mxu0 %v1259
    %v1385 = vpop.f32.mrb[0].mxu0
    %v1386 = vadd.f32 0.0, %v1385
    %v1387 = vpop.f32.mrb[0].mxu0
    %1388 = vdwg.mxu0
    %v1389 = vadd.f32 %v1195, %v1331
    %v1390 = vadd.f32 %v1196, %v1336
    %v1391 = vadd.f32 %v1197, %v1341
    %v1392 = vadd.f32 %v1198, %v1346
    %v1393 = vadd.f32 %v1199, %v1351
    %v1394 = vadd.f32 %v1200, %v1356
    %v1395 = vadd.f32 %v1201, %v1361
    %v1396 = vadd.f32 %v1202, %v1366
    %v1397 = vadd.f32 %v1203, %v1371
    %v1398 = vadd.f32 %v1204, %v1376
    %v1399 = vadd.f32 %v1205, %v1381
    %v1400 = vadd.f32 %v1206, %v1386
    %vm1401 = vcmask 1040384
    %v1402 = vrot.slane %v71, 7
    %v1403 = vrot.slane %v72, 7
    %v1404 = vsel %vm1401, %v1402, %v1403
    %v1405 = vrot.slane %v73, 7
    %v1406 = vsel %vm1401, %v1403, %v1405
    %v1407 = vrot.slane %v74, 7
    %v1408 = vsel %vm1401, %v1405, %v1407
    %v1409 = vrot.slane %v75, 7
    %v1410 = vsel %vm1401, %v1407, %v1409
    %v1411 = vrot.slane %v76, 7
    %v1412 = vsel %vm1401, %v1409, %v1411
    %v1413 = vrot.slane %v77, 7
    %v1414 = vsel %vm1401, %v1411, %v1413
    %v1415 = vrot.slane %v78, 7
    %v1416 = vsel %vm1401, %v1413, %v1415
    %v1417 = vrot.slane %v79, 7
    %v1418 = vsel %vm1401, %v1415, %v1417
    %v1419 = vrot.slane %v80, 7
    %v1420 = vsel %vm1401, %v1417, %v1419
    %v1421 = vrot.slane %v81, 7
    %v1422 = vsel %vm1401, %v1419, %v1421
    %v1423 = vrot.slane %v82, 7
    %v1424 = vsel %vm1401, %v1421, %v1423
    %v1427 = vsel %vm1401, %v1423, %v1402
    %s1428 = scalar_lea.vmem %s1, 28
    %v1429 = vld [vmem:[%s1428] sm:$0xf]
    %v1430 = vsel %vm125, %v1404, 0
    %v1432 = vsel %vm125, %v1406, 0
    %v1434 = vsel %vm125, %v1408, 0
    %v1436 = vsel %vm125, %v1410, 0
    %v1438 = vsel %vm125, %v1412, 0
    %v1440 = vsel %vm125, %v1414, 0
    %v1442 = vsel %vm125, %v1416, 0
    %v1444 = vsel %vm125, %v1418, 0
    %v1446 = vsel %vm125, %v1420, 0
    %v1448 = vsel %vm125, %v1422, 0
    %v1450 = vsel %vm125, %v1424, 0
    %v1453 = vsel %vm125, %v1427, 0
    %v1456 = vsel %vm151, %v1429, 0
    %1458 = vmatprep.subr.mxu0 0.0
    %1459 = vmatpush1.msra.mxu0 %v1456
    %1460 = vmatprep.subr.mxu0 0.0
    %1461 = vmatpush1.msra.mxu0 0.0
    %1462 = vmatprep.subr.mxu0 0.0
    %1463 = vmatpush1.msra.mxu0 0.0
    %1464 = vmatprep.subr.mxu0 0.0
    %1465 = vmatpush1.msra.mxu0 0.0
    %1466 = vmatprep.subr.mxu0 0.0
    %1467 = vmatpush1.msra.mxu0 0.0
    %1468 = vmatprep.subr.mxu0 0.0
    %1469 = vmatpush1.msra.mxu0 0.0
    %1470 = vmatprep.subr.mxu0 0.0
    %1471 = vmatpush1.msra.mxu0 0.0
    %1472 = vmatprep.subr.mxu0 0.0
    %1473 = vmatpush1.msra.mxu0 0.0
    %1474 = vmatprep.subr.mxu0 0.0
    %1475 = vmatpush1.msra.mxu0 0.0
    %1476 = vmatprep.subr.mxu0 0.0
    %1477 = vmatpush1.msra.mxu0 0.0
    %1478 = vmatprep.subr.mxu0 0.0
    %1479 = vmatpush1.msra.mxu0 0.0
    %1480 = vmatprep.subr.mxu0 0.0
    %1481 = vmatpush1.msra.mxu0 0.0
    %1482 = vmatprep.subr.mxu0 0.0
    %1483 = vmatpush1.msra.mxu0 0.0
    %1484 = vmatprep.subr.mxu0 0.0
    %1485 = vmatpush1.msra.mxu0 0.0
    %1486 = vmatprep.subr.mxu0 0.0
    %1487 = vmatpush1.msra.mxu0 0.0
    %1488 = vmatprep.subr.mxu0 0.0
    %1489 = vmatpush1.msra.mxu0 0.0
    %1490 = vmatprep.subr.mxu0 0.0
    %1491 = vmatpush1.msra.mxu0 0.0
    %1492 = vmatprep.subr.mxu0 0.0
    %1493 = vmatpush1.msra.mxu0 0.0
    %1494 = vmatprep.subr.mxu0 0.0
    %1495 = vmatpush1.msra.mxu0 0.0
    %1496 = vmatprep.subr.mxu0 0.0
    %1497 = vmatpush1.msra.mxu0 0.0
    %1498 = vmatprep.subr.mxu0 0.0
    %1499 = vmatpush1.msra.mxu0 0.0
    %1500 = vmatprep.subr.mxu0 0.0
    %1501 = vmatpush1.msra.mxu0 0.0
    %1502 = vmatprep.subr.mxu0 0.0
    %1503 = vmatpush1.msra.mxu0 0.0
    %1504 = vmatprep.subr.mxu0 0.0
    %1505 = vmatpush1.msra.mxu0 0.0
    %1506 = vmatprep.subr.mxu0 0.0
    %1507 = vmatpush1.msra.mxu0 0.0
    %1508 = vmatprep.subr.mxu0 0.0
    %1509 = vmatpush1.msra.mxu0 0.0
    %1510 = vmatprep.subr.mxu0 0.0
    %1511 = vmatpush1.msra.mxu0 0.0
    %1512 = vmatprep.subr.mxu0 0.0
    %1513 = vmatpush1.msra.mxu0 0.0
    %1514 = vmatprep.subr.mxu0 0.0
    %1515 = vmatpush1.msra.mxu0 0.0
    %1516 = vmatprep.subr.mxu0 0.0
    %1517 = vmatpush1.msra.mxu0 0.0
    %1518 = vmatprep.subr.mxu0 0.0
    %1519 = vmatpush1.msra.mxu0 0.0
    %1520 = vmatprep.subr.mxu0 0.0
    %1521 = vmatpush1.msra.mxu0 0.0
    %1522 = vmatprep.mubr.f32.mxu0 0.0
    %1523 = vmatmul.mubr.f32.gmra.mrb[0].mxu0 %v1430
    %v1524 = vpop.f32.mrb[0].mxu0
    %v1525 = vadd.f32 0.0, %v1524
    %v1526 = vpop.f32.mrb[0].mxu0
    %1527 = vmatprep.mubr.f32.mxu0 0.0
    %1528 = vmatmul.mubr.f32.gmra.mrb[0].mxu0 %v1432
    %v1529 = vpop.f32.mrb[0].mxu0
    %v1530 = vadd.f32 0.0, %v1529
    %v1531 = vpop.f32.mrb[0].mxu0
    %1532 = vmatprep.mubr.f32.mxu0 0.0
    %1533 = vmatmul.mubr.f32.gmra.mrb[0].mxu0 %v1434
    %v1534 = vpop.f32.mrb[0].mxu0
    %v1535 = vadd.f32 0.0, %v1534
    %v1536 = vpop.f32.mrb[0].mxu0
    %1537 = vmatprep.mubr.f32.mxu0 0.0
    %1538 = vmatmul.mubr.f32.gmra.mrb[0].mxu0 %v1436
    %v1539 = vpop.f32.mrb[0].mxu0
    %v1540 = vadd.f32 0.0, %v1539
    %v1541 = vpop.f32.mrb[0].mxu0
    %1542 = vmatprep.mubr.f32.mxu0 0.0
    %1543 = vmatmul.mubr.f32.gmra.mrb[0].mxu0 %v1438
    %v1544 = vpop.f32.mrb[0].mxu0
    %v1545 = vadd.f32 0.0, %v1544
    %v1546 = vpop.f32.mrb[0].mxu0
    %1547 = vmatprep.mubr.f32.mxu0 0.0
    %1548 = vmatmul.mubr.f32.gmra.mrb[0].mxu0 %v1440
    %v1549 = vpop.f32.mrb[0].mxu0
    %v1550 = vadd.f32 0.0, %v1549
    %v1551 = vpop.f32.mrb[0].mxu0
    %1552 = vmatprep.mubr.f32.mxu0 0.0
    %1553 = vmatmul.mubr.f32.gmra.mrb[0].mxu0 %v1442
    %v1554 = vpop.f32.mrb[0].mxu0
    %v1555 = vadd.f32 0.0, %v1554
    %v1556 = vpop.f32.mrb[0].mxu0
    %1557 = vmatprep.mubr.f32.mxu0 0.0
    %1558 = vmatmul.mubr.f32.gmra.mrb[0].mxu0 %v1444
    %v1559 = vpop.f32.mrb[0].mxu0
    %v1560 = vadd.f32 0.0, %v1559
    %v1561 = vpop.f32.mrb[0].mxu0
    %1562 = vmatprep.mubr.f32.mxu0 0.0
    %1563 = vmatmul.mubr.f32.gmra.mrb[0].mxu0 %v1446
    %v1564 = vpop.f32.mrb[0].mxu0
    %v1565 = vadd.f32 0.0, %v1564
    %v1566 = vpop.f32.mrb[0].mxu0
    %1567 = vmatprep.mubr.f32.mxu0 0.0
    %1568 = vmatmul.mubr.f32.gmra.mrb[0].mxu0 %v1448
    %v1569 = vpop.f32.mrb[0].mxu0
    %v1570 = vadd.f32 0.0, %v1569
    %v1571 = vpop.f32.mrb[0].mxu0
    %1572 = vmatprep.mubr.f32.mxu0 0.0
    %1573 = vmatmul.mubr.f32.gmra.mrb[0].mxu0 %v1450
    %v1574 = vpop.f32.mrb[0].mxu0
    %v1575 = vadd.f32 0.0, %v1574
    %v1576 = vpop.f32.mrb[0].mxu0
    %1577 = vmatprep.mubr.f32.mxu0 0.0
    %1578 = vmatmul.mubr.f32.gmra.mrb[0].mxu0 %v1453
    %v1579 = vpop.f32.mrb[0].mxu0
    %v1580 = vadd.f32 0.0, %v1579
    %v1581 = vpop.f32.mrb[0].mxu0
    %1582 = vdwg.mxu0
    %v1583 = vadd.f32 %v1389, %v1525
    %v1584 = vadd.f32 %v1390, %v1530
    %v1585 = vadd.f32 %v1391, %v1535
    %v1586 = vadd.f32 %v1392, %v1540
    %v1587 = vadd.f32 %v1393, %v1545
    %v1588 = vadd.f32 %v1394, %v1550
    %v1589 = vadd.f32 %v1395, %v1555
    %v1590 = vadd.f32 %v1396, %v1560
    %v1591 = vadd.f32 %v1397, %v1565
    %v1592 = vadd.f32 %v1398, %v1570
    %v1593 = vadd.f32 %v1399, %v1575
    %v1594 = vadd.f32 %v1400, %v1580
    %v1595 = vld [vmem:[%s4] sm:$0xff]
    %v1596 = vld [vmem:[%s4 + $0x8] sm:$0xff]
    %v1597 = vld [vmem:[%s4 + $0x10] sm:$0xff]
    %v1598 = vld [vmem:[%s4 + $0x18] sm:$0xff]
    %v1599 = vld [vmem:[%s4 + $0x20] sm:$0xff]
    %v1600 = vld [vmem:[%s4 + $0x28] sm:$0xff]
    %v1601 = vld [vmem:[%s4 + $0x30] sm:$0xff]
    %v1602 = vld [vmem:[%s4 + $0x38] sm:$0xff]
    %v1603 = vld [vmem:[%s4 + $0x40] sm:$0xff]
    %v1604 = vld [vmem:[%s4 + $0x48] sm:$0xff]
    %v1605 = vld [vmem:[%s4 + $0x50] sm:$0xff]
    %v1606 = vld [vmem:[%s4 + $0x58] sm:$0xff]
    %1608 = vset.pattern.permute.xlu0 0
    %1609 = vperm.xlu0 %1608, %v1595
    %v1610 = vpop.permute.xlu0 %1609
    %1613 = vset.pattern.permute.xlu0 0
    %1614 = vperm.xlu0 %1613, %v1596
    %v1615 = vpop.permute.xlu0 %1614
    %1618 = vset.pattern.permute.xlu0 0
    %1619 = vperm.xlu0 %1618, %v1597
    %v1620 = vpop.permute.xlu0 %1619
    %1623 = vset.pattern.permute.xlu0 0
    %1624 = vperm.xlu0 %1623, %v1598
    %v1625 = vpop.permute.xlu0 %1624
    %1628 = vset.pattern.permute.xlu0 0
    %1629 = vperm.xlu0 %1628, %v1599
    %v1630 = vpop.permute.xlu0 %1629
    %1633 = vset.pattern.permute.xlu0 0
    %1634 = vperm.xlu0 %1633, %v1600
    %v1635 = vpop.permute.xlu0 %1634
    %1638 = vset.pattern.permute.xlu0 0
    %1639 = vperm.xlu0 %1638, %v1601
    %v1640 = vpop.permute.xlu0 %1639
    %1643 = vset.pattern.permute.xlu0 0
    %1644 = vperm.xlu0 %1643, %v1602
    %v1645 = vpop.permute.xlu0 %1644
    %1648 = vset.pattern.permute.xlu0 0
    %1649 = vperm.xlu0 %1648, %v1603
    %v1650 = vpop.permute.xlu0 %1649
    %1653 = vset.pattern.permute.xlu0 0
    %1654 = vperm.xlu0 %1653, %v1604
    %v1655 = vpop.permute.xlu0 %1654
    %1658 = vset.pattern.permute.xlu0 0
    %1659 = vperm.xlu0 %1658, %v1605
    %v1660 = vpop.permute.xlu0 %1659
    %1663 = vset.pattern.permute.xlu0 0
    %1664 = vperm.xlu0 %1663, %v1606
    %v1665 = vpop.permute.xlu0 %1664
    %v1667 = vmul.f32 %v1583, %v1610
    %v1668 = vmul.f32 %v1584, %v1615
    %v1669 = vmul.f32 %v1585, %v1620
    %v1670 = vmul.f32 %v1586, %v1625
    %v1671 = vmul.f32 %v1587, %v1630
    %v1672 = vmul.f32 %v1588, %v1635
    %v1673 = vmul.f32 %v1589, %v1640
    %v1674 = vmul.f32 %v1590, %v1645
    %v1675 = vmul.f32 %v1591, %v1650
    %v1676 = vmul.f32 %v1592, %v1655
    %v1677 = vmul.f32 %v1593, %v1660
    %v1678 = vmul.f32 %v1594, %v1665
    %vm1679 = vcmask 261120
    %v1680 = vsel %vm1679, %v1667, 0.0
    %v1681 = vsel %vm1679, %v1668, 0.0
    %v1682 = vadd.f32 %v1680, %v1681
    %v1683 = vsel %vm1679, %v1669, 0.0
    %v1684 = vadd.f32 %v1682, %v1683
    %v1685 = vsel %vm1679, %v1670, 0.0
    %v1686 = vadd.f32 %v1684, %v1685
    %v1687 = vsel %vm1679, %v1671, 0.0
    %v1688 = vadd.f32 %v1686, %v1687
    %v1689 = vsel %vm1679, %v1672, 0.0
    %v1690 = vadd.f32 %v1688, %v1689
    %v1691 = vsel %vm1679, %v1673, 0.0
    %v1692 = vadd.f32 %v1690, %v1691
    %v1693 = vsel %vm1679, %v1674, 0.0
    %v1694 = vadd.f32 %v1692, %v1693
    %v1695 = vsel %vm1679, %v1675, 0.0
    %v1696 = vadd.f32 %v1694, %v1695
    %v1697 = vsel %vm1679, %v1676, 0.0
    %v1698 = vadd.f32 %v1696, %v1697
    %v1699 = vsel %vm1679, %v1677, 0.0
    %v1700 = vadd.f32 %v1698, %v1699
    %v1701 = vsel %vm1679, %v1678, 0.0
    %v1702 = vadd.f32 %v1700, %v1701
    %v1703 = vrot.slane %v1702, 4
    %v1704 = vadd.f32 %v1702, %v1703
    %v1705 = vrot.slane %v1704, 2
    %v1706 = vadd.f32 %v1704, %v1705
    %v1707 = vrot.slane %v1706, 1
    %v1708 = vadd.f32 %v1706, %v1707
    %v1709 = vmul.f32 %v1708, 0.015151516
    %v1710 = vmul.f32 %v1667, %v1583
    %v1711 = vmul.f32 %v1668, %v1584
    %v1712 = vmul.f32 %v1669, %v1585
    %v1713 = vmul.f32 %v1670, %v1586
    %v1714 = vmul.f32 %v1671, %v1587
    %v1715 = vmul.f32 %v1672, %v1588
    %v1716 = vmul.f32 %v1673, %v1589
    %v1717 = vmul.f32 %v1674, %v1590
    %v1718 = vmul.f32 %v1675, %v1591
    %v1719 = vmul.f32 %v1676, %v1592
    %v1720 = vmul.f32 %v1677, %v1593
    %v1721 = vmul.f32 %v1678, %v1594
    %v1722 = vsel %vm1679, %v1710, 0.0
    %v1723 = vsel %vm1679, %v1711, 0.0
    %v1724 = vadd.f32 %v1722, %v1723
    %v1725 = vsel %vm1679, %v1712, 0.0
    %v1726 = vadd.f32 %v1724, %v1725
    %v1727 = vsel %vm1679, %v1713, 0.0
    %v1728 = vadd.f32 %v1726, %v1727
    %v1729 = vsel %vm1679, %v1714, 0.0
    %v1730 = vadd.f32 %v1728, %v1729
    %v1731 = vsel %vm1679, %v1715, 0.0
    %v1732 = vadd.f32 %v1730, %v1731
    %v1733 = vsel %vm1679, %v1716, 0.0
    %v1734 = vadd.f32 %v1732, %v1733
    %v1735 = vsel %vm1679, %v1717, 0.0
    %v1736 = vadd.f32 %v1734, %v1735
    %v1737 = vsel %vm1679, %v1718, 0.0
    %v1738 = vadd.f32 %v1736, %v1737
    %v1739 = vsel %vm1679, %v1719, 0.0
    %v1740 = vadd.f32 %v1738, %v1739
    %v1741 = vsel %vm1679, %v1720, 0.0
    %v1742 = vadd.f32 %v1740, %v1741
    %v1743 = vsel %vm1679, %v1721, 0.0
    %v1744 = vadd.f32 %v1742, %v1743
    %v1745 = vrot.slane %v1744, 4
    %v1746 = vadd.f32 %v1744, %v1745
    %v1747 = vrot.slane %v1746, 2
    %v1748 = vadd.f32 %v1746, %v1747
    %v1749 = vrot.slane %v1748, 1
    %v1750 = vadd.f32 %v1748, %v1749
    %v1751 = vmul.f32 %v1750, 0.015151516
    %v1752 = vmul.f32 %v1709, %v1709
    %v1753 = vsub.f32 %v1751, %v1752
    %v1754 = vld [vmem:[%s2] sm:$0x1]
    %v1755 = vadd.f32 %v1753, 1e-05
    %v1756 = vrsqrt.pop %v1755
    %v1757 = vmul.f32 %v1754, %v1756
    %v1758 = vld [vmem:[%s3] sm:$0x1]
    %v1759 = vmul.f32 %v1709, %v1757
    %v1760 = vsub.f32 %v1758, %v1759
    %v1762 = vlaneseq
    %v1763 = vshrl.u32 %v1762, 7
    %v1764 = vsub.s32 0, %v1763
    %v1765 = vrot.slane %v1757, %v1764
    %v1767 = vmul.f32 %v1583, %v1765
    %v1768 = vmul.f32 %v1584, %v1765
    %v1769 = vmul.f32 %v1585, %v1765
    %v1770 = vmul.f32 %v1586, %v1765
    %v1771 = vmul.f32 %v1587, %v1765
    %v1772 = vmul.f32 %v1588, %v1765
    %v1773 = vmul.f32 %v1589, %v1765
    %v1774 = vmul.f32 %v1590, %v1765
    %v1775 = vmul.f32 %v1591, %v1765
    %v1776 = vmul.f32 %v1592, %v1765
    %v1777 = vmul.f32 %v1593, %v1765
    %v1778 = vmul.f32 %v1594, %v1765
    %v1780 = vlaneseq
    %v1781 = vshrl.u32 %v1780, 7
    %v1782 = vsub.s32 0, %v1781
    %v1783 = vrot.slane %v1760, %v1782
    %v1785 = vadd.f32 %v1767, %v1783
    %v1786 = vadd.f32 %v1768, %v1783
    %v1787 = vadd.f32 %v1769, %v1783
    %v1788 = vadd.f32 %v1770, %v1783
    %v1789 = vadd.f32 %v1771, %v1783
    %v1790 = vadd.f32 %v1772, %v1783
    %v1791 = vadd.f32 %v1773, %v1783
    %v1792 = vadd.f32 %v1774, %v1783
    %v1793 = vadd.f32 %v1775, %v1783
    %v1794 = vadd.f32 %v1776, %v1783
    %v1795 = vadd.f32 %v1777, %v1783
    %v1796 = vadd.f32 %v1778, %v1783
    %v1797 = vmax.f32 %v1785, 0.0
    %v1798 = vmax.f32 %v1786, 0.0
    %v1799 = vmax.f32 %v1787, 0.0
    %v1800 = vmax.f32 %v1788, 0.0
    %v1801 = vmax.f32 %v1789, 0.0
    %v1802 = vmax.f32 %v1790, 0.0
    %v1803 = vmax.f32 %v1791, 0.0
    %v1804 = vmax.f32 %v1792, 0.0
    %v1805 = vmax.f32 %v1793, 0.0
    %v1806 = vmax.f32 %v1794, 0.0
    %v1807 = vmax.f32 %v1795, 0.0
    %v1808 = vmax.f32 %v1796, 0.0
    %v1809 = vmul.f32 %v1797, %v1610
    %v1810 = vmul.f32 %v1798, %v1615
    %v1811 = vmul.f32 %v1799, %v1620
    %v1812 = vmul.f32 %v1800, %v1625
    %v1813 = vmul.f32 %v1801, %v1630
    %v1814 = vmul.f32 %v1802, %v1635
    %v1815 = vmul.f32 %v1803, %v1640
    %v1816 = vmul.f32 %v1804, %v1645
    %v1817 = vmul.f32 %v1805, %v1650
    %v1818 = vmul.f32 %v1806, %v1655
    %v1819 = vmul.f32 %v1807, %v1660
    %v1820 = vmul.f32 %v1808, %v1665
    %v1833 = vrot.slane %v1809, 1
    %v1834 = vrot.slane %v1810, 1
    %v1835 = vsel %vm96, %v1833, %v1834
    %v1836 = vrot.slane %v1811, 1
    %v1837 = vsel %vm96, %v1834, %v1836
    %v1838 = vrot.slane %v1812, 1
    %v1839 = vsel %vm96, %v1836, %v1838
    %v1840 = vrot.slane %v1813, 1
    %v1841 = vsel %vm96, %v1838, %v1840
    %v1842 = vrot.slane %v1814, 1
    %v1843 = vsel %vm96, %v1840, %v1842
    %v1844 = vrot.slane %v1815, 1
    %v1845 = vsel %vm96, %v1842, %v1844
    %v1846 = vrot.slane %v1816, 1
    %v1847 = vsel %vm96, %v1844, %v1846
    %v1848 = vrot.slane %v1817, 1
    %v1849 = vsel %vm96, %v1846, %v1848
    %v1850 = vrot.slane %v1818, 1
    %v1851 = vsel %vm96, %v1848, %v1850
    %v1852 = vrot.slane %v1819, 1
    %v1853 = vsel %vm96, %v1850, %v1852
    %v1854 = vrot.slane %v1820, 1
    %v1855 = vsel %vm96, %v1852, %v1854
    %v1869 = vsel %vm96, %v1854, %v1833
    %v1870 = vmax.f32 %v1809, %v1835
    %v1871 = vmax.f32 %v1810, %v1837
    %v1872 = vmax.f32 %v1811, %v1839
    %v1873 = vmax.f32 %v1812, %v1841
    %v1874 = vmax.f32 %v1813, %v1843
    %v1875 = vmax.f32 %v1814, %v1845
    %v1876 = vmax.f32 %v1815, %v1847
    %v1877 = vmax.f32 %v1816, %v1849
    %v1878 = vmax.f32 %v1817, %v1851
    %v1879 = vmax.f32 %v1818, %v1853
    %v1880 = vmax.f32 %v1819, %v1855
    %v1881 = vmax.f32 %v1820, %v1869
    %v1882 = vld [vmem:[%s5] sm:$0xff]
    %v1883 = vld [vmem:[%s5 + $0x8] sm:$0xff]
    %v1884 = vld [vmem:[%s5 + $0x10] sm:$0xff]
    %v1885 = vld [vmem:[%s5 + $0x18] sm:$0xff]
    %v1886 = vld [vmem:[%s5 + $0x20] sm:$0xff]
    %v1887 = vld [vmem:[%s5 + $0x28] sm:$0xff]
    %v1888 = vld [vmem:[%s5 + $0x30] sm:$0xff]
    %v1889 = vld [vmem:[%s5 + $0x38] sm:$0xff]
    %vm1890 = vcmask 785408
    %v1892 = vsel %vm1890, %v1882, 0
    %v1895 = vsel %vm1890, %v1883, 0
    %v1898 = vsel %vm1890, %v1884, 0
    %v1901 = vsel %vm1890, %v1885, 0
    %v1904 = vsel %vm1890, %v1886, 0
    %v1907 = vsel %vm1890, %v1887, 0
    %v1910 = vsel %vm1890, %v1888, 0
    %v1913 = vsel %vm1890, %v1889, 0
    %1915 = vmatprep.subr.mxu0 0.0
    %1916 = vmatpush1.msra.mxu0 %v1870
    %1917 = vmatprep.subr.mxu0 0.0
    %1918 = vmatpush1.msra.mxu0 %v1871
    %1919 = vmatprep.subr.mxu0 0.0
    %1920 = vmatpush1.msra.mxu0 %v1872
    %1921 = vmatprep.subr.mxu0 0.0
    %1922 = vmatpush1.msra.mxu0 %v1873
    %1923 = vmatprep.subr.mxu0 0.0
    %1924 = vmatpush1.msra.mxu0 %v1874
    %1925 = vmatprep.subr.mxu0 0.0
    %1926 = vmatpush1.msra.mxu0 %v1875
    %1927 = vmatprep.subr.mxu0 0.0
    %1928 = vmatpush1.msra.mxu0 %v1876
    %1929 = vmatprep.subr.mxu0 0.0
    %1930 = vmatpush1.msra.mxu0 %v1877
    %1931 = vmatprep.subr.mxu0 0.0
    %1932 = vmatpush1.msra.mxu0 %v1878
    %1933 = vmatprep.subr.mxu0 0.0
    %1934 = vmatpush1.msra.mxu0 %v1879
    %1935 = vmatprep.subr.mxu0 0.0
    %1936 = vmatpush1.msra.mxu0 %v1880
    %1937 = vmatprep.subr.mxu0 0.0
    %1938 = vmatpush1.msra.mxu0 %v1881
    %1939 = vmatprep.subr.mxu0 0.0
    %1940 = vmatpush1.msra.mxu0 0.0
    %1941 = vmatprep.subr.mxu0 0.0
    %1942 = vmatpush1.msra.mxu0 0.0
    %1943 = vmatprep.subr.mxu0 0.0
    %1944 = vmatpush1.msra.mxu0 0.0
    %1945 = vmatprep.subr.mxu0 0.0
    %1946 = vmatpush1.msra.mxu0 0.0
    %1947 = vmatprep.subr.mxu0 0.0
    %1948 = vmatpush1.msra.mxu0 0.0
    %1949 = vmatprep.subr.mxu0 0.0
    %1950 = vmatpush1.msra.mxu0 0.0
    %1951 = vmatprep.subr.mxu0 0.0
    %1952 = vmatpush1.msra.mxu0 0.0
    %1953 = vmatprep.subr.mxu0 0.0
    %1954 = vmatpush1.msra.mxu0 0.0
    %1955 = vmatprep.subr.mxu0 0.0
    %1956 = vmatpush1.msra.mxu0 0.0
    %1957 = vmatprep.subr.mxu0 0.0
    %1958 = vmatpush1.msra.mxu0 0.0
    %1959 = vmatprep.subr.mxu0 0.0
    %1960 = vmatpush1.msra.mxu0 0.0
    %1961 = vmatprep.subr.mxu0 0.0
    %1962 = vmatpush1.msra.mxu0 0.0
    %1963 = vmatprep.subr.mxu0 0.0
    %1964 = vmatpush1.msra.mxu0 0.0
    %1965 = vmatprep.subr.mxu0 0.0
    %1966 = vmatpush1.msra.mxu0 0.0
    %1967 = vmatprep.subr.mxu0 0.0
    %1968 = vmatpush1.msra.mxu0 0.0
    %1969 = vmatprep.subr.mxu0 0.0
    %1970 = vmatpush1.msra.mxu0 0.0
    %1971 = vmatprep.subr.mxu0 0.0
    %1972 = vmatpush1.msra.mxu0 0.0
    %1973 = vmatprep.subr.mxu0 0.0
    %1974 = vmatpush1.msra.mxu0 0.0
    %1975 = vmatprep.subr.mxu0 0.0
    %1976 = vmatpush1.msra.mxu0 0.0
    %1977 = vmatprep.subr.mxu0 0.0
    %1978 = vmatpush1.msra.mxu0 0.0
    %1979 = vmatprep.mubr.f32.mxu0 0.0
    %1980 = vmatmul.mubr.f32.gmra.mrb[0].mxu0 %v1892
    %v1981 = vpop.f32.mrb[0].mxu0
    %v1982 = vadd.f32 0.0, %v1981
    %v1983 = vpop.f32.mrb[0].mxu0
    %1984 = vmatprep.mubr.f32.mxu0 0.0
    %1985 = vmatmul.mubr.f32.gmra.mrb[0].mxu0 %v1895
    %v1986 = vpop.f32.mrb[0].mxu0
    %v1987 = vadd.f32 0.0, %v1986
    %v1988 = vpop.f32.mrb[0].mxu0
    %1989 = vmatprep.mubr.f32.mxu0 0.0
    %1990 = vmatmul.mubr.f32.gmra.mrb[0].mxu0 %v1898
    %v1991 = vpop.f32.mrb[0].mxu0
    %v1992 = vadd.f32 0.0, %v1991
    %v1993 = vpop.f32.mrb[0].mxu0
    %1994 = vmatprep.mubr.f32.mxu0 0.0
    %1995 = vmatmul.mubr.f32.gmra.mrb[0].mxu0 %v1901
    %v1996 = vpop.f32.mrb[0].mxu0
    %v1997 = vadd.f32 0.0, %v1996
    %v1998 = vpop.f32.mrb[0].mxu0
    %1999 = vmatprep.mubr.f32.mxu0 0.0
    %2000 = vmatmul.mubr.f32.gmra.mrb[0].mxu0 %v1904
    %v2001 = vpop.f32.mrb[0].mxu0
    %v2002 = vadd.f32 0.0, %v2001
    %v2003 = vpop.f32.mrb[0].mxu0
    %2004 = vmatprep.mubr.f32.mxu0 0.0
    %2005 = vmatmul.mubr.f32.gmra.mrb[0].mxu0 %v1907
    %v2006 = vpop.f32.mrb[0].mxu0
    %v2007 = vadd.f32 0.0, %v2006
    %v2008 = vpop.f32.mrb[0].mxu0
    %2009 = vmatprep.mubr.f32.mxu0 0.0
    %2010 = vmatmul.mubr.f32.gmra.mrb[0].mxu0 %v1910
    %v2011 = vpop.f32.mrb[0].mxu0
    %v2012 = vadd.f32 0.0, %v2011
    %v2013 = vpop.f32.mrb[0].mxu0
    %2014 = vmatprep.mubr.f32.mxu0 0.0
    %2015 = vmatmul.mubr.f32.gmra.mrb[0].mxu0 %v1913
    %v2016 = vpop.f32.mrb[0].mxu0
    %v2017 = vadd.f32 0.0, %v2016
    %v2018 = vpop.f32.mrb[0].mxu0
    %2019 = vdwg.mxu0
    %v2020 = vld [vmem:[%s6] sm:$0xff]
    %v2021 = vld [vmem:[%s6 + $0x8] sm:$0xff]
    %v2022 = vld [vmem:[%s6 + $0x10] sm:$0xff]
    %v2023 = vld [vmem:[%s6 + $0x18] sm:$0xff]
    %v2032 = vrot.slane %v1982, 1
    %v2033 = vrot.slane %v1987, 1
    %v2034 = vsel %vm96, %v2032, %v2033
    %v2035 = vrot.slane %v1992, 1
    %v2036 = vsel %vm96, %v2033, %v2035
    %v2037 = vrot.slane %v1997, 1
    %v2038 = vsel %vm96, %v2035, %v2037
    %v2039 = vrot.slane %v2002, 1
    %v2040 = vsel %vm96, %v2037, %v2039
    %v2041 = vrot.slane %v2007, 1
    %v2042 = vsel %vm96, %v2039, %v2041
    %v2043 = vrot.slane %v2012, 1
    %v2044 = vsel %vm96, %v2041, %v2043
    %v2045 = vrot.slane %v2017, 1
    %v2046 = vsel %vm96, %v2043, %v2045
    %v2049 = vsel %vm96, %v2045, %v2032
    %s2050 = scalar_lea.vmem %s6, 32
    %v2051 = vld [vmem:[%s2050] sm:$0xff]
    %v2052 = vld [vmem:[%s2050 + $0x8] sm:$0xff]
    %v2053 = vld [vmem:[%s2050 + $0x10] sm:$0xff]
    %v2054 = vld [vmem:[%s2050 + $0x18] sm:$0xff]
    %v2055 = vsel %vm1679, %v2034, 0
    %v2057 = vsel %vm1679, %v2036, 0
    %v2059 = vsel %vm1679, %v2038, 0
    %v2061 = vsel %vm1679, %v2040, 0
    %v2063 = vsel %vm1679, %v2042, 0
    %v2065 = vsel %vm1679, %v2044, 0
    %v2067 = vsel %vm1679, %v2046, 0
    %v2070 = vsel %vm1679, %v2049, 0
    %2072 = vmatprep.subr.mxu0 0.0
    %2073 = vmatpush1.msra.mxu0 %v2051
    %2074 = vmatprep.subr.mxu0 0.0
    %2075 = vmatpush1.msra.mxu0 %v2052
    %2076 = vmatprep.subr.mxu0 0.0
    %2077 = vmatpush1.msra.mxu0 %v2053
    %2078 = vmatprep.subr.mxu0 0.0
    %2079 = vmatpush1.msra.mxu0 %v2054
    %2080 = vmatprep.subr.mxu0 0.0
    %2081 = vmatpush1.msra.mxu0 0.0
    %2082 = vmatprep.subr.mxu0 0.0
    %2083 = vmatpush1.msra.mxu0 0.0
    %2084 = vmatprep.subr.mxu0 0.0
    %2085 = vmatpush1.msra.mxu0 0.0
    %2086 = vmatprep.subr.mxu0 0.0
    %2087 = vmatpush1.msra.mxu0 0.0
    %2088 = vmatprep.subr.mxu0 0.0
    %2089 = vmatpush1.msra.mxu0 0.0
    %2090 = vmatprep.subr.mxu0 0.0
    %2091 = vmatpush1.msra.mxu0 0.0
    %2092 = vmatprep.subr.mxu0 0.0
    %2093 = vmatpush1.msra.mxu0 0.0
    %2094 = vmatprep.subr.mxu0 0.0
    %2095 = vmatpush1.msra.mxu0 0.0
    %2096 = vmatprep.subr.mxu0 0.0
    %2097 = vmatpush1.msra.mxu0 0.0
    %2098 = vmatprep.subr.mxu0 0.0
    %2099 = vmatpush1.msra.mxu0 0.0
    %2100 = vmatprep.subr.mxu0 0.0
    %2101 = vmatpush1.msra.mxu0 0.0
    %2102 = vmatprep.subr.mxu0 0.0
    %2103 = vmatpush1.msra.mxu0 0.0
    %2104 = vmatprep.subr.mxu0 0.0
    %2105 = vmatpush1.msra.mxu0 0.0
    %2106 = vmatprep.subr.mxu0 0.0
    %2107 = vmatpush1.msra.mxu0 0.0
    %2108 = vmatprep.subr.mxu0 0.0
    %2109 = vmatpush1.msra.mxu0 0.0
    %2110 = vmatprep.subr.mxu0 0.0
    %2111 = vmatpush1.msra.mxu0 0.0
    %2112 = vmatprep.subr.mxu0 0.0
    %2113 = vmatpush1.msra.mxu0 0.0
    %2114 = vmatprep.subr.mxu0 0.0
    %2115 = vmatpush1.msra.mxu0 0.0
    %2116 = vmatprep.subr.mxu0 0.0
    %2117 = vmatpush1.msra.mxu0 0.0
    %2118 = vmatprep.subr.mxu0 0.0
    %2119 = vmatpush1.msra.mxu0 0.0
    %2120 = vmatprep.subr.mxu0 0.0
    %2121 = vmatpush1.msra.mxu0 0.0
    %2122 = vmatprep.subr.mxu0 0.0
    %2123 = vmatpush1.msra.mxu0 0.0
    %2124 = vmatprep.subr.mxu0 0.0
    %2125 = vmatpush1.msra.mxu0 0.0
    %2126 = vmatprep.subr.mxu0 0.0
    %2127 = vmatpush1.msra.mxu0 0.0
    %2128 = vmatprep.subr.mxu0 0.0
    %2129 = vmatpush1.msra.mxu0 0.0
    %2130 = vmatprep.subr.mxu0 0.0
    %2131 = vmatpush1.msra.mxu0 0.0
    %2132 = vmatprep.subr.mxu0 0.0
    %2133 = vmatpush1.msra.mxu0 0.0
    %2134 = vmatprep.subr.mxu0 0.0
    %2135 = vmatpush1.msra.mxu0 0.0
    %2136 = vmatprep.mubr.f32.mxu0 0.0
    %2137 = vmatmul.mubr.f32.gmra.mrb[0].mxu0 %v2055
    %v2138 = vpop.f32.mrb[0].mxu0
    %v2139 = vadd.f32 0.0, %v2138
    %v2140 = vpop.f32.mrb[0].mxu0
    %2141 = vmatprep.mubr.f32.mxu0 0.0
    %2142 = vmatmul.mubr.f32.gmra.mrb[0].mxu0 %v2057
    %v2143 = vpop.f32.mrb[0].mxu0
    %v2144 = vadd.f32 0.0, %v2143
    %v2145 = vpop.f32.mrb[0].mxu0
    %2146 = vmatprep.mubr.f32.mxu0 0.0
    %2147 = vmatmul.mubr.f32.gmra.mrb[0].mxu0 %v2059
    %v2148 = vpop.f32.mrb[0].mxu0
    %v2149 = vadd.f32 0.0, %v2148
    %v2150 = vpop.f32.mrb[0].mxu0
    %2151 = vmatprep.mubr.f32.mxu0 0.0
    %2152 = vmatmul.mubr.f32.gmra.mrb[0].mxu0 %v2061
    %v2153 = vpop.f32.mrb[0].mxu0
    %v2154 = vadd.f32 0.0, %v2153
    %v2155 = vpop.f32.mrb[0].mxu0
    %2156 = vmatprep.mubr.f32.mxu0 0.0
    %2157 = vmatmul.mubr.f32.gmra.mrb[0].mxu0 %v2063
    %v2158 = vpop.f32.mrb[0].mxu0
    %v2159 = vadd.f32 0.0, %v2158
    %v2160 = vpop.f32.mrb[0].mxu0
    %2161 = vmatprep.mubr.f32.mxu0 0.0
    %2162 = vmatmul.mubr.f32.gmra.mrb[0].mxu0 %v2065
    %v2163 = vpop.f32.mrb[0].mxu0
    %v2164 = vadd.f32 0.0, %v2163
    %v2165 = vpop.f32.mrb[0].mxu0
    %2166 = vmatprep.mubr.f32.mxu0 0.0
    %2167 = vmatmul.mubr.f32.gmra.mrb[0].mxu0 %v2067
    %v2168 = vpop.f32.mrb[0].mxu0
    %v2169 = vadd.f32 0.0, %v2168
    %v2170 = vpop.f32.mrb[0].mxu0
    %2171 = vmatprep.mubr.f32.mxu0 0.0
    %2172 = vmatmul.mubr.f32.gmra.mrb[0].mxu0 %v2070
    %v2173 = vpop.f32.mrb[0].mxu0
    %v2174 = vadd.f32 0.0, %v2173
    %v2175 = vpop.f32.mrb[0].mxu0
    %2176 = vdwg.mxu0
    %v2177 = vsel %vm1679, %v1982, 0
    %v2179 = vsel %vm1679, %v1987, 0
    %v2181 = vsel %vm1679, %v1992, 0
    %v2183 = vsel %vm1679, %v1997, 0
    %v2185 = vsel %vm1679, %v2002, 0
    %v2187 = vsel %vm1679, %v2007, 0
    %v2189 = vsel %vm1679, %v2012, 0
    %v2191 = vsel %vm1679, %v2017, 0
    %2193 = vmatprep.subr.mxu0 0.0
    %2194 = vmatpush1.msra.mxu0 %v2020
    %2195 = vmatprep.subr.mxu0 0.0
    %2196 = vmatpush1.msra.mxu0 %v2021
    %2197 = vmatprep.subr.mxu0 0.0
    %2198 = vmatpush1.msra.mxu0 %v2022
    %2199 = vmatprep.subr.mxu0 0.0
    %2200 = vmatpush1.msra.mxu0 %v2023
    %2201 = vmatprep.subr.mxu0 0.0
    %2202 = vmatpush1.msra.mxu0 0.0
    %2203 = vmatprep.subr.mxu0 0.0
    %2204 = vmatpush1.msra.mxu0 0.0
    %2205 = vmatprep.subr.mxu0 0.0
    %2206 = vmatpush1.msra.mxu0 0.0
    %2207 = vmatprep.subr.mxu0 0.0
    %2208 = vmatpush1.msra.mxu0 0.0
    %2209 = vmatprep.subr.mxu0 0.0
    %2210 = vmatpush1.msra.mxu0 0.0
    %2211 = vmatprep.subr.mxu0 0.0
    %2212 = vmatpush1.msra.mxu0 0.0
    %2213 = vmatprep.subr.mxu0 0.0
    %2214 = vmatpush1.msra.mxu0 0.0
    %2215 = vmatprep.subr.mxu0 0.0
    %2216 = vmatpush1.msra.mxu0 0.0
    %2217 = vmatprep.subr.mxu0 0.0
    %2218 = vmatpush1.msra.mxu0 0.0
    %2219 = vmatprep.subr.mxu0 0.0
    %2220 = vmatpush1.msra.mxu0 0.0
    %2221 = vmatprep.subr.mxu0 0.0
    %2222 = vmatpush1.msra.mxu0 0.0
    %2223 = vmatprep.subr.mxu0 0.0
    %2224 = vmatpush1.msra.mxu0 0.0
    %2225 = vmatprep.subr.mxu0 0.0
    %2226 = vmatpush1.msra.mxu0 0.0
    %2227 = vmatprep.subr.mxu0 0.0
    %2228 = vmatpush1.msra.mxu0 0.0
    %2229 = vmatprep.subr.mxu0 0.0
    %2230 = vmatpush1.msra.mxu0 0.0
    %2231 = vmatprep.subr.mxu0 0.0
    %2232 = vmatpush1.msra.mxu0 0.0
    %2233 = vmatprep.subr.mxu0 0.0
    %2234 = vmatpush1.msra.mxu0 0.0
    %2235 = vmatprep.subr.mxu0 0.0
    %2236 = vmatpush1.msra.mxu0 0.0
    %2237 = vmatprep.subr.mxu0 0.0
    %2238 = vmatpush1.msra.mxu0 0.0
    %2239 = vmatprep.subr.mxu0 0.0
    %2240 = vmatpush1.msra.mxu0 0.0
    %2241 = vmatprep.subr.mxu0 0.0
    %2242 = vmatpush1.msra.mxu0 0.0
    %2243 = vmatprep.subr.mxu0 0.0
    %2244 = vmatpush1.msra.mxu0 0.0
    %2245 = vmatprep.subr.mxu0 0.0
    %2246 = vmatpush1.msra.mxu0 0.0
    %2247 = vmatprep.subr.mxu0 0.0
    %2248 = vmatpush1.msra.mxu0 0.0
    %2249 = vmatprep.subr.mxu0 0.0
    %2250 = vmatpush1.msra.mxu0 0.0
    %2251 = vmatprep.subr.mxu0 0.0
    %2252 = vmatpush1.msra.mxu0 0.0
    %2253 = vmatprep.subr.mxu0 0.0
    %2254 = vmatpush1.msra.mxu0 0.0
    %2255 = vmatprep.subr.mxu0 0.0
    %2256 = vmatpush1.msra.mxu0 0.0
    %2257 = vmatprep.mubr.f32.mxu0 0.0
    %2258 = vmatmul.mubr.f32.gmra.mrb[0].mxu0 %v2177
    %v2259 = vpop.f32.mrb[0].mxu0
    %v2260 = vadd.f32 %v2139, %v2259
    %v2261 = vpop.f32.mrb[0].mxu0
    %2262 = vmatprep.mubr.f32.mxu0 0.0
    %2263 = vmatmul.mubr.f32.gmra.mrb[0].mxu0 %v2179
    %v2264 = vpop.f32.mrb[0].mxu0
    %v2265 = vadd.f32 %v2144, %v2264
    %v2266 = vpop.f32.mrb[0].mxu0
    %2267 = vmatprep.mubr.f32.mxu0 0.0
    %2268 = vmatmul.mubr.f32.gmra.mrb[0].mxu0 %v2181
    %v2269 = vpop.f32.mrb[0].mxu0
    %v2270 = vadd.f32 %v2149, %v2269
    %v2271 = vpop.f32.mrb[0].mxu0
    %2272 = vmatprep.mubr.f32.mxu0 0.0
    %2273 = vmatmul.mubr.f32.gmra.mrb[0].mxu0 %v2183
    %v2274 = vpop.f32.mrb[0].mxu0
    %v2275 = vadd.f32 %v2154, %v2274
    %v2276 = vpop.f32.mrb[0].mxu0
    %2277 = vmatprep.mubr.f32.mxu0 0.0
    %2278 = vmatmul.mubr.f32.gmra.mrb[0].mxu0 %v2185
    %v2279 = vpop.f32.mrb[0].mxu0
    %v2280 = vadd.f32 %v2159, %v2279
    %v2281 = vpop.f32.mrb[0].mxu0
    %2282 = vmatprep.mubr.f32.mxu0 0.0
    %2283 = vmatmul.mubr.f32.gmra.mrb[0].mxu0 %v2187
    %v2284 = vpop.f32.mrb[0].mxu0
    %v2285 = vadd.f32 %v2164, %v2284
    %v2286 = vpop.f32.mrb[0].mxu0
    %2287 = vmatprep.mubr.f32.mxu0 0.0
    %2288 = vmatmul.mubr.f32.gmra.mrb[0].mxu0 %v2189
    %v2289 = vpop.f32.mrb[0].mxu0
    %v2290 = vadd.f32 %v2169, %v2289
    %v2291 = vpop.f32.mrb[0].mxu0
    %2292 = vmatprep.mubr.f32.mxu0 0.0
    %2293 = vmatmul.mubr.f32.gmra.mrb[0].mxu0 %v2191
    %v2294 = vpop.f32.mrb[0].mxu0
    %v2295 = vadd.f32 %v2174, %v2294
    %v2296 = vpop.f32.mrb[0].mxu0
    %2297 = vdwg.mxu0
    %v2298 = vrot.slane %v1982, 2
    %v2299 = vrot.slane %v1987, 2
    %v2300 = vsel %vm432, %v2298, %v2299
    %v2301 = vrot.slane %v1992, 2
    %v2302 = vsel %vm432, %v2299, %v2301
    %v2303 = vrot.slane %v1997, 2
    %v2304 = vsel %vm432, %v2301, %v2303
    %v2305 = vrot.slane %v2002, 2
    %v2306 = vsel %vm432, %v2303, %v2305
    %v2307 = vrot.slane %v2007, 2
    %v2308 = vsel %vm432, %v2305, %v2307
    %v2309 = vrot.slane %v2012, 2
    %v2310 = vsel %vm432, %v2307, %v2309
    %v2311 = vrot.slane %v2017, 2
    %v2312 = vsel %vm432, %v2309, %v2311
    %v2315 = vsel %vm432, %v2311, %v2298
    %s2316 = scalar_lea.vmem %s6, 64
    %v2317 = vld [vmem:[%s2316] sm:$0xff]
    %v2318 = vld [vmem:[%s2316 + $0x8] sm:$0xff]
    %v2319 = vld [vmem:[%s2316 + $0x10] sm:$0xff]
    %v2320 = vld [vmem:[%s2316 + $0x18] sm:$0xff]
    %v2321 = vsel %vm1679, %v2300, 0
    %v2323 = vsel %vm1679, %v2302, 0
    %v2325 = vsel %vm1679, %v2304, 0
    %v2327 = vsel %vm1679, %v2306, 0
    %v2329 = vsel %vm1679, %v2308, 0
    %v2331 = vsel %vm1679, %v2310, 0
    %v2333 = vsel %vm1679, %v2312, 0
    %v2336 = vsel %vm1679, %v2315, 0
    %2338 = vmatprep.subr.mxu0 0.0
    %2339 = vmatpush1.msra.mxu0 %v2317
    %2340 = vmatprep.subr.mxu0 0.0
    %2341 = vmatpush1.msra.mxu0 %v2318
    %2342 = vmatprep.subr.mxu0 0.0
    %2343 = vmatpush1.msra.mxu0 %v2319
    %2344 = vmatprep.subr.mxu0 0.0
    %2345 = vmatpush1.msra.mxu0 %v2320
    %2346 = vmatprep.subr.mxu0 0.0
    %2347 = vmatpush1.msra.mxu0 0.0
    %2348 = vmatprep.subr.mxu0 0.0
    %2349 = vmatpush1.msra.mxu0 0.0
    %2350 = vmatprep.subr.mxu0 0.0
    %2351 = vmatpush1.msra.mxu0 0.0
    %2352 = vmatprep.subr.mxu0 0.0
    %2353 = vmatpush1.msra.mxu0 0.0
    %2354 = vmatprep.subr.mxu0 0.0
    %2355 = vmatpush1.msra.mxu0 0.0
    %2356 = vmatprep.subr.mxu0 0.0
    %2357 = vmatpush1.msra.mxu0 0.0
    %2358 = vmatprep.subr.mxu0 0.0
    %2359 = vmatpush1.msra.mxu0 0.0
    %2360 = vmatprep.subr.mxu0 0.0
    %2361 = vmatpush1.msra.mxu0 0.0
    %2362 = vmatprep.subr.mxu0 0.0
    %2363 = vmatpush1.msra.mxu0 0.0
    %2364 = vmatprep.subr.mxu0 0.0
    %2365 = vmatpush1.msra.mxu0 0.0
    %2366 = vmatprep.subr.mxu0 0.0
    %2367 = vmatpush1.msra.mxu0 0.0
    %2368 = vmatprep.subr.mxu0 0.0
    %2369 = vmatpush1.msra.mxu0 0.0
    %2370 = vmatprep.subr.mxu0 0.0
    %2371 = vmatpush1.msra.mxu0 0.0
    %2372 = vmatprep.subr.mxu0 0.0
    %2373 = vmatpush1.msra.mxu0 0.0
    %2374 = vmatprep.subr.mxu0 0.0
    %2375 = vmatpush1.msra.mxu0 0.0
    %2376 = vmatprep.subr.mxu0 0.0
    %2377 = vmatpush1.msra.mxu0 0.0
    %2378 = vmatprep.subr.mxu0 0.0
    %2379 = vmatpush1.msra.mxu0 0.0
    %2380 = vmatprep.subr.mxu0 0.0
    %2381 = vmatpush1.msra.mxu0 0.0
    %2382 = vmatprep.subr.mxu0 0.0
    %2383 = vmatpush1.msra.mxu0 0.0
    %2384 = vmatprep.subr.mxu0 0.0
    %2385 = vmatpush1.msra.mxu0 0.0
    %2386 = vmatprep.subr.mxu0 0.0
    %2387 = vmatpush1.msra.mxu0 0.0
    %2388 = vmatprep.subr.mxu0 0.0
    %2389 = vmatpush1.msra.mxu0 0.0
    %2390 = vmatprep.subr.mxu0 0.0
    %2391 = vmatpush1.msra.mxu0 0.0
    %2392 = vmatprep.subr.mxu0 0.0
    %2393 = vmatpush1.msra.mxu0 0.0
    %2394 = vmatprep.subr.mxu0 0.0
    %2395 = vmatpush1.msra.mxu0 0.0
    %2396 = vmatprep.subr.mxu0 0.0
    %2397 = vmatpush1.msra.mxu0 0.0
    %2398 = vmatprep.subr.mxu0 0.0
    %2399 = vmatpush1.msra.mxu0 0.0
    %2400 = vmatprep.subr.mxu0 0.0
    %2401 = vmatpush1.msra.mxu0 0.0
    %2402 = vmatprep.mubr.f32.mxu0 0.0
    %2403 = vmatmul.mubr.f32.gmra.mrb[0].mxu0 %v2321
    %v2404 = vpop.f32.mrb[0].mxu0
    %v2405 = vadd.f32 0.0, %v2404
    %v2406 = vpop.f32.mrb[0].mxu0
    %2407 = vmatprep.mubr.f32.mxu0 0.0
    %2408 = vmatmul.mubr.f32.gmra.mrb[0].mxu0 %v2323
    %v2409 = vpop.f32.mrb[0].mxu0
    %v2410 = vadd.f32 0.0, %v2409
    %v2411 = vpop.f32.mrb[0].mxu0
    %2412 = vmatprep.mubr.f32.mxu0 0.0
    %2413 = vmatmul.mubr.f32.gmra.mrb[0].mxu0 %v2325
    %v2414 = vpop.f32.mrb[0].mxu0
    %v2415 = vadd.f32 0.0, %v2414
    %v2416 = vpop.f32.mrb[0].mxu0
    %2417 = vmatprep.mubr.f32.mxu0 0.0
    %2418 = vmatmul.mubr.f32.gmra.mrb[0].mxu0 %v2327
    %v2419 = vpop.f32.mrb[0].mxu0
    %v2420 = vadd.f32 0.0, %v2419
    %v2421 = vpop.f32.mrb[0].mxu0
    %2422 = vmatprep.mubr.f32.mxu0 0.0
    %2423 = vmatmul.mubr.f32.gmra.mrb[0].mxu0 %v2329
    %v2424 = vpop.f32.mrb[0].mxu0
    %v2425 = vadd.f32 0.0, %v2424
    %v2426 = vpop.f32.mrb[0].mxu0
    %2427 = vmatprep.mubr.f32.mxu0 0.0
    %2428 = vmatmul.mubr.f32.gmra.mrb[0].mxu0 %v2331
    %v2429 = vpop.f32.mrb[0].mxu0
    %v2430 = vadd.f32 0.0, %v2429
    %v2431 = vpop.f32.mrb[0].mxu0
    %2432 = vmatprep.mubr.f32.mxu0 0.0
    %2433 = vmatmul.mubr.f32.gmra.mrb[0].mxu0 %v2333
    %v2434 = vpop.f32.mrb[0].mxu0
    %v2435 = vadd.f32 0.0, %v2434
    %v2436 = vpop.f32.mrb[0].mxu0
    %2437 = vmatprep.mubr.f32.mxu0 0.0
    %2438 = vmatmul.mubr.f32.gmra.mrb[0].mxu0 %v2336
    %v2439 = vpop.f32.mrb[0].mxu0
    %v2440 = vadd.f32 0.0, %v2439
    %v2441 = vpop.f32.mrb[0].mxu0
    %2442 = vdwg.mxu0
    %v2443 = vadd.f32 %v2260, %v2405
    %v2444 = vadd.f32 %v2265, %v2410
    %v2445 = vadd.f32 %v2270, %v2415
    %v2446 = vadd.f32 %v2275, %v2420
    %v2447 = vadd.f32 %v2280, %v2425
    %v2448 = vadd.f32 %v2285, %v2430
    %v2449 = vadd.f32 %v2290, %v2435
    %v2450 = vadd.f32 %v2295, %v2440
    %v2451 = vrot.slane %v1982, 3
    %v2452 = vrot.slane %v1987, 3
    %v2453 = vsel %vm626, %v2451, %v2452
    %v2454 = vrot.slane %v1992, 3
    %v2455 = vsel %vm626, %v2452, %v2454
    %v2456 = vrot.slane %v1997, 3
    %v2457 = vsel %vm626, %v2454, %v2456
    %v2458 = vrot.slane %v2002, 3
    %v2459 = vsel %vm626, %v2456, %v2458
    %v2460 = vrot.slane %v2007, 3
    %v2461 = vsel %vm626, %v2458, %v2460
    %v2462 = vrot.slane %v2012, 3
    %v2463 = vsel %vm626, %v2460, %v2462
    %v2464 = vrot.slane %v2017, 3
    %v2465 = vsel %vm626, %v2462, %v2464
    %v2468 = vsel %vm626, %v2464, %v2451
    %s2469 = scalar_lea.vmem %s6, 96
    %v2470 = vld [vmem:[%s2469] sm:$0xff]
    %v2471 = vld [vmem:[%s2469 + $0x8] sm:$0xff]
    %v2472 = vld [vmem:[%s2469 + $0x10] sm:$0xff]
    %v2473 = vld [vmem:[%s2469 + $0x18] sm:$0xff]
    %v2474 = vsel %vm1679, %v2453, 0
    %v2476 = vsel %vm1679, %v2455, 0
    %v2478 = vsel %vm1679, %v2457, 0
    %v2480 = vsel %vm1679, %v2459, 0
    %v2482 = vsel %vm1679, %v2461, 0
    %v2484 = vsel %vm1679, %v2463, 0
    %v2486 = vsel %vm1679, %v2465, 0
    %v2489 = vsel %vm1679, %v2468, 0
    %2491 = vmatprep.subr.mxu0 0.0
    %2492 = vmatpush1.msra.mxu0 %v2470
    %2493 = vmatprep.subr.mxu0 0.0
    %2494 = vmatpush1.msra.mxu0 %v2471
    %2495 = vmatprep.subr.mxu0 0.0
    %2496 = vmatpush1.msra.mxu0 %v2472
    %2497 = vmatprep.subr.mxu0 0.0
    %2498 = vmatpush1.msra.mxu0 %v2473
    %2499 = vmatprep.subr.mxu0 0.0
    %2500 = vmatpush1.msra.mxu0 0.0
    %2501 = vmatprep.subr.mxu0 0.0
    %2502 = vmatpush1.msra.mxu0 0.0
    %2503 = vmatprep.subr.mxu0 0.0
    %2504 = vmatpush1.msra.mxu0 0.0
    %2505 = vmatprep.subr.mxu0 0.0
    %2506 = vmatpush1.msra.mxu0 0.0
    %2507 = vmatprep.subr.mxu0 0.0
    %2508 = vmatpush1.msra.mxu0 0.0
    %2509 = vmatprep.subr.mxu0 0.0
    %2510 = vmatpush1.msra.mxu0 0.0
    %2511 = vmatprep.subr.mxu0 0.0
    %2512 = vmatpush1.msra.mxu0 0.0
    %2513 = vmatprep.subr.mxu0 0.0
    %2514 = vmatpush1.msra.mxu0 0.0
    %2515 = vmatprep.subr.mxu0 0.0
    %2516 = vmatpush1.msra.mxu0 0.0
    %2517 = vmatprep.subr.mxu0 0.0
    %2518 = vmatpush1.msra.mxu0 0.0
    %2519 = vmatprep.subr.mxu0 0.0
    %2520 = vmatpush1.msra.mxu0 0.0
    %2521 = vmatprep.subr.mxu0 0.0
    %2522 = vmatpush1.msra.mxu0 0.0
    %2523 = vmatprep.subr.mxu0 0.0
    %2524 = vmatpush1.msra.mxu0 0.0
    %2525 = vmatprep.subr.mxu0 0.0
    %2526 = vmatpush1.msra.mxu0 0.0
    %2527 = vmatprep.subr.mxu0 0.0
    %2528 = vmatpush1.msra.mxu0 0.0
    %2529 = vmatprep.subr.mxu0 0.0
    %2530 = vmatpush1.msra.mxu0 0.0
    %2531 = vmatprep.subr.mxu0 0.0
    %2532 = vmatpush1.msra.mxu0 0.0
    %2533 = vmatprep.subr.mxu0 0.0
    %2534 = vmatpush1.msra.mxu0 0.0
    %2535 = vmatprep.subr.mxu0 0.0
    %2536 = vmatpush1.msra.mxu0 0.0
    %2537 = vmatprep.subr.mxu0 0.0
    %2538 = vmatpush1.msra.mxu0 0.0
    %2539 = vmatprep.subr.mxu0 0.0
    %2540 = vmatpush1.msra.mxu0 0.0
    %2541 = vmatprep.subr.mxu0 0.0
    %2542 = vmatpush1.msra.mxu0 0.0
    %2543 = vmatprep.subr.mxu0 0.0
    %2544 = vmatpush1.msra.mxu0 0.0
    %2545 = vmatprep.subr.mxu0 0.0
    %2546 = vmatpush1.msra.mxu0 0.0
    %2547 = vmatprep.subr.mxu0 0.0
    %2548 = vmatpush1.msra.mxu0 0.0
    %2549 = vmatprep.subr.mxu0 0.0
    %2550 = vmatpush1.msra.mxu0 0.0
    %2551 = vmatprep.subr.mxu0 0.0
    %2552 = vmatpush1.msra.mxu0 0.0
    %2553 = vmatprep.subr.mxu0 0.0
    %2554 = vmatpush1.msra.mxu0 0.0
    %2555 = vmatprep.mubr.f32.mxu0 0.0
    %2556 = vmatmul.mubr.f32.gmra.mrb[0].mxu0 %v2474
    %v2557 = vpop.f32.mrb[0].mxu0
    %v2558 = vadd.f32 0.0, %v2557
    %v2559 = vpop.f32.mrb[0].mxu0
    %2560 = vmatprep.mubr.f32.mxu0 0.0
    %2561 = vmatmul.mubr.f32.gmra.mrb[0].mxu0 %v2476
    %v2562 = vpop.f32.mrb[0].mxu0
    %v2563 = vadd.f32 0.0, %v2562
    %v2564 = vpop.f32.mrb[0].mxu0
    %2565 = vmatprep.mubr.f32.mxu0 0.0
    %2566 = vmatmul.mubr.f32.gmra.mrb[0].mxu0 %v2478
    %v2567 = vpop.f32.mrb[0].mxu0
    %v2568 = vadd.f32 0.0, %v2567
    %v2569 = vpop.f32.mrb[0].mxu0
    %2570 = vmatprep.mubr.f32.mxu0 0.0
    %2571 = vmatmul.mubr.f32.gmra.mrb[0].mxu0 %v2480
    %v2572 = vpop.f32.mrb[0].mxu0
    %v2573 = vadd.f32 0.0, %v2572
    %v2574 = vpop.f32.mrb[0].mxu0
    %2575 = vmatprep.mubr.f32.mxu0 0.0
    %2576 = vmatmul.mubr.f32.gmra.mrb[0].mxu0 %v2482
    %v2577 = vpop.f32.mrb[0].mxu0
    %v2578 = vadd.f32 0.0, %v2577
    %v2579 = vpop.f32.mrb[0].mxu0
    %2580 = vmatprep.mubr.f32.mxu0 0.0
    %2581 = vmatmul.mubr.f32.gmra.mrb[0].mxu0 %v2484
    %v2582 = vpop.f32.mrb[0].mxu0
    %v2583 = vadd.f32 0.0, %v2582
    %v2584 = vpop.f32.mrb[0].mxu0
    %2585 = vmatprep.mubr.f32.mxu0 0.0
    %2586 = vmatmul.mubr.f32.gmra.mrb[0].mxu0 %v2486
    %v2587 = vpop.f32.mrb[0].mxu0
    %v2588 = vadd.f32 0.0, %v2587
    %v2589 = vpop.f32.mrb[0].mxu0
    %2590 = vmatprep.mubr.f32.mxu0 0.0
    %2591 = vmatmul.mubr.f32.gmra.mrb[0].mxu0 %v2489
    %v2592 = vpop.f32.mrb[0].mxu0
    %v2593 = vadd.f32 0.0, %v2592
    %v2594 = vpop.f32.mrb[0].mxu0
    %2595 = vdwg.mxu0
    %v2596 = vadd.f32 %v2443, %v2558
    %v2597 = vadd.f32 %v2444, %v2563
    %v2598 = vadd.f32 %v2445, %v2568
    %v2599 = vadd.f32 %v2446, %v2573
    %v2600 = vadd.f32 %v2447, %v2578
    %v2601 = vadd.f32 %v2448, %v2583
    %v2602 = vadd.f32 %v2449, %v2588
    %v2603 = vadd.f32 %v2450, %v2593
    %v2604 = vrot.slane %v1982, 4
    %v2605 = vrot.slane %v1987, 4
    %v2606 = vsel %vm151, %v2604, %v2605
    %v2607 = vrot.slane %v1992, 4
    %v2608 = vsel %vm151, %v2605, %v2607
    %v2609 = vrot.slane %v1997, 4
    %v2610 = vsel %vm151, %v2607, %v2609
    %v2611 = vrot.slane %v2002, 4
    %v2612 = vsel %vm151, %v2609, %v2611
    %v2613 = vrot.slane %v2007, 4
    %v2614 = vsel %vm151, %v2611, %v2613
    %v2615 = vrot.slane %v2012, 4
    %v2616 = vsel %vm151, %v2613, %v2615
    %v2617 = vrot.slane %v2017, 4
    %v2618 = vsel %vm151, %v2615, %v2617
    %v2621 = vsel %vm151, %v2617, %v2604
    %s2622 = scalar_lea.vmem %s6, 128
    %v2623 = vld [vmem:[%s2622] sm:$0xff]
    %v2624 = vld [vmem:[%s2622 + $0x8] sm:$0xff]
    %v2625 = vld [vmem:[%s2622 + $0x10] sm:$0xff]
    %v2626 = vld [vmem:[%s2622 + $0x18] sm:$0xff]
    %v2627 = vsel %vm1679, %v2606, 0
    %v2629 = vsel %vm1679, %v2608, 0
    %v2631 = vsel %vm1679, %v2610, 0
    %v2633 = vsel %vm1679, %v2612, 0
    %v2635 = vsel %vm1679, %v2614, 0
    %v2637 = vsel %vm1679, %v2616, 0
    %v2639 = vsel %vm1679, %v2618, 0
    %v2642 = vsel %vm1679, %v2621, 0
    %2644 = vmatprep.subr.mxu0 0.0
    %2645 = vmatpush1.msra.mxu0 %v2623
    %2646 = vmatprep.subr.mxu0 0.0
    %2647 = vmatpush1.msra.mxu0 %v2624
    %2648 = vmatprep.subr.mxu0 0.0
    %2649 = vmatpush1.msra.mxu0 %v2625
    %2650 = vmatprep.subr.mxu0 0.0
    %2651 = vmatpush1.msra.mxu0 %v2626
    %2652 = vmatprep.subr.mxu0 0.0
    %2653 = vmatpush1.msra.mxu0 0.0
    %2654 = vmatprep.subr.mxu0 0.0
    %2655 = vmatpush1.msra.mxu0 0.0
    %2656 = vmatprep.subr.mxu0 0.0
    %2657 = vmatpush1.msra.mxu0 0.0
    %2658 = vmatprep.subr.mxu0 0.0
    %2659 = vmatpush1.msra.mxu0 0.0
    %2660 = vmatprep.subr.mxu0 0.0
    %2661 = vmatpush1.msra.mxu0 0.0
    %2662 = vmatprep.subr.mxu0 0.0
    %2663 = vmatpush1.msra.mxu0 0.0
    %2664 = vmatprep.subr.mxu0 0.0
    %2665 = vmatpush1.msra.mxu0 0.0
    %2666 = vmatprep.subr.mxu0 0.0
    %2667 = vmatpush1.msra.mxu0 0.0
    %2668 = vmatprep.subr.mxu0 0.0
    %2669 = vmatpush1.msra.mxu0 0.0
    %2670 = vmatprep.subr.mxu0 0.0
    %2671 = vmatpush1.msra.mxu0 0.0
    %2672 = vmatprep.subr.mxu0 0.0
    %2673 = vmatpush1.msra.mxu0 0.0
    %2674 = vmatprep.subr.mxu0 0.0
    %2675 = vmatpush1.msra.mxu0 0.0
    %2676 = vmatprep.subr.mxu0 0.0
    %2677 = vmatpush1.msra.mxu0 0.0
    %2678 = vmatprep.subr.mxu0 0.0
    %2679 = vmatpush1.msra.mxu0 0.0
    %2680 = vmatprep.subr.mxu0 0.0
    %2681 = vmatpush1.msra.mxu0 0.0
    %2682 = vmatprep.subr.mxu0 0.0
    %2683 = vmatpush1.msra.mxu0 0.0
    %2684 = vmatprep.subr.mxu0 0.0
    %2685 = vmatpush1.msra.mxu0 0.0
    %2686 = vmatprep.subr.mxu0 0.0
    %2687 = vmatpush1.msra.mxu0 0.0
    %2688 = vmatprep.subr.mxu0 0.0
    %2689 = vmatpush1.msra.mxu0 0.0
    %2690 = vmatprep.subr.mxu0 0.0
    %2691 = vmatpush1.msra.mxu0 0.0
    %2692 = vmatprep.subr.mxu0 0.0
    %2693 = vmatpush1.msra.mxu0 0.0
    %2694 = vmatprep.subr.mxu0 0.0
    %2695 = vmatpush1.msra.mxu0 0.0
    %2696 = vmatprep.subr.mxu0 0.0
    %2697 = vmatpush1.msra.mxu0 0.0
    %2698 = vmatprep.subr.mxu0 0.0
    %2699 = vmatpush1.msra.mxu0 0.0
    %2700 = vmatprep.subr.mxu0 0.0
    %2701 = vmatpush1.msra.mxu0 0.0
    %2702 = vmatprep.subr.mxu0 0.0
    %2703 = vmatpush1.msra.mxu0 0.0
    %2704 = vmatprep.subr.mxu0 0.0
    %2705 = vmatpush1.msra.mxu0 0.0
    %2706 = vmatprep.subr.mxu0 0.0
    %2707 = vmatpush1.msra.mxu0 0.0
    %2708 = vmatprep.mubr.f32.mxu0 0.0
    %2709 = vmatmul.mubr.f32.gmra.mrb[0].mxu0 %v2627
    %v2710 = vpop.f32.mrb[0].mxu0
    %v2711 = vadd.f32 0.0, %v2710
    %v2712 = vpop.f32.mrb[0].mxu0
    %2713 = vmatprep.mubr.f32.mxu0 0.0
    %2714 = vmatmul.mubr.f32.gmra.mrb[0].mxu0 %v2629
    %v2715 = vpop.f32.mrb[0].mxu0
    %v2716 = vadd.f32 0.0, %v2715
    %v2717 = vpop.f32.mrb[0].mxu0
    %2718 = vmatprep.mubr.f32.mxu0 0.0
    %2719 = vmatmul.mubr.f32.gmra.mrb[0].mxu0 %v2631
    %v2720 = vpop.f32.mrb[0].mxu0
    %v2721 = vadd.f32 0.0, %v2720
    %v2722 = vpop.f32.mrb[0].mxu0
    %2723 = vmatprep.mubr.f32.mxu0 0.0
    %2724 = vmatmul.mubr.f32.gmra.mrb[0].mxu0 %v2633
    %v2725 = vpop.f32.mrb[0].mxu0
    %v2726 = vadd.f32 0.0, %v2725
    %v2727 = vpop.f32.mrb[0].mxu0
    %2728 = vmatprep.mubr.f32.mxu0 0.0
    %2729 = vmatmul.mubr.f32.gmra.mrb[0].mxu0 %v2635
    %v2730 = vpop.f32.mrb[0].mxu0
    %v2731 = vadd.f32 0.0, %v2730
    %v2732 = vpop.f32.mrb[0].mxu0
    %2733 = vmatprep.mubr.f32.mxu0 0.0
    %2734 = vmatmul.mubr.f32.gmra.mrb[0].mxu0 %v2637
    %v2735 = vpop.f32.mrb[0].mxu0
    %v2736 = vadd.f32 0.0, %v2735
    %v2737 = vpop.f32.mrb[0].mxu0
    %2738 = vmatprep.mubr.f32.mxu0 0.0
    %2739 = vmatmul.mubr.f32.gmra.mrb[0].mxu0 %v2639
    %v2740 = vpop.f32.mrb[0].mxu0
    %v2741 = vadd.f32 0.0, %v2740
    %v2742 = vpop.f32.mrb[0].mxu0
    %2743 = vmatprep.mubr.f32.mxu0 0.0
    %2744 = vmatmul.mubr.f32.gmra.mrb[0].mxu0 %v2642
    %v2745 = vpop.f32.mrb[0].mxu0
    %v2746 = vadd.f32 0.0, %v2745
    %v2747 = vpop.f32.mrb[0].mxu0
    %2748 = vdwg.mxu0
    %v2749 = vadd.f32 %v2596, %v2711
    %v2750 = vadd.f32 %v2597, %v2716
    %v2751 = vadd.f32 %v2598, %v2721
    %v2752 = vadd.f32 %v2599, %v2726
    %v2753 = vadd.f32 %v2600, %v2731
    %v2754 = vadd.f32 %v2601, %v2736
    %v2755 = vadd.f32 %v2602, %v2741
    %v2756 = vadd.f32 %v2603, %v2746
    %v2757 = vrot.slane %v1982, 5
    %v2758 = vrot.slane %v1987, 5
    %v2759 = vsel %vm1013, %v2757, %v2758
    %v2760 = vrot.slane %v1992, 5
    %v2761 = vsel %vm1013, %v2758, %v2760
    %v2762 = vrot.slane %v1997, 5
    %v2763 = vsel %vm1013, %v2760, %v2762
    %v2764 = vrot.slane %v2002, 5
    %v2765 = vsel %vm1013, %v2762, %v2764
    %v2766 = vrot.slane %v2007, 5
    %v2767 = vsel %vm1013, %v2764, %v2766
    %v2768 = vrot.slane %v2012, 5
    %v2769 = vsel %vm1013, %v2766, %v2768
    %v2770 = vrot.slane %v2017, 5
    %v2771 = vsel %vm1013, %v2768, %v2770
    %v2774 = vsel %vm1013, %v2770, %v2757
    %s2775 = scalar_lea.vmem %s6, 160
    %v2776 = vld [vmem:[%s2775] sm:$0xff]
    %v2777 = vld [vmem:[%s2775 + $0x8] sm:$0xff]
    %v2778 = vld [vmem:[%s2775 + $0x10] sm:$0xff]
    %v2779 = vld [vmem:[%s2775 + $0x18] sm:$0xff]
    %v2780 = vsel %vm1679, %v2759, 0
    %v2782 = vsel %vm1679, %v2761, 0
    %v2784 = vsel %vm1679, %v2763, 0
    %v2786 = vsel %vm1679, %v2765, 0
    %v2788 = vsel %vm1679, %v2767, 0
    %v2790 = vsel %vm1679, %v2769, 0
    %v2792 = vsel %vm1679, %v2771, 0
    %v2795 = vsel %vm1679, %v2774, 0
    %2797 = vmatprep.subr.mxu0 0.0
    %2798 = vmatpush1.msra.mxu0 %v2776
    %2799 = vmatprep.subr.mxu0 0.0
    %2800 = vmatpush1.msra.mxu0 %v2777
    %2801 = vmatprep.subr.mxu0 0.0
    %2802 = vmatpush1.msra.mxu0 %v2778
    %2803 = vmatprep.subr.mxu0 0.0
    %2804 = vmatpush1.msra.mxu0 %v2779
    %2805 = vmatprep.subr.mxu0 0.0
    %2806 = vmatpush1.msra.mxu0 0.0
    %2807 = vmatprep.subr.mxu0 0.0
    %2808 = vmatpush1.msra.mxu0 0.0
    %2809 = vmatprep.subr.mxu0 0.0
    %2810 = vmatpush1.msra.mxu0 0.0
    %2811 = vmatprep.subr.mxu0 0.0
    %2812 = vmatpush1.msra.mxu0 0.0
    %2813 = vmatprep.subr.mxu0 0.0
    %2814 = vmatpush1.msra.mxu0 0.0
    %2815 = vmatprep.subr.mxu0 0.0
    %2816 = vmatpush1.msra.mxu0 0.0
    %2817 = vmatprep.subr.mxu0 0.0
    %2818 = vmatpush1.msra.mxu0 0.0
    %2819 = vmatprep.subr.mxu0 0.0
    %2820 = vmatpush1.msra.mxu0 0.0
    %2821 = vmatprep.subr.mxu0 0.0
    %2822 = vmatpush1.msra.mxu0 0.0
    %2823 = vmatprep.subr.mxu0 0.0
    %2824 = vmatpush1.msra.mxu0 0.0
    %2825 = vmatprep.subr.mxu0 0.0
    %2826 = vmatpush1.msra.mxu0 0.0
    %2827 = vmatprep.subr.mxu0 0.0
    %2828 = vmatpush1.msra.mxu0 0.0
    %2829 = vmatprep.subr.mxu0 0.0
    %2830 = vmatpush1.msra.mxu0 0.0
    %2831 = vmatprep.subr.mxu0 0.0
    %2832 = vmatpush1.msra.mxu0 0.0
    %2833 = vmatprep.subr.mxu0 0.0
    %2834 = vmatpush1.msra.mxu0 0.0
    %2835 = vmatprep.subr.mxu0 0.0
    %2836 = vmatpush1.msra.mxu0 0.0
    %2837 = vmatprep.subr.mxu0 0.0
    %2838 = vmatpush1.msra.mxu0 0.0
    %2839 = vmatprep.subr.mxu0 0.0
    %2840 = vmatpush1.msra.mxu0 0.0
    %2841 = vmatprep.subr.mxu0 0.0
    %2842 = vmatpush1.msra.mxu0 0.0
    %2843 = vmatprep.subr.mxu0 0.0
    %2844 = vmatpush1.msra.mxu0 0.0
    %2845 = vmatprep.subr.mxu0 0.0
    %2846 = vmatpush1.msra.mxu0 0.0
    %2847 = vmatprep.subr.mxu0 0.0
    %2848 = vmatpush1.msra.mxu0 0.0
    %2849 = vmatprep.subr.mxu0 0.0
    %2850 = vmatpush1.msra.mxu0 0.0
    %2851 = vmatprep.subr.mxu0 0.0
    %2852 = vmatpush1.msra.mxu0 0.0
    %2853 = vmatprep.subr.mxu0 0.0
    %2854 = vmatpush1.msra.mxu0 0.0
    %2855 = vmatprep.subr.mxu0 0.0
    %2856 = vmatpush1.msra.mxu0 0.0
    %2857 = vmatprep.subr.mxu0 0.0
    %2858 = vmatpush1.msra.mxu0 0.0
    %2859 = vmatprep.subr.mxu0 0.0
    %2860 = vmatpush1.msra.mxu0 0.0
    %2861 = vmatprep.mubr.f32.mxu0 0.0
    %2862 = vmatmul.mubr.f32.gmra.mrb[0].mxu0 %v2780
    %v2863 = vpop.f32.mrb[0].mxu0
    %v2864 = vadd.f32 0.0, %v2863
    %v2865 = vpop.f32.mrb[0].mxu0
    %2866 = vmatprep.mubr.f32.mxu0 0.0
    %2867 = vmatmul.mubr.f32.gmra.mrb[0].mxu0 %v2782
    %v2868 = vpop.f32.mrb[0].mxu0
    %v2869 = vadd.f32 0.0, %v2868
    %v2870 = vpop.f32.mrb[0].mxu0
    %2871 = vmatprep.mubr.f32.mxu0 0.0
    %2872 = vmatmul.mubr.f32.gmra.mrb[0].mxu0 %v2784
    %v2873 = vpop.f32.mrb[0].mxu0
    %v2874 = vadd.f32 0.0, %v2873
    %v2875 = vpop.f32.mrb[0].mxu0
    %2876 = vmatprep.mubr.f32.mxu0 0.0
    %2877 = vmatmul.mubr.f32.gmra.mrb[0].mxu0 %v2786
    %v2878 = vpop.f32.mrb[0].mxu0
    %v2879 = vadd.f32 0.0, %v2878
    %v2880 = vpop.f32.mrb[0].mxu0
    %2881 = vmatprep.mubr.f32.mxu0 0.0
    %2882 = vmatmul.mubr.f32.gmra.mrb[0].mxu0 %v2788
    %v2883 = vpop.f32.mrb[0].mxu0
    %v2884 = vadd.f32 0.0, %v2883
    %v2885 = vpop.f32.mrb[0].mxu0
    %2886 = vmatprep.mubr.f32.mxu0 0.0
    %2887 = vmatmul.mubr.f32.gmra.mrb[0].mxu0 %v2790
    %v2888 = vpop.f32.mrb[0].mxu0
    %v2889 = vadd.f32 0.0, %v2888
    %v2890 = vpop.f32.mrb[0].mxu0
    %2891 = vmatprep.mubr.f32.mxu0 0.0
    %2892 = vmatmul.mubr.f32.gmra.mrb[0].mxu0 %v2792
    %v2893 = vpop.f32.mrb[0].mxu0
    %v2894 = vadd.f32 0.0, %v2893
    %v2895 = vpop.f32.mrb[0].mxu0
    %2896 = vmatprep.mubr.f32.mxu0 0.0
    %2897 = vmatmul.mubr.f32.gmra.mrb[0].mxu0 %v2795
    %v2898 = vpop.f32.mrb[0].mxu0
    %v2899 = vadd.f32 0.0, %v2898
    %v2900 = vpop.f32.mrb[0].mxu0
    %2901 = vdwg.mxu0
    %v2902 = vadd.f32 %v2749, %v2864
    %v2903 = vadd.f32 %v2750, %v2869
    %v2904 = vadd.f32 %v2751, %v2874
    %v2905 = vadd.f32 %v2752, %v2879
    %v2906 = vadd.f32 %v2753, %v2884
    %v2907 = vadd.f32 %v2754, %v2889
    %v2908 = vadd.f32 %v2755, %v2894
    %v2909 = vadd.f32 %v2756, %v2899
    %v2910 = vrot.slane %v1982, 6
    %v2911 = vrot.slane %v1987, 6
    %v2912 = vsel %vm1207, %v2910, %v2911
    %v2913 = vrot.slane %v1992, 6
    %v2914 = vsel %vm1207, %v2911, %v2913
    %v2915 = vrot.slane %v1997, 6
    %v2916 = vsel %vm1207, %v2913, %v2915
    %v2917 = vrot.slane %v2002, 6
    %v2918 = vsel %vm1207, %v2915, %v2917
    %v2919 = vrot.slane %v2007, 6
    %v2920 = vsel %vm1207, %v2917, %v2919
    %v2921 = vrot.slane %v2012, 6
    %v2922 = vsel %vm1207, %v2919, %v2921
    %v2923 = vrot.slane %v2017, 6
    %v2924 = vsel %vm1207, %v2921, %v2923
    %v2927 = vsel %vm1207, %v2923, %v2910
    %s2928 = scalar_lea.vmem %s6, 192
    %v2929 = vld [vmem:[%s2928] sm:$0xff]
    %v2930 = vld [vmem:[%s2928 + $0x8] sm:$0xff]
    %v2931 = vld [vmem:[%s2928 + $0x10] sm:$0xff]
    %v2932 = vld [vmem:[%s2928 + $0x18] sm:$0xff]
    %v2933 = vsel %vm1679, %v2912, 0
    %v2935 = vsel %vm1679, %v2914, 0
    %v2937 = vsel %vm1679, %v2916, 0
    %v2939 = vsel %vm1679, %v2918, 0
    %v2941 = vsel %vm1679, %v2920, 0
    %v2943 = vsel %vm1679, %v2922, 0
    %v2945 = vsel %vm1679, %v2924, 0
    %v2948 = vsel %vm1679, %v2927, 0
    %2950 = vmatprep.subr.mxu0 0.0
    %2951 = vmatpush1.msra.mxu0 %v2929
    %2952 = vmatprep.subr.mxu0 0.0
    %2953 = vmatpush1.msra.mxu0 %v2930
    %2954 = vmatprep.subr.mxu0 0.0
    %2955 = vmatpush1.msra.mxu0 %v2931
    %2956 = vmatprep.subr.mxu0 0.0
    %2957 = vmatpush1.msra.mxu0 %v2932
    %2958 = vmatprep.subr.mxu0 0.0
    %2959 = vmatpush1.msra.mxu0 0.0
    %2960 = vmatprep.subr.mxu0 0.0
    %2961 = vmatpush1.msra.mxu0 0.0
    %2962 = vmatprep.subr.mxu0 0.0
    %2963 = vmatpush1.msra.mxu0 0.0
    %2964 = vmatprep.subr.mxu0 0.0
    %2965 = vmatpush1.msra.mxu0 0.0
    %2966 = vmatprep.subr.mxu0 0.0
    %2967 = vmatpush1.msra.mxu0 0.0
    %2968 = vmatprep.subr.mxu0 0.0
    %2969 = vmatpush1.msra.mxu0 0.0
    %2970 = vmatprep.subr.mxu0 0.0
    %2971 = vmatpush1.msra.mxu0 0.0
    %2972 = vmatprep.subr.mxu0 0.0
    %2973 = vmatpush1.msra.mxu0 0.0
    %2974 = vmatprep.subr.mxu0 0.0
    %2975 = vmatpush1.msra.mxu0 0.0
    %2976 = vmatprep.subr.mxu0 0.0
    %2977 = vmatpush1.msra.mxu0 0.0
    %2978 = vmatprep.subr.mxu0 0.0
    %2979 = vmatpush1.msra.mxu0 0.0
    %2980 = vmatprep.subr.mxu0 0.0
    %2981 = vmatpush1.msra.mxu0 0.0
    %2982 = vmatprep.subr.mxu0 0.0
    %2983 = vmatpush1.msra.mxu0 0.0
    %2984 = vmatprep.subr.mxu0 0.0
    %2985 = vmatpush1.msra.mxu0 0.0
    %2986 = vmatprep.subr.mxu0 0.0
    %2987 = vmatpush1.msra.mxu0 0.0
    %2988 = vmatprep.subr.mxu0 0.0
    %2989 = vmatpush1.msra.mxu0 0.0
    %2990 = vmatprep.subr.mxu0 0.0
    %2991 = vmatpush1.msra.mxu0 0.0
    %2992 = vmatprep.subr.mxu0 0.0
    %2993 = vmatpush1.msra.mxu0 0.0
    %2994 = vmatprep.subr.mxu0 0.0
    %2995 = vmatpush1.msra.mxu0 0.0
    %2996 = vmatprep.subr.mxu0 0.0
    %2997 = vmatpush1.msra.mxu0 0.0
    %2998 = vmatprep.subr.mxu0 0.0
    %2999 = vmatpush1.msra.mxu0 0.0
    %3000 = vmatprep.subr.mxu0 0.0
    %3001 = vmatpush1.msra.mxu0 0.0
    %3002 = vmatprep.subr.mxu0 0.0
    %3003 = vmatpush1.msra.mxu0 0.0
    %3004 = vmatprep.subr.mxu0 0.0
    %3005 = vmatpush1.msra.mxu0 0.0
    %3006 = vmatprep.subr.mxu0 0.0
    %3007 = vmatpush1.msra.mxu0 0.0
    %3008 = vmatprep.subr.mxu0 0.0
    %3009 = vmatpush1.msra.mxu0 0.0
    %3010 = vmatprep.subr.mxu0 0.0
    %3011 = vmatpush1.msra.mxu0 0.0
    %3012 = vmatprep.subr.mxu0 0.0
    %3013 = vmatpush1.msra.mxu0 0.0
    %3014 = vmatprep.mubr.f32.mxu0 0.0
    %3015 = vmatmul.mubr.f32.gmra.mrb[0].mxu0 %v2933
    %v3016 = vpop.f32.mrb[0].mxu0
    %v3017 = vadd.f32 0.0, %v3016
    %v3018 = vpop.f32.mrb[0].mxu0
    %3019 = vmatprep.mubr.f32.mxu0 0.0
    %3020 = vmatmul.mubr.f32.gmra.mrb[0].mxu0 %v2935
    %v3021 = vpop.f32.mrb[0].mxu0
    %v3022 = vadd.f32 0.0, %v3021
    %v3023 = vpop.f32.mrb[0].mxu0
    %3024 = vmatprep.mubr.f32.mxu0 0.0
    %3025 = vmatmul.mubr.f32.gmra.mrb[0].mxu0 %v2937
    %v3026 = vpop.f32.mrb[0].mxu0
    %v3027 = vadd.f32 0.0, %v3026
    %v3028 = vpop.f32.mrb[0].mxu0
    %3029 = vmatprep.mubr.f32.mxu0 0.0
    %3030 = vmatmul.mubr.f32.gmra.mrb[0].mxu0 %v2939
    %v3031 = vpop.f32.mrb[0].mxu0
    %v3032 = vadd.f32 0.0, %v3031
    %v3033 = vpop.f32.mrb[0].mxu0
    %3034 = vmatprep.mubr.f32.mxu0 0.0
    %3035 = vmatmul.mubr.f32.gmra.mrb[0].mxu0 %v2941
    %v3036 = vpop.f32.mrb[0].mxu0
    %v3037 = vadd.f32 0.0, %v3036
    %v3038 = vpop.f32.mrb[0].mxu0
    %3039 = vmatprep.mubr.f32.mxu0 0.0
    %3040 = vmatmul.mubr.f32.gmra.mrb[0].mxu0 %v2943
    %v3041 = vpop.f32.mrb[0].mxu0
    %v3042 = vadd.f32 0.0, %v3041
    %v3043 = vpop.f32.mrb[0].mxu0
    %3044 = vmatprep.mubr.f32.mxu0 0.0
    %3045 = vmatmul.mubr.f32.gmra.mrb[0].mxu0 %v2945
    %v3046 = vpop.f32.mrb[0].mxu0
    %v3047 = vadd.f32 0.0, %v3046
    %v3048 = vpop.f32.mrb[0].mxu0
    %3049 = vmatprep.mubr.f32.mxu0 0.0
    %3050 = vmatmul.mubr.f32.gmra.mrb[0].mxu0 %v2948
    %v3051 = vpop.f32.mrb[0].mxu0
    %v3052 = vadd.f32 0.0, %v3051
    %v3053 = vpop.f32.mrb[0].mxu0
    %3054 = vdwg.mxu0
    %v3055 = vadd.f32 %v2902, %v3017
    %v3056 = vadd.f32 %v2903, %v3022
    %v3057 = vadd.f32 %v2904, %v3027
    %v3058 = vadd.f32 %v2905, %v3032
    %v3059 = vadd.f32 %v2906, %v3037
    %v3060 = vadd.f32 %v2907, %v3042
    %v3061 = vadd.f32 %v2908, %v3047
    %v3062 = vadd.f32 %v2909, %v3052
    %v3063 = vrot.slane %v1982, 7
    %v3064 = vrot.slane %v1987, 7
    %v3065 = vsel %vm1401, %v3063, %v3064
    %v3066 = vrot.slane %v1992, 7
    %v3067 = vsel %vm1401, %v3064, %v3066
    %v3068 = vrot.slane %v1997, 7
    %v3069 = vsel %vm1401, %v3066, %v3068
    %v3070 = vrot.slane %v2002, 7
    %v3071 = vsel %vm1401, %v3068, %v3070
    %v3072 = vrot.slane %v2007, 7
    %v3073 = vsel %vm1401, %v3070, %v3072
    %v3074 = vrot.slane %v2012, 7
    %v3075 = vsel %vm1401, %v3072, %v3074
    %v3076 = vrot.slane %v2017, 7
    %v3077 = vsel %vm1401, %v3074, %v3076
    %v3080 = vsel %vm1401, %v3076, %v3063
    %s3081 = scalar_lea.vmem %s6, 224
    %v3082 = vld [vmem:[%s3081] sm:$0xff]
    %v3083 = vld [vmem:[%s3081 + $0x8] sm:$0xff]
    %v3084 = vld [vmem:[%s3081 + $0x10] sm:$0xff]
    %v3085 = vld [vmem:[%s3081 + $0x18] sm:$0xff]
    %v3086 = vsel %vm1679, %v3065, 0
    %v3088 = vsel %vm1679, %v3067, 0
    %v3090 = vsel %vm1679, %v3069, 0
    %v3092 = vsel %vm1679, %v3071, 0
    %v3094 = vsel %vm1679, %v3073, 0
    %v3096 = vsel %vm1679, %v3075, 0
    %v3098 = vsel %vm1679, %v3077, 0
    %v3101 = vsel %vm1679, %v3080, 0
    %3103 = vmatprep.subr.mxu0 0.0
    %3104 = vmatpush1.msra.mxu0 %v3082
    %3105 = vmatprep.subr.mxu0 0.0
    %3106 = vmatpush1.msra.mxu0 %v3083
    %3107 = vmatprep.subr.mxu0 0.0
    %3108 = vmatpush1.msra.mxu0 %v3084
    %3109 = vmatprep.subr.mxu0 0.0
    %3110 = vmatpush1.msra.mxu0 %v3085
    %3111 = vmatprep.subr.mxu0 0.0
    %3112 = vmatpush1.msra.mxu0 0.0
    %3113 = vmatprep.subr.mxu0 0.0
    %3114 = vmatpush1.msra.mxu0 0.0
    %3115 = vmatprep.subr.mxu0 0.0
    %3116 = vmatpush1.msra.mxu0 0.0
    %3117 = vmatprep.subr.mxu0 0.0
    %3118 = vmatpush1.msra.mxu0 0.0
    %3119 = vmatprep.subr.mxu0 0.0
    %3120 = vmatpush1.msra.mxu0 0.0
    %3121 = vmatprep.subr.mxu0 0.0
    %3122 = vmatpush1.msra.mxu0 0.0
    %3123 = vmatprep.subr.mxu0 0.0
    %3124 = vmatpush1.msra.mxu0 0.0
    %3125 = vmatprep.subr.mxu0 0.0
    %3126 = vmatpush1.msra.mxu0 0.0
    %3127 = vmatprep.subr.mxu0 0.0
    %3128 = vmatpush1.msra.mxu0 0.0
    %3129 = vmatprep.subr.mxu0 0.0
    %3130 = vmatpush1.msra.mxu0 0.0
    %3131 = vmatprep.subr.mxu0 0.0
    %3132 = vmatpush1.msra.mxu0 0.0
    %3133 = vmatprep.subr.mxu0 0.0
    %3134 = vmatpush1.msra.mxu0 0.0
    %3135 = vmatprep.subr.mxu0 0.0
    %3136 = vmatpush1.msra.mxu0 0.0
    %3137 = vmatprep.subr.mxu0 0.0
    %3138 = vmatpush1.msra.mxu0 0.0
    %3139 = vmatprep.subr.mxu0 0.0
    %3140 = vmatpush1.msra.mxu0 0.0
    %3141 = vmatprep.subr.mxu0 0.0
    %3142 = vmatpush1.msra.mxu0 0.0
    %3143 = vmatprep.subr.mxu0 0.0
    %3144 = vmatpush1.msra.mxu0 0.0
    %3145 = vmatprep.subr.mxu0 0.0
    %3146 = vmatpush1.msra.mxu0 0.0
    %3147 = vmatprep.subr.mxu0 0.0
    %3148 = vmatpush1.msra.mxu0 0.0
    %3149 = vmatprep.subr.mxu0 0.0
    %3150 = vmatpush1.msra.mxu0 0.0
    %3151 = vmatprep.subr.mxu0 0.0
    %3152 = vmatpush1.msra.mxu0 0.0
    %3153 = vmatprep.subr.mxu0 0.0
    %3154 = vmatpush1.msra.mxu0 0.0
    %3155 = vmatprep.subr.mxu0 0.0
    %3156 = vmatpush1.msra.mxu0 0.0
    %3157 = vmatprep.subr.mxu0 0.0
    %3158 = vmatpush1.msra.mxu0 0.0
    %3159 = vmatprep.subr.mxu0 0.0
    %3160 = vmatpush1.msra.mxu0 0.0
    %3161 = vmatprep.subr.mxu0 0.0
    %3162 = vmatpush1.msra.mxu0 0.0
    %3163 = vmatprep.subr.mxu0 0.0
    %3164 = vmatpush1.msra.mxu0 0.0
    %3165 = vmatprep.subr.mxu0 0.0
    %3166 = vmatpush1.msra.mxu0 0.0
    %3167 = vmatprep.mubr.f32.mxu0 0.0
    %3168 = vmatmul.mubr.f32.gmra.mrb[0].mxu0 %v3086
    %v3169 = vpop.f32.mrb[0].mxu0
    %v3170 = vadd.f32 0.0, %v3169
    %v3171 = vpop.f32.mrb[0].mxu0
    %3172 = vmatprep.mubr.f32.mxu0 0.0
    %3173 = vmatmul.mubr.f32.gmra.mrb[0].mxu0 %v3088
    %v3174 = vpop.f32.mrb[0].mxu0
    %v3175 = vadd.f32 0.0, %v3174
    %v3176 = vpop.f32.mrb[0].mxu0
    %3177 = vmatprep.mubr.f32.mxu0 0.0
    %3178 = vmatmul.mubr.f32.gmra.mrb[0].mxu0 %v3090
    %v3179 = vpop.f32.mrb[0].mxu0
    %v3180 = vadd.f32 0.0, %v3179
    %v3181 = vpop.f32.mrb[0].mxu0
    %3182 = vmatprep.mubr.f32.mxu0 0.0
    %3183 = vmatmul.mubr.f32.gmra.mrb[0].mxu0 %v3092
    %v3184 = vpop.f32.mrb[0].mxu0
    %v3185 = vadd.f32 0.0, %v3184
    %v3186 = vpop.f32.mrb[0].mxu0
    %3187 = vmatprep.mubr.f32.mxu0 0.0
    %3188 = vmatmul.mubr.f32.gmra.mrb[0].mxu0 %v3094
    %v3189 = vpop.f32.mrb[0].mxu0
    %v3190 = vadd.f32 0.0, %v3189
    %v3191 = vpop.f32.mrb[0].mxu0
    %3192 = vmatprep.mubr.f32.mxu0 0.0
    %3193 = vmatmul.mubr.f32.gmra.mrb[0].mxu0 %v3096
    %v3194 = vpop.f32.mrb[0].mxu0
    %v3195 = vadd.f32 0.0, %v3194
    %v3196 = vpop.f32.mrb[0].mxu0
    %3197 = vmatprep.mubr.f32.mxu0 0.0
    %3198 = vmatmul.mubr.f32.gmra.mrb[0].mxu0 %v3098
    %v3199 = vpop.f32.mrb[0].mxu0
    %v3200 = vadd.f32 0.0, %v3199
    %v3201 = vpop.f32.mrb[0].mxu0
    %3202 = vmatprep.mubr.f32.mxu0 0.0
    %3203 = vmatmul.mubr.f32.gmra.mrb[0].mxu0 %v3101
    %v3204 = vpop.f32.mrb[0].mxu0
    %v3205 = vadd.f32 0.0, %v3204
    %v3206 = vpop.f32.mrb[0].mxu0
    %3207 = vdwg.mxu0
    %v3208 = vadd.f32 %v3055, %v3170
    %v3209 = vadd.f32 %v3056, %v3175
    %v3210 = vadd.f32 %v3057, %v3180
    %v3211 = vadd.f32 %v3058, %v3185
    %v3212 = vadd.f32 %v3059, %v3190
    %v3213 = vadd.f32 %v3060, %v3195
    %v3214 = vadd.f32 %v3061, %v3200
    %v3215 = vadd.f32 %v3062, %v3205
    %v3216 = vld [vmem:[%s9] sm:$0xff]
    %v3217 = vld [vmem:[%s9 + $0x8] sm:$0xff]
    %v3218 = vld [vmem:[%s9 + $0x10] sm:$0xff]
    %v3219 = vld [vmem:[%s9 + $0x18] sm:$0xff]
    %v3220 = vld [vmem:[%s9 + $0x20] sm:$0xff]
    %v3221 = vld [vmem:[%s9 + $0x28] sm:$0xff]
    %v3222 = vld [vmem:[%s9 + $0x30] sm:$0xff]
    %v3223 = vld [vmem:[%s9 + $0x38] sm:$0xff]
    %3225 = vset.pattern.permute.xlu0 0
    %3226 = vperm.xlu0 %3225, %v3216
    %v3227 = vpop.permute.xlu0 %3226
    %3230 = vset.pattern.permute.xlu0 0
    %3231 = vperm.xlu0 %3230, %v3217
    %v3232 = vpop.permute.xlu0 %3231
    %3235 = vset.pattern.permute.xlu0 0
    %3236 = vperm.xlu0 %3235, %v3218
    %v3237 = vpop.permute.xlu0 %3236
    %3240 = vset.pattern.permute.xlu0 0
    %3241 = vperm.xlu0 %3240, %v3219
    %v3242 = vpop.permute.xlu0 %3241
    %3245 = vset.pattern.permute.xlu0 0
    %3246 = vperm.xlu0 %3245, %v3220
    %v3247 = vpop.permute.xlu0 %3246
    %3250 = vset.pattern.permute.xlu0 0
    %3251 = vperm.xlu0 %3250, %v3221
    %v3252 = vpop.permute.xlu0 %3251
    %3255 = vset.pattern.permute.xlu0 0
    %3256 = vperm.xlu0 %3255, %v3222
    %v3257 = vpop.permute.xlu0 %3256
    %3260 = vset.pattern.permute.xlu0 0
    %3261 = vperm.xlu0 %3260, %v3223
    %v3262 = vpop.permute.xlu0 %3261
    %v3264 = vmul.f32 %v3208, %v3227
    %v3265 = vmul.f32 %v3209, %v3232
    %v3266 = vmul.f32 %v3210, %v3237
    %v3267 = vmul.f32 %v3211, %v3242
    %v3268 = vmul.f32 %v3212, %v3247
    %v3269 = vmul.f32 %v3213, %v3252
    %v3270 = vmul.f32 %v3214, %v3257
    %v3271 = vmul.f32 %v3215, %v3262
    %vm3272 = vcmask 523264
    %v3273 = vsel %vm3272, %v3264, 0.0
    %v3274 = vsel %vm3272, %v3265, 0.0
    %v3275 = vadd.f32 %v3273, %v3274
    %v3276 = vsel %vm3272, %v3266, 0.0
    %v3277 = vadd.f32 %v3275, %v3276
    %v3278 = vsel %vm3272, %v3267, 0.0
    %v3279 = vadd.f32 %v3277, %v3278
    %v3280 = vsel %vm3272, %v3268, 0.0
    %v3281 = vadd.f32 %v3279, %v3280
    %v3282 = vsel %vm3272, %v3269, 0.0
    %v3283 = vadd.f32 %v3281, %v3282
    %v3284 = vsel %vm3272, %v3270, 0.0
    %v3285 = vadd.f32 %v3283, %v3284
    %v3286 = vsel %vm3272, %v3271, 0.0
    %v3287 = vadd.f32 %v3285, %v3286
    %v3288 = vrot.slane %v3287, 4
    %v3289 = vadd.f32 %v3287, %v3288
    %v3290 = vrot.slane %v3289, 2
    %v3291 = vadd.f32 %v3289, %v3290
    %v3292 = vrot.slane %v3291, 1
    %v3293 = vadd.f32 %v3291, %v3292
    %v3294 = vmul.f32 %v3293, 0.027777778
    %v3295 = vmul.f32 %v3264, %v3208
    %v3296 = vmul.f32 %v3265, %v3209
    %v3297 = vmul.f32 %v3266, %v3210
    %v3298 = vmul.f32 %v3267, %v3211
    %v3299 = vmul.f32 %v3268, %v3212
    %v3300 = vmul.f32 %v3269, %v3213
    %v3301 = vmul.f32 %v3270, %v3214
    %v3302 = vmul.f32 %v3271, %v3215
    %v3303 = vsel %vm3272, %v3295, 0.0
    %v3304 = vsel %vm3272, %v3296, 0.0
    %v3305 = vadd.f32 %v3303, %v3304
    %v3306 = vsel %vm3272, %v3297, 0.0
    %v3307 = vadd.f32 %v3305, %v3306
    %v3308 = vsel %vm3272, %v3298, 0.0
    %v3309 = vadd.f32 %v3307, %v3308
    %v3310 = vsel %vm3272, %v3299, 0.0
    %v3311 = vadd.f32 %v3309, %v3310
    %v3312 = vsel %vm3272, %v3300, 0.0
    %v3313 = vadd.f32 %v3311, %v3312
    %v3314 = vsel %vm3272, %v3301, 0.0
    %v3315 = vadd.f32 %v3313, %v3314
    %v3316 = vsel %vm3272, %v3302, 0.0
    %v3317 = vadd.f32 %v3315, %v3316
    %v3318 = vrot.slane %v3317, 4
    %v3319 = vadd.f32 %v3317, %v3318
    %v3320 = vrot.slane %v3319, 2
    %v3321 = vadd.f32 %v3319, %v3320
    %v3322 = vrot.slane %v3321, 1
    %v3323 = vadd.f32 %v3321, %v3322
    %v3324 = vmul.f32 %v3323, 0.027777778
    %v3325 = vmul.f32 %v3294, %v3294
    %v3326 = vsub.f32 %v3324, %v3325
    %v3327 = vld [vmem:[%s7] sm:$0x1]
    %v3328 = vadd.f32 %v3326, 1e-05
    %v3329 = vrsqrt.pop %v3328
    %v3330 = vmul.f32 %v3327, %v3329
    %v3331 = vld [vmem:[%s8] sm:$0x1]
    %v3332 = vmul.f32 %v3294, %v3330
    %v3333 = vsub.f32 %v3331, %v3332
    %v3335 = vlaneseq
    %v3336 = vshrl.u32 %v3335, 7
    %v3337 = vsub.s32 0, %v3336
    %v3338 = vrot.slane %v3330, %v3337
    %v3340 = vmul.f32 %v3208, %v3338
    %v3341 = vmul.f32 %v3209, %v3338
    %v3342 = vmul.f32 %v3210, %v3338
    %v3343 = vmul.f32 %v3211, %v3338
    %v3344 = vmul.f32 %v3212, %v3338
    %v3345 = vmul.f32 %v3213, %v3338
    %v3346 = vmul.f32 %v3214, %v3338
    %v3347 = vmul.f32 %v3215, %v3338
    %v3349 = vlaneseq
    %v3350 = vshrl.u32 %v3349, 7
    %v3351 = vsub.s32 0, %v3350
    %v3352 = vrot.slane %v3333, %v3351
    %v3354 = vadd.f32 %v3340, %v3352
    %v3355 = vadd.f32 %v3341, %v3352
    %v3356 = vadd.f32 %v3342, %v3352
    %v3357 = vadd.f32 %v3343, %v3352
    %v3358 = vadd.f32 %v3344, %v3352
    %v3359 = vadd.f32 %v3345, %v3352
    %v3360 = vadd.f32 %v3346, %v3352
    %v3361 = vadd.f32 %v3347, %v3352
    %v3362 = vmax.f32 %v3354, 0.0
    %v3363 = vmax.f32 %v3355, 0.0
    %v3364 = vmax.f32 %v3356, 0.0
    %v3365 = vmax.f32 %v3357, 0.0
    %v3366 = vmax.f32 %v3358, 0.0
    %v3367 = vmax.f32 %v3359, 0.0
    %v3368 = vmax.f32 %v3360, 0.0
    %v3369 = vmax.f32 %v3361, 0.0
    %v3370 = vmul.f32 %v3362, %v3227
    %v3371 = vmul.f32 %v3363, %v3232
    %v3372 = vmul.f32 %v3364, %v3237
    %v3373 = vmul.f32 %v3365, %v3242
    %v3374 = vmul.f32 %v3366, %v3247
    %v3375 = vmul.f32 %v3367, %v3252
    %v3376 = vmul.f32 %v3368, %v3257
    %v3377 = vmul.f32 %v3369, %v3262
    %v3386 = vrot.slane %v3370, 1
    %v3387 = vrot.slane %v3371, 1
    %v3388 = vsel %vm96, %v3386, %v3387
    %v3389 = vrot.slane %v3372, 1
    %v3390 = vsel %vm96, %v3387, %v3389
    %v3391 = vrot.slane %v3373, 1
    %v3392 = vsel %vm96, %v3389, %v3391
    %v3393 = vrot.slane %v3374, 1
    %v3394 = vsel %vm96, %v3391, %v3393
    %v3395 = vrot.slane %v3375, 1
    %v3396 = vsel %vm96, %v3393, %v3395
    %v3397 = vrot.slane %v3376, 1
    %v3398 = vsel %vm96, %v3395, %v3397
    %v3399 = vrot.slane %v3377, 1
    %v3400 = vsel %vm96, %v3397, %v3399
    %v3410 = vsel %vm96, %v3399, %v3386
    %v3411 = vmax.f32 %v3370, %v3388
    %v3412 = vmax.f32 %v3371, %v3390
    %v3413 = vmax.f32 %v3372, %v3392
    %v3414 = vmax.f32 %v3373, %v3394
    %v3415 = vmax.f32 %v3374, %v3396
    %v3416 = vmax.f32 %v3375, %v3398
    %v3417 = vmax.f32 %v3376, %v3400
    %v3418 = vmax.f32 %v3377, %v3410
    %v3419 = vld [vmem:[%s10] sm:$0xff]
    %v3420 = vld [vmem:[%s10 + $0x8] sm:$0xff]
    %v3421 = vld [vmem:[%s10 + $0x10] sm:$0xff]
    %v3422 = vld [vmem:[%s10 + $0x18] sm:$0xff]
    %v3423 = vld [vmem:[%s10 + $0x20] sm:$0xff]
    %v3424 = vld [vmem:[%s10 + $0x28] sm:$0xff]
    %v3426 = vsel %vm3272, %v3419, 0
    %v3429 = vsel %vm3272, %v3420, 0
    %v3432 = vsel %vm3272, %v3421, 0
    %v3435 = vsel %vm3272, %v3422, 0
    %v3438 = vsel %vm3272, %v3423, 0
    %v3441 = vsel %vm3272, %v3424, 0
    %3443 = vmatprep.subr.mxu0 0.0
    %3444 = vmatpush1.msra.mxu0 %v3411
    %3445 = vmatprep.subr.mxu0 0.0
    %3446 = vmatpush1.msra.mxu0 %v3412
    %3447 = vmatprep.subr.mxu0 0.0
    %3448 = vmatpush1.msra.mxu0 %v3413
    %3449 = vmatprep.subr.mxu0 0.0
    %3450 = vmatpush1.msra.mxu0 %v3414
    %3451 = vmatprep.subr.mxu0 0.0
    %3452 = vmatpush1.msra.mxu0 %v3415
    %3453 = vmatprep.subr.mxu0 0.0
    %3454 = vmatpush1.msra.mxu0 %v3416
    %3455 = vmatprep.subr.mxu0 0.0
    %3456 = vmatpush1.msra.mxu0 %v3417
    %3457 = vmatprep.subr.mxu0 0.0
    %3458 = vmatpush1.msra.mxu0 %v3418
    %3459 = vmatprep.subr.mxu0 0.0
    %3460 = vmatpush1.msra.mxu0 0.0
    %3461 = vmatprep.subr.mxu0 0.0
    %3462 = vmatpush1.msra.mxu0 0.0
    %3463 = vmatprep.subr.mxu0 0.0
    %3464 = vmatpush1.msra.mxu0 0.0
    %3465 = vmatprep.subr.mxu0 0.0
    %3466 = vmatpush1.msra.mxu0 0.0
    %3467 = vmatprep.subr.mxu0 0.0
    %3468 = vmatpush1.msra.mxu0 0.0
    %3469 = vmatprep.subr.mxu0 0.0
    %3470 = vmatpush1.msra.mxu0 0.0
    %3471 = vmatprep.subr.mxu0 0.0
    %3472 = vmatpush1.msra.mxu0 0.0
    %3473 = vmatprep.subr.mxu0 0.0
    %3474 = vmatpush1.msra.mxu0 0.0
    %3475 = vmatprep.subr.mxu0 0.0
    %3476 = vmatpush1.msra.mxu0 0.0
    %3477 = vmatprep.subr.mxu0 0.0
    %3478 = vmatpush1.msra.mxu0 0.0
    %3479 = vmatprep.subr.mxu0 0.0
    %3480 = vmatpush1.msra.mxu0 0.0
    %3481 = vmatprep.subr.mxu0 0.0
    %3482 = vmatpush1.msra.mxu0 0.0
    %3483 = vmatprep.subr.mxu0 0.0
    %3484 = vmatpush1.msra.mxu0 0.0
    %3485 = vmatprep.subr.mxu0 0.0
    %3486 = vmatpush1.msra.mxu0 0.0
    %3487 = vmatprep.subr.mxu0 0.0
    %3488 = vmatpush1.msra.mxu0 0.0
    %3489 = vmatprep.subr.mxu0 0.0
    %3490 = vmatpush1.msra.mxu0 0.0
    %3491 = vmatprep.subr.mxu0 0.0
    %3492 = vmatpush1.msra.mxu0 0.0
    %3493 = vmatprep.subr.mxu0 0.0
    %3494 = vmatpush1.msra.mxu0 0.0
    %3495 = vmatprep.subr.mxu0 0.0
    %3496 = vmatpush1.msra.mxu0 0.0
    %3497 = vmatprep.subr.mxu0 0.0
    %3498 = vmatpush1.msra.mxu0 0.0
    %3499 = vmatprep.subr.mxu0 0.0
    %3500 = vmatpush1.msra.mxu0 0.0
    %3501 = vmatprep.subr.mxu0 0.0
    %3502 = vmatpush1.msra.mxu0 0.0
    %3503 = vmatprep.subr.mxu0 0.0
    %3504 = vmatpush1.msra.mxu0 0.0
    %3505 = vmatprep.subr.mxu0 0.0
    %3506 = vmatpush1.msra.mxu0 0.0
    %3507 = vmatprep.mubr.f32.mxu0 0.0
    %3508 = vmatmul.mubr.f32.gmra.mrb[0].mxu0 %v3426
    %v3509 = vpop.f32.mrb[0].mxu0
    %v3510 = vadd.f32 0.0, %v3509
    %v3511 = vpop.f32.mrb[0].mxu0
    %3512 = vmatprep.mubr.f32.mxu0 0.0
    %3513 = vmatmul.mubr.f32.gmra.mrb[0].mxu0 %v3429
    %v3514 = vpop.f32.mrb[0].mxu0
    %v3515 = vadd.f32 0.0, %v3514
    %v3516 = vpop.f32.mrb[0].mxu0
    %3517 = vmatprep.mubr.f32.mxu0 0.0
    %3518 = vmatmul.mubr.f32.gmra.mrb[0].mxu0 %v3432
    %v3519 = vpop.f32.mrb[0].mxu0
    %v3520 = vadd.f32 0.0, %v3519
    %v3521 = vpop.f32.mrb[0].mxu0
    %3522 = vmatprep.mubr.f32.mxu0 0.0
    %3523 = vmatmul.mubr.f32.gmra.mrb[0].mxu0 %v3435
    %v3524 = vpop.f32.mrb[0].mxu0
    %v3525 = vadd.f32 0.0, %v3524
    %v3526 = vpop.f32.mrb[0].mxu0
    %3527 = vmatprep.mubr.f32.mxu0 0.0
    %3528 = vmatmul.mubr.f32.gmra.mrb[0].mxu0 %v3438
    %v3529 = vpop.f32.mrb[0].mxu0
    %v3530 = vadd.f32 0.0, %v3529
    %v3531 = vpop.f32.mrb[0].mxu0
    %3532 = vmatprep.mubr.f32.mxu0 0.0
    %3533 = vmatmul.mubr.f32.gmra.mrb[0].mxu0 %v3441
    %v3534 = vpop.f32.mrb[0].mxu0
    %v3535 = vadd.f32 0.0, %v3534
    %v3536 = vpop.f32.mrb[0].mxu0
    %3537 = vdwg.mxu0
    %v3538 = vld [vmem:[%s11] sm:$0xff]
    %v3539 = vld [vmem:[%s11 + $0x8] sm:$0xff]
    %v3540 = vld [vmem:[%s11 + $0x10] sm:$0xff]
    %v3541 = vld [vmem:[%s11 + $0x18] sm:$0xff]
    %v3542 = vld [vmem:[%s11 + $0x20] sm:$0xff]
    %v3543 = vld [vmem:[%s11 + $0x28] sm:$0xff]
    %v3544 = vld [vmem:[%s11 + $0x30] sm:$0xff]
    %v3545 = vld [vmem:[%s11 + $0x38] sm:$0xff]
    %v3552 = vrot.slane %v3510, 1
    %v3553 = vrot.slane %v3515, 1
    %v3554 = vsel %vm96, %v3552, %v3553
    %v3555 = vrot.slane %v3520, 1
    %v3556 = vsel %vm96, %v3553, %v3555
    %v3557 = vrot.slane %v3525, 1
    %v3558 = vsel %vm96, %v3555, %v3557
    %v3559 = vrot.slane %v3530, 1
    %v3560 = vsel %vm96, %v3557, %v3559
    %v3561 = vrot.slane %v3535, 1
    %v3562 = vsel %vm96, %v3559, %v3561
    %v3565 = vsel %vm96, %v3561, %v3552
    %s3566 = scalar_lea.vmem %s11, 64
    %v3567 = vld [vmem:[%s3566] sm:$0xff]
    %v3568 = vld [vmem:[%s3566 + $0x8] sm:$0xff]
    %v3569 = vld [vmem:[%s3566 + $0x10] sm:$0xff]
    %v3570 = vld [vmem:[%s3566 + $0x18] sm:$0xff]
    %v3571 = vld [vmem:[%s3566 + $0x20] sm:$0xff]
    %v3572 = vld [vmem:[%s3566 + $0x28] sm:$0xff]
    %v3573 = vld [vmem:[%s3566 + $0x30] sm:$0xff]
    %v3574 = vld [vmem:[%s3566 + $0x38] sm:$0xff]
    %v3575 = vsel %vm3272, %v3554, 0
    %v3577 = vsel %vm3272, %v3556, 0
    %v3579 = vsel %vm3272, %v3558, 0
    %v3581 = vsel %vm3272, %v3560, 0
    %v3583 = vsel %vm3272, %v3562, 0
    %v3586 = vsel %vm3272, %v3565, 0
    %3588 = vmatprep.subr.mxu0 0.0
    %3589 = vmatpush1.msra.mxu0 %v3567
    %3590 = vmatprep.subr.mxu0 0.0
    %3591 = vmatpush1.msra.mxu0 %v3568
    %3592 = vmatprep.subr.mxu0 0.0
    %3593 = vmatpush1.msra.mxu0 %v3569
    %3594 = vmatprep.subr.mxu0 0.0
    %3595 = vmatpush1.msra.mxu0 %v3570
    %3596 = vmatprep.subr.mxu0 0.0
    %3597 = vmatpush1.msra.mxu0 %v3571
    %3598 = vmatprep.subr.mxu0 0.0
    %3599 = vmatpush1.msra.mxu0 %v3572
    %3600 = vmatprep.subr.mxu0 0.0
    %3601 = vmatpush1.msra.mxu0 %v3573
    %3602 = vmatprep.subr.mxu0 0.0
    %3603 = vmatpush1.msra.mxu0 %v3574
    %3604 = vmatprep.subr.mxu0 0.0
    %3605 = vmatpush1.msra.mxu0 0.0
    %3606 = vmatprep.subr.mxu0 0.0
    %3607 = vmatpush1.msra.mxu0 0.0
    %3608 = vmatprep.subr.mxu0 0.0
    %3609 = vmatpush1.msra.mxu0 0.0
    %3610 = vmatprep.subr.mxu0 0.0
    %3611 = vmatpush1.msra.mxu0 0.0
    %3612 = vmatprep.subr.mxu0 0.0
    %3613 = vmatpush1.msra.mxu0 0.0
    %3614 = vmatprep.subr.mxu0 0.0
    %3615 = vmatpush1.msra.mxu0 0.0
    %3616 = vmatprep.subr.mxu0 0.0
    %3617 = vmatpush1.msra.mxu0 0.0
    %3618 = vmatprep.subr.mxu0 0.0
    %3619 = vmatpush1.msra.mxu0 0.0
    %3620 = vmatprep.subr.mxu0 0.0
    %3621 = vmatpush1.msra.mxu0 0.0
    %3622 = vmatprep.subr.mxu0 0.0
    %3623 = vmatpush1.msra.mxu0 0.0
    %3624 = vmatprep.subr.mxu0 0.0
    %3625 = vmatpush1.msra.mxu0 0.0
    %3626 = vmatprep.subr.mxu0 0.0
    %3627 = vmatpush1.msra.mxu0 0.0
    %3628 = vmatprep.subr.mxu0 0.0
    %3629 = vmatpush1.msra.mxu0 0.0
    %3630 = vmatprep.subr.mxu0 0.0
    %3631 = vmatpush1.msra.mxu0 0.0
    %3632 = vmatprep.subr.mxu0 0.0
    %3633 = vmatpush1.msra.mxu0 0.0
    %3634 = vmatprep.subr.mxu0 0.0
    %3635 = vmatpush1.msra.mxu0 0.0
    %3636 = vmatprep.subr.mxu0 0.0
    %3637 = vmatpush1.msra.mxu0 0.0
    %3638 = vmatprep.subr.mxu0 0.0
    %3639 = vmatpush1.msra.mxu0 0.0
    %3640 = vmatprep.subr.mxu0 0.0
    %3641 = vmatpush1.msra.mxu0 0.0
    %3642 = vmatprep.subr.mxu0 0.0
    %3643 = vmatpush1.msra.mxu0 0.0
    %3644 = vmatprep.subr.mxu0 0.0
    %3645 = vmatpush1.msra.mxu0 0.0
    %3646 = vmatprep.subr.mxu0 0.0
    %3647 = vmatpush1.msra.mxu0 0.0
    %3648 = vmatprep.subr.mxu0 0.0
    %3649 = vmatpush1.msra.mxu0 0.0
    %3650 = vmatprep.subr.mxu0 0.0
    %3651 = vmatpush1.msra.mxu0 0.0
    %3652 = vmatprep.mubr.f32.mxu0 0.0
    %3653 = vmatmul.mubr.f32.gmra.mrb[0].mxu0 %v3575
    %v3654 = vpop.f32.mrb[0].mxu0
    %v3655 = vadd.f32 0.0, %v3654
    %v3656 = vpop.f32.mrb[0].mxu0
    %3657 = vmatprep.mubr.f32.mxu0 0.0
    %3658 = vmatmul.mubr.f32.gmra.mrb[0].mxu0 %v3577
    %v3659 = vpop.f32.mrb[0].mxu0
    %v3660 = vadd.f32 0.0, %v3659
    %v3661 = vpop.f32.mrb[0].mxu0
    %3662 = vmatprep.mubr.f32.mxu0 0.0
    %3663 = vmatmul.mubr.f32.gmra.mrb[0].mxu0 %v3579
    %v3664 = vpop.f32.mrb[0].mxu0
    %v3665 = vadd.f32 0.0, %v3664
    %v3666 = vpop.f32.mrb[0].mxu0
    %3667 = vmatprep.mubr.f32.mxu0 0.0
    %3668 = vmatmul.mubr.f32.gmra.mrb[0].mxu0 %v3581
    %v3669 = vpop.f32.mrb[0].mxu0
    %v3670 = vadd.f32 0.0, %v3669
    %v3671 = vpop.f32.mrb[0].mxu0
    %3672 = vmatprep.mubr.f32.mxu0 0.0
    %3673 = vmatmul.mubr.f32.gmra.mrb[0].mxu0 %v3583
    %v3674 = vpop.f32.mrb[0].mxu0
    %v3675 = vadd.f32 0.0, %v3674
    %v3676 = vpop.f32.mrb[0].mxu0
    %3677 = vmatprep.mubr.f32.mxu0 0.0
    %3678 = vmatmul.mubr.f32.gmra.mrb[0].mxu0 %v3586
    %v3679 = vpop.f32.mrb[0].mxu0
    %v3680 = vadd.f32 0.0, %v3679
    %v3681 = vpop.f32.mrb[0].mxu0
    %3682 = vdwg.mxu0
    %v3683 = vsel %vm3272, %v3510, 0
    %v3685 = vsel %vm3272, %v3515, 0
    %v3687 = vsel %vm3272, %v3520, 0
    %v3689 = vsel %vm3272, %v3525, 0
    %v3691 = vsel %vm3272, %v3530, 0
    %v3693 = vsel %vm3272, %v3535, 0
    %3695 = vmatprep.subr.mxu0 0.0
    %3696 = vmatpush1.msra.mxu0 %v3538
    %3697 = vmatprep.subr.mxu0 0.0
    %3698 = vmatpush1.msra.mxu0 %v3539
    %3699 = vmatprep.subr.mxu0 0.0
    %3700 = vmatpush1.msra.mxu0 %v3540
    %3701 = vmatprep.subr.mxu0 0.0
    %3702 = vmatpush1.msra.mxu0 %v3541
    %3703 = vmatprep.subr.mxu0 0.0
    %3704 = vmatpush1.msra.mxu0 %v3542
    %3705 = vmatprep.subr.mxu0 0.0
    %3706 = vmatpush1.msra.mxu0 %v3543
    %3707 = vmatprep.subr.mxu0 0.0
    %3708 = vmatpush1.msra.mxu0 %v3544
    %3709 = vmatprep.subr.mxu0 0.0
    %3710 = vmatpush1.msra.mxu0 %v3545
    %3711 = vmatprep.subr.mxu0 0.0
    %3712 = vmatpush1.msra.mxu0 0.0
    %3713 = vmatprep.subr.mxu0 0.0
    %3714 = vmatpush1.msra.mxu0 0.0
    %3715 = vmatprep.subr.mxu0 0.0
    %3716 = vmatpush1.msra.mxu0 0.0
    %3717 = vmatprep.subr.mxu0 0.0
    %3718 = vmatpush1.msra.mxu0 0.0
    %3719 = vmatprep.subr.mxu0 0.0
    %3720 = vmatpush1.msra.mxu0 0.0
    %3721 = vmatprep.subr.mxu0 0.0
    %3722 = vmatpush1.msra.mxu0 0.0
    %3723 = vmatprep.subr.mxu0 0.0
    %3724 = vmatpush1.msra.mxu0 0.0
    %3725 = vmatprep.subr.mxu0 0.0
    %3726 = vmatpush1.msra.mxu0 0.0
    %3727 = vmatprep.subr.mxu0 0.0
    %3728 = vmatpush1.msra.mxu0 0.0
    %3729 = vmatprep.subr.mxu0 0.0
    %3730 = vmatpush1.msra.mxu0 0.0
    %3731 = vmatprep.subr.mxu0 0.0
    %3732 = vmatpush1.msra.mxu0 0.0
    %3733 = vmatprep.subr.mxu0 0.0
    %3734 = vmatpush1.msra.mxu0 0.0
    %3735 = vmatprep.subr.mxu0 0.0
    %3736 = vmatpush1.msra.mxu0 0.0
    %3737 = vmatprep.subr.mxu0 0.0
    %3738 = vmatpush1.msra.mxu0 0.0
    %3739 = vmatprep.subr.mxu0 0.0
    %3740 = vmatpush1.msra.mxu0 0.0
    %3741 = vmatprep.subr.mxu0 0.0
    %3742 = vmatpush1.msra.mxu0 0.0
    %3743 = vmatprep.subr.mxu0 0.0
    %3744 = vmatpush1.msra.mxu0 0.0
    %3745 = vmatprep.subr.mxu0 0.0
    %3746 = vmatpush1.msra.mxu0 0.0
    %3747 = vmatprep.subr.mxu0 0.0
    %3748 = vmatpush1.msra.mxu0 0.0
    %3749 = vmatprep.subr.mxu0 0.0
    %3750 = vmatpush1.msra.mxu0 0.0
    %3751 = vmatprep.subr.mxu0 0.0
    %3752 = vmatpush1.msra.mxu0 0.0
    %3753 = vmatprep.subr.mxu0 0.0
    %3754 = vmatpush1.msra.mxu0 0.0
    %3755 = vmatprep.subr.mxu0 0.0
    %3756 = vmatpush1.msra.mxu0 0.0
    %3757 = vmatprep.subr.mxu0 0.0
    %3758 = vmatpush1.msra.mxu0 0.0
    %3759 = vmatprep.mubr.f32.mxu0 0.0
    %3760 = vmatmul.mubr.f32.gmra.mrb[0].mxu0 %v3683
    %v3761 = vpop.f32.mrb[0].mxu0
    %v3762 = vadd.f32 %v3655, %v3761
    %v3763 = vpop.f32.mrb[0].mxu0
    %3764 = vmatprep.mubr.f32.mxu0 0.0
    %3765 = vmatmul.mubr.f32.gmra.mrb[0].mxu0 %v3685
    %v3766 = vpop.f32.mrb[0].mxu0
    %v3767 = vadd.f32 %v3660, %v3766
    %v3768 = vpop.f32.mrb[0].mxu0
    %3769 = vmatprep.mubr.f32.mxu0 0.0
    %3770 = vmatmul.mubr.f32.gmra.mrb[0].mxu0 %v3687
    %v3771 = vpop.f32.mrb[0].mxu0
    %v3772 = vadd.f32 %v3665, %v3771
    %v3773 = vpop.f32.mrb[0].mxu0
    %3774 = vmatprep.mubr.f32.mxu0 0.0
    %3775 = vmatmul.mubr.f32.gmra.mrb[0].mxu0 %v3689
    %v3776 = vpop.f32.mrb[0].mxu0
    %v3777 = vadd.f32 %v3670, %v3776
    %v3778 = vpop.f32.mrb[0].mxu0
    %3779 = vmatprep.mubr.f32.mxu0 0.0
    %3780 = vmatmul.mubr.f32.gmra.mrb[0].mxu0 %v3691
    %v3781 = vpop.f32.mrb[0].mxu0
    %v3782 = vadd.f32 %v3675, %v3781
    %v3783 = vpop.f32.mrb[0].mxu0
    %3784 = vmatprep.mubr.f32.mxu0 0.0
    %3785 = vmatmul.mubr.f32.gmra.mrb[0].mxu0 %v3693
    %v3786 = vpop.f32.mrb[0].mxu0
    %v3787 = vadd.f32 %v3680, %v3786
    %v3788 = vpop.f32.mrb[0].mxu0
    %3789 = vdwg.mxu0
    %v3790 = vrot.slane %v3510, 2
    %v3791 = vrot.slane %v3515, 2
    %v3792 = vsel %vm432, %v3790, %v3791
    %v3793 = vrot.slane %v3520, 2
    %v3794 = vsel %vm432, %v3791, %v3793
    %v3795 = vrot.slane %v3525, 2
    %v3796 = vsel %vm432, %v3793, %v3795
    %v3797 = vrot.slane %v3530, 2
    %v3798 = vsel %vm432, %v3795, %v3797
    %v3799 = vrot.slane %v3535, 2
    %v3800 = vsel %vm432, %v3797, %v3799
    %v3803 = vsel %vm432, %v3799, %v3790
    %s3804 = scalar_lea.vmem %s11, 128
    %v3805 = vld [vmem:[%s3804] sm:$0xff]
    %v3806 = vld [vmem:[%s3804 + $0x8] sm:$0xff]
    %v3807 = vld [vmem:[%s3804 + $0x10] sm:$0xff]
    %v3808 = vld [vmem:[%s3804 + $0x18] sm:$0xff]
    %v3809 = vld [vmem:[%s3804 + $0x20] sm:$0xff]
    %v3810 = vld [vmem:[%s3804 + $0x28] sm:$0xff]
    %v3811 = vld [vmem:[%s3804 + $0x30] sm:$0xff]
    %v3812 = vld [vmem:[%s3804 + $0x38] sm:$0xff]
    %v3813 = vsel %vm3272, %v3792, 0
    %v3815 = vsel %vm3272, %v3794, 0
    %v3817 = vsel %vm3272, %v3796, 0
    %v3819 = vsel %vm3272, %v3798, 0
    %v3821 = vsel %vm3272, %v3800, 0
    %v3824 = vsel %vm3272, %v3803, 0
    %3826 = vmatprep.subr.mxu0 0.0
    %3827 = vmatpush1.msra.mxu0 %v3805
    %3828 = vmatprep.subr.mxu0 0.0
    %3829 = vmatpush1.msra.mxu0 %v3806
    %3830 = vmatprep.subr.mxu0 0.0
    %3831 = vmatpush1.msra.mxu0 %v3807
    %3832 = vmatprep.subr.mxu0 0.0
    %3833 = vmatpush1.msra.mxu0 %v3808
    %3834 = vmatprep.subr.mxu0 0.0
    %3835 = vmatpush1.msra.mxu0 %v3809
    %3836 = vmatprep.subr.mxu0 0.0
    %3837 = vmatpush1.msra.mxu0 %v3810
    %3838 = vmatprep.subr.mxu0 0.0
    %3839 = vmatpush1.msra.mxu0 %v3811
    %3840 = vmatprep.subr.mxu0 0.0
    %3841 = vmatpush1.msra.mxu0 %v3812
    %3842 = vmatprep.subr.mxu0 0.0
    %3843 = vmatpush1.msra.mxu0 0.0
    %3844 = vmatprep.subr.mxu0 0.0
    %3845 = vmatpush1.msra.mxu0 0.0
    %3846 = vmatprep.subr.mxu0 0.0
    %3847 = vmatpush1.msra.mxu0 0.0
    %3848 = vmatprep.subr.mxu0 0.0
    %3849 = vmatpush1.msra.mxu0 0.0
    %3850 = vmatprep.subr.mxu0 0.0
    %3851 = vmatpush1.msra.mxu0 0.0
    %3852 = vmatprep.subr.mxu0 0.0
    %3853 = vmatpush1.msra.mxu0 0.0
    %3854 = vmatprep.subr.mxu0 0.0
    %3855 = vmatpush1.msra.mxu0 0.0
    %3856 = vmatprep.subr.mxu0 0.0
    %3857 = vmatpush1.msra.mxu0 0.0
    %3858 = vmatprep.subr.mxu0 0.0
    %3859 = vmatpush1.msra.mxu0 0.0
    %3860 = vmatprep.subr.mxu0 0.0
    %3861 = vmatpush1.msra.mxu0 0.0
    %3862 = vmatprep.subr.mxu0 0.0
    %3863 = vmatpush1.msra.mxu0 0.0
    %3864 = vmatprep.subr.mxu0 0.0
    %3865 = vmatpush1.msra.mxu0 0.0
    %3866 = vmatprep.subr.mxu0 0.0
    %3867 = vmatpush1.msra.mxu0 0.0
    %3868 = vmatprep.subr.mxu0 0.0
    %3869 = vmatpush1.msra.mxu0 0.0
    %3870 = vmatprep.subr.mxu0 0.0
    %3871 = vmatpush1.msra.mxu0 0.0
    %3872 = vmatprep.subr.mxu0 0.0
    %3873 = vmatpush1.msra.mxu0 0.0
    %3874 = vmatprep.subr.mxu0 0.0
    %3875 = vmatpush1.msra.mxu0 0.0
    %3876 = vmatprep.subr.mxu0 0.0
    %3877 = vmatpush1.msra.mxu0 0.0
    %3878 = vmatprep.subr.mxu0 0.0
    %3879 = vmatpush1.msra.mxu0 0.0
    %3880 = vmatprep.subr.mxu0 0.0
    %3881 = vmatpush1.msra.mxu0 0.0
    %3882 = vmatprep.subr.mxu0 0.0
    %3883 = vmatpush1.msra.mxu0 0.0
    %3884 = vmatprep.subr.mxu0 0.0
    %3885 = vmatpush1.msra.mxu0 0.0
    %3886 = vmatprep.subr.mxu0 0.0
    %3887 = vmatpush1.msra.mxu0 0.0
    %3888 = vmatprep.subr.mxu0 0.0
    %3889 = vmatpush1.msra.mxu0 0.0
    %3890 = vmatprep.mubr.f32.mxu0 0.0
    %3891 = vmatmul.mubr.f32.gmra.mrb[0].mxu0 %v3813
    %v3892 = vpop.f32.mrb[0].mxu0
    %v3893 = vadd.f32 0.0, %v3892
    %v3894 = vpop.f32.mrb[0].mxu0
    %3895 = vmatprep.mubr.f32.mxu0 0.0
    %3896 = vmatmul.mubr.f32.gmra.mrb[0].mxu0 %v3815
    %v3897 = vpop.f32.mrb[0].mxu0
    %v3898 = vadd.f32 0.0, %v3897
    %v3899 = vpop.f32.mrb[0].mxu0
    %3900 = vmatprep.mubr.f32.mxu0 0.0
    %3901 = vmatmul.mubr.f32.gmra.mrb[0].mxu0 %v3817
    %v3902 = vpop.f32.mrb[0].mxu0
    %v3903 = vadd.f32 0.0, %v3902
    %v3904 = vpop.f32.mrb[0].mxu0
    %3905 = vmatprep.mubr.f32.mxu0 0.0
    %3906 = vmatmul.mubr.f32.gmra.mrb[0].mxu0 %v3819
    %v3907 = vpop.f32.mrb[0].mxu0
    %v3908 = vadd.f32 0.0, %v3907
    %v3909 = vpop.f32.mrb[0].mxu0
    %3910 = vmatprep.mubr.f32.mxu0 0.0
    %3911 = vmatmul.mubr.f32.gmra.mrb[0].mxu0 %v3821
    %v3912 = vpop.f32.mrb[0].mxu0
    %v3913 = vadd.f32 0.0, %v3912
    %v3914 = vpop.f32.mrb[0].mxu0
    %3915 = vmatprep.mubr.f32.mxu0 0.0
    %3916 = vmatmul.mubr.f32.gmra.mrb[0].mxu0 %v3824
    %v3917 = vpop.f32.mrb[0].mxu0
    %v3918 = vadd.f32 0.0, %v3917
    %v3919 = vpop.f32.mrb[0].mxu0
    %3920 = vdwg.mxu0
    %v3921 = vadd.f32 %v3762, %v3893
    %v3922 = vadd.f32 %v3767, %v3898
    %v3923 = vadd.f32 %v3772, %v3903
    %v3924 = vadd.f32 %v3777, %v3908
    %v3925 = vadd.f32 %v3782, %v3913
    %v3926 = vadd.f32 %v3787, %v3918
    %v3927 = vrot.slane %v3510, 3
    %v3928 = vrot.slane %v3515, 3
    %v3929 = vsel %vm626, %v3927, %v3928
    %v3930 = vrot.slane %v3520, 3
    %v3931 = vsel %vm626, %v3928, %v3930
    %v3932 = vrot.slane %v3525, 3
    %v3933 = vsel %vm626, %v3930, %v3932
    %v3934 = vrot.slane %v3530, 3
    %v3935 = vsel %vm626, %v3932, %v3934
    %v3936 = vrot.slane %v3535, 3
    %v3937 = vsel %vm626, %v3934, %v3936
    %v3940 = vsel %vm626, %v3936, %v3927
    %s3941 = scalar_lea.vmem %s11, 192
    %v3942 = vld [vmem:[%s3941] sm:$0xff]
    %v3943 = vld [vmem:[%s3941 + $0x8] sm:$0xff]
    %v3944 = vld [vmem:[%s3941 + $0x10] sm:$0xff]
    %v3945 = vld [vmem:[%s3941 + $0x18] sm:$0xff]
    %v3946 = vld [vmem:[%s3941 + $0x20] sm:$0xff]
    %v3947 = vld [vmem:[%s3941 + $0x28] sm:$0xff]
    %v3948 = vld [vmem:[%s3941 + $0x30] sm:$0xff]
    %v3949 = vld [vmem:[%s3941 + $0x38] sm:$0xff]
    %v3950 = vsel %vm3272, %v3929, 0
    %v3952 = vsel %vm3272, %v3931, 0
    %v3954 = vsel %vm3272, %v3933, 0
    %v3956 = vsel %vm3272, %v3935, 0
    %v3958 = vsel %vm3272, %v3937, 0
    %v3961 = vsel %vm3272, %v3940, 0
    %3963 = vmatprep.subr.mxu0 0.0
    %3964 = vmatpush1.msra.mxu0 %v3942
    %3965 = vmatprep.subr.mxu0 0.0
    %3966 = vmatpush1.msra.mxu0 %v3943
    %3967 = vmatprep.subr.mxu0 0.0
    %3968 = vmatpush1.msra.mxu0 %v3944
    %3969 = vmatprep.subr.mxu0 0.0
    %3970 = vmatpush1.msra.mxu0 %v3945
    %3971 = vmatprep.subr.mxu0 0.0
    %3972 = vmatpush1.msra.mxu0 %v3946
    %3973 = vmatprep.subr.mxu0 0.0
    %3974 = vmatpush1.msra.mxu0 %v3947
    %3975 = vmatprep.subr.mxu0 0.0
    %3976 = vmatpush1.msra.mxu0 %v3948
    %3977 = vmatprep.subr.mxu0 0.0
    %3978 = vmatpush1.msra.mxu0 %v3949
    %3979 = vmatprep.subr.mxu0 0.0
    %3980 = vmatpush1.msra.mxu0 0.0
    %3981 = vmatprep.subr.mxu0 0.0
    %3982 = vmatpush1.msra.mxu0 0.0
    %3983 = vmatprep.subr.mxu0 0.0
    %3984 = vmatpush1.msra.mxu0 0.0
    %3985 = vmatprep.subr.mxu0 0.0
    %3986 = vmatpush1.msra.mxu0 0.0
    %3987 = vmatprep.subr.mxu0 0.0
    %3988 = vmatpush1.msra.mxu0 0.0
    %3989 = vmatprep.subr.mxu0 0.0
    %3990 = vmatpush1.msra.mxu0 0.0
    %3991 = vmatprep.subr.mxu0 0.0
    %3992 = vmatpush1.msra.mxu0 0.0
    %3993 = vmatprep.subr.mxu0 0.0
    %3994 = vmatpush1.msra.mxu0 0.0
    %3995 = vmatprep.subr.mxu0 0.0
    %3996 = vmatpush1.msra.mxu0 0.0
    %3997 = vmatprep.subr.mxu0 0.0
    %3998 = vmatpush1.msra.mxu0 0.0
    %3999 = vmatprep.subr.mxu0 0.0
    %4000 = vmatpush1.msra.mxu0 0.0
    %4001 = vmatprep.subr.mxu0 0.0
    %4002 = vmatpush1.msra.mxu0 0.0
    %4003 = vmatprep.subr.mxu0 0.0
    %4004 = vmatpush1.msra.mxu0 0.0
    %4005 = vmatprep.subr.mxu0 0.0
    %4006 = vmatpush1.msra.mxu0 0.0
    %4007 = vmatprep.subr.mxu0 0.0
    %4008 = vmatpush1.msra.mxu0 0.0
    %4009 = vmatprep.subr.mxu0 0.0
    %4010 = vmatpush1.msra.mxu0 0.0
    %4011 = vmatprep.subr.mxu0 0.0
    %4012 = vmatpush1.msra.mxu0 0.0
    %4013 = vmatprep.subr.mxu0 0.0
    %4014 = vmatpush1.msra.mxu0 0.0
    %4015 = vmatprep.subr.mxu0 0.0
    %4016 = vmatpush1.msra.mxu0 0.0
    %4017 = vmatprep.subr.mxu0 0.0
    %4018 = vmatpush1.msra.mxu0 0.0
    %4019 = vmatprep.subr.mxu0 0.0
    %4020 = vmatpush1.msra.mxu0 0.0
    %4021 = vmatprep.subr.mxu0 0.0
    %4022 = vmatpush1.msra.mxu0 0.0
    %4023 = vmatprep.subr.mxu0 0.0
    %4024 = vmatpush1.msra.mxu0 0.0
    %4025 = vmatprep.subr.mxu0 0.0
    %4026 = vmatpush1.msra.mxu0 0.0
    %4027 = vmatprep.mubr.f32.mxu0 0.0
    %4028 = vmatmul.mubr.f32.gmra.mrb[0].mxu0 %v3950
    %v4029 = vpop.f32.mrb[0].mxu0
    %v4030 = vadd.f32 0.0, %v4029
    %v4031 = vpop.f32.mrb[0].mxu0
    %4032 = vmatprep.mubr.f32.mxu0 0.0
    %4033 = vmatmul.mubr.f32.gmra.mrb[0].mxu0 %v3952
    %v4034 = vpop.f32.mrb[0].mxu0
    %v4035 = vadd.f32 0.0, %v4034
    %v4036 = vpop.f32.mrb[0].mxu0
    %4037 = vmatprep.mubr.f32.mxu0 0.0
    %4038 = vmatmul.mubr.f32.gmra.mrb[0].mxu0 %v3954
    %v4039 = vpop.f32.mrb[0].mxu0
    %v4040 = vadd.f32 0.0, %v4039
    %v4041 = vpop.f32.mrb[0].mxu0
    %4042 = vmatprep.mubr.f32.mxu0 0.0
    %4043 = vmatmul.mubr.f32.gmra.mrb[0].mxu0 %v3956
    %v4044 = vpop.f32.mrb[0].mxu0
    %v4045 = vadd.f32 0.0, %v4044
    %v4046 = vpop.f32.mrb[0].mxu0
    %4047 = vmatprep.mubr.f32.mxu0 0.0
    %4048 = vmatmul.mubr.f32.gmra.mrb[0].mxu0 %v3958
    %v4049 = vpop.f32.mrb[0].mxu0
    %v4050 = vadd.f32 0.0, %v4049
    %v4051 = vpop.f32.mrb[0].mxu0
    %4052 = vmatprep.mubr.f32.mxu0 0.0
    %4053 = vmatmul.mubr.f32.gmra.mrb[0].mxu0 %v3961
    %v4054 = vpop.f32.mrb[0].mxu0
    %v4055 = vadd.f32 0.0, %v4054
    %v4056 = vpop.f32.mrb[0].mxu0
    %4057 = vdwg.mxu0
    %v4058 = vadd.f32 %v3921, %v4030
    %v4059 = vadd.f32 %v3922, %v4035
    %v4060 = vadd.f32 %v3923, %v4040
    %v4061 = vadd.f32 %v3924, %v4045
    %v4062 = vadd.f32 %v3925, %v4050
    %v4063 = vadd.f32 %v3926, %v4055
    %v4064 = vrot.slane %v3510, 4
    %v4065 = vrot.slane %v3515, 4
    %v4066 = vsel %vm151, %v4064, %v4065
    %v4067 = vrot.slane %v3520, 4
    %v4068 = vsel %vm151, %v4065, %v4067
    %v4069 = vrot.slane %v3525, 4
    %v4070 = vsel %vm151, %v4067, %v4069
    %v4071 = vrot.slane %v3530, 4
    %v4072 = vsel %vm151, %v4069, %v4071
    %v4073 = vrot.slane %v3535, 4
    %v4074 = vsel %vm151, %v4071, %v4073
    %v4077 = vsel %vm151, %v4073, %v4064
    %s4078 = scalar_lea.vmem %s11, 256
    %v4079 = vld [vmem:[%s4078] sm:$0xff]
    %v4080 = vld [vmem:[%s4078 + $0x8] sm:$0xff]
    %v4081 = vld [vmem:[%s4078 + $0x10] sm:$0xff]
    %v4082 = vld [vmem:[%s4078 + $0x18] sm:$0xff]
    %v4083 = vld [vmem:[%s4078 + $0x20] sm:$0xff]
    %v4084 = vld [vmem:[%s4078 + $0x28] sm:$0xff]
    %v4085 = vld [vmem:[%s4078 + $0x30] sm:$0xff]
    %v4086 = vld [vmem:[%s4078 + $0x38] sm:$0xff]
    %v4087 = vsel %vm3272, %v4066, 0
    %v4089 = vsel %vm3272, %v4068, 0
    %v4091 = vsel %vm3272, %v4070, 0
    %v4093 = vsel %vm3272, %v4072, 0
    %v4095 = vsel %vm3272, %v4074, 0
    %v4098 = vsel %vm3272, %v4077, 0
    %4100 = vmatprep.subr.mxu0 0.0
    %4101 = vmatpush1.msra.mxu0 %v4079
    %4102 = vmatprep.subr.mxu0 0.0
    %4103 = vmatpush1.msra.mxu0 %v4080
    %4104 = vmatprep.subr.mxu0 0.0
    %4105 = vmatpush1.msra.mxu0 %v4081
    %4106 = vmatprep.subr.mxu0 0.0
    %4107 = vmatpush1.msra.mxu0 %v4082
    %4108 = vmatprep.subr.mxu0 0.0
    %4109 = vmatpush1.msra.mxu0 %v4083
    %4110 = vmatprep.subr.mxu0 0.0
    %4111 = vmatpush1.msra.mxu0 %v4084
    %4112 = vmatprep.subr.mxu0 0.0
    %4113 = vmatpush1.msra.mxu0 %v4085
    %4114 = vmatprep.subr.mxu0 0.0
    %4115 = vmatpush1.msra.mxu0 %v4086
    %4116 = vmatprep.subr.mxu0 0.0
    %4117 = vmatpush1.msra.mxu0 0.0
    %4118 = vmatprep.subr.mxu0 0.0
    %4119 = vmatpush1.msra.mxu0 0.0
    %4120 = vmatprep.subr.mxu0 0.0
    %4121 = vmatpush1.msra.mxu0 0.0
    %4122 = vmatprep.subr.mxu0 0.0
    %4123 = vmatpush1.msra.mxu0 0.0
    %4124 = vmatprep.subr.mxu0 0.0
    %4125 = vmatpush1.msra.mxu0 0.0
    %4126 = vmatprep.subr.mxu0 0.0
    %4127 = vmatpush1.msra.mxu0 0.0
    %4128 = vmatprep.subr.mxu0 0.0
    %4129 = vmatpush1.msra.mxu0 0.0
    %4130 = vmatprep.subr.mxu0 0.0
    %4131 = vmatpush1.msra.mxu0 0.0
    %4132 = vmatprep.subr.mxu0 0.0
    %4133 = vmatpush1.msra.mxu0 0.0
    %4134 = vmatprep.subr.mxu0 0.0
    %4135 = vmatpush1.msra.mxu0 0.0
    %4136 = vmatprep.subr.mxu0 0.0
    %4137 = vmatpush1.msra.mxu0 0.0
    %4138 = vmatprep.subr.mxu0 0.0
    %4139 = vmatpush1.msra.mxu0 0.0
    %4140 = vmatprep.subr.mxu0 0.0
    %4141 = vmatpush1.msra.mxu0 0.0
    %4142 = vmatprep.subr.mxu0 0.0
    %4143 = vmatpush1.msra.mxu0 0.0
    %4144 = vmatprep.subr.mxu0 0.0
    %4145 = vmatpush1.msra.mxu0 0.0
    %4146 = vmatprep.subr.mxu0 0.0
    %4147 = vmatpush1.msra.mxu0 0.0
    %4148 = vmatprep.subr.mxu0 0.0
    %4149 = vmatpush1.msra.mxu0 0.0
    %4150 = vmatprep.subr.mxu0 0.0
    %4151 = vmatpush1.msra.mxu0 0.0
    %4152 = vmatprep.subr.mxu0 0.0
    %4153 = vmatpush1.msra.mxu0 0.0
    %4154 = vmatprep.subr.mxu0 0.0
    %4155 = vmatpush1.msra.mxu0 0.0
    %4156 = vmatprep.subr.mxu0 0.0
    %4157 = vmatpush1.msra.mxu0 0.0
    %4158 = vmatprep.subr.mxu0 0.0
    %4159 = vmatpush1.msra.mxu0 0.0
    %4160 = vmatprep.subr.mxu0 0.0
    %4161 = vmatpush1.msra.mxu0 0.0
    %4162 = vmatprep.subr.mxu0 0.0
    %4163 = vmatpush1.msra.mxu0 0.0
    %4164 = vmatprep.mubr.f32.mxu0 0.0
    %4165 = vmatmul.mubr.f32.gmra.mrb[0].mxu0 %v4087
    %v4166 = vpop.f32.mrb[0].mxu0
    %v4167 = vadd.f32 0.0, %v4166
    %v4168 = vpop.f32.mrb[0].mxu0
    %4169 = vmatprep.mubr.f32.mxu0 0.0
    %4170 = vmatmul.mubr.f32.gmra.mrb[0].mxu0 %v4089
    %v4171 = vpop.f32.mrb[0].mxu0
    %v4172 = vadd.f32 0.0, %v4171
    %v4173 = vpop.f32.mrb[0].mxu0
    %4174 = vmatprep.mubr.f32.mxu0 0.0
    %4175 = vmatmul.mubr.f32.gmra.mrb[0].mxu0 %v4091
    %v4176 = vpop.f32.mrb[0].mxu0
    %v4177 = vadd.f32 0.0, %v4176
    %v4178 = vpop.f32.mrb[0].mxu0
    %4179 = vmatprep.mubr.f32.mxu0 0.0
    %4180 = vmatmul.mubr.f32.gmra.mrb[0].mxu0 %v4093
    %v4181 = vpop.f32.mrb[0].mxu0
    %v4182 = vadd.f32 0.0, %v4181
    %v4183 = vpop.f32.mrb[0].mxu0
    %4184 = vmatprep.mubr.f32.mxu0 0.0
    %4185 = vmatmul.mubr.f32.gmra.mrb[0].mxu0 %v4095
    %v4186 = vpop.f32.mrb[0].mxu0
    %v4187 = vadd.f32 0.0, %v4186
    %v4188 = vpop.f32.mrb[0].mxu0
    %4189 = vmatprep.mubr.f32.mxu0 0.0
    %4190 = vmatmul.mubr.f32.gmra.mrb[0].mxu0 %v4098
    %v4191 = vpop.f32.mrb[0].mxu0
    %v4192 = vadd.f32 0.0, %v4191
    %v4193 = vpop.f32.mrb[0].mxu0
    %4194 = vdwg.mxu0
    %v4195 = vadd.f32 %v4058, %v4167
    %v4196 = vadd.f32 %v4059, %v4172
    %v4197 = vadd.f32 %v4060, %v4177
    %v4198 = vadd.f32 %v4061, %v4182
    %v4199 = vadd.f32 %v4062, %v4187
    %v4200 = vadd.f32 %v4063, %v4192
    %v4201 = vrot.slane %v3510, 5
    %v4202 = vrot.slane %v3515, 5
    %v4203 = vsel %vm1013, %v4201, %v4202
    %v4204 = vrot.slane %v3520, 5
    %v4205 = vsel %vm1013, %v4202, %v4204
    %v4206 = vrot.slane %v3525, 5
    %v4207 = vsel %vm1013, %v4204, %v4206
    %v4208 = vrot.slane %v3530, 5
    %v4209 = vsel %vm1013, %v4206, %v4208
    %v4210 = vrot.slane %v3535, 5
    %v4211 = vsel %vm1013, %v4208, %v4210
    %v4214 = vsel %vm1013, %v4210, %v4201
    %s4215 = scalar_lea.vmem %s11, 320
    %v4216 = vld [vmem:[%s4215] sm:$0xff]
    %v4217 = vld [vmem:[%s4215 + $0x8] sm:$0xff]
    %v4218 = vld [vmem:[%s4215 + $0x10] sm:$0xff]
    %v4219 = vld [vmem:[%s4215 + $0x18] sm:$0xff]
    %v4220 = vld [vmem:[%s4215 + $0x20] sm:$0xff]
    %v4221 = vld [vmem:[%s4215 + $0x28] sm:$0xff]
    %v4222 = vld [vmem:[%s4215 + $0x30] sm:$0xff]
    %v4223 = vld [vmem:[%s4215 + $0x38] sm:$0xff]
    %v4224 = vsel %vm3272, %v4203, 0
    %v4226 = vsel %vm3272, %v4205, 0
    %v4228 = vsel %vm3272, %v4207, 0
    %v4230 = vsel %vm3272, %v4209, 0
    %v4232 = vsel %vm3272, %v4211, 0
    %v4235 = vsel %vm3272, %v4214, 0
    %4237 = vmatprep.subr.mxu0 0.0
    %4238 = vmatpush1.msra.mxu0 %v4216
    %4239 = vmatprep.subr.mxu0 0.0
    %4240 = vmatpush1.msra.mxu0 %v4217
    %4241 = vmatprep.subr.mxu0 0.0
    %4242 = vmatpush1.msra.mxu0 %v4218
    %4243 = vmatprep.subr.mxu0 0.0
    %4244 = vmatpush1.msra.mxu0 %v4219
    %4245 = vmatprep.subr.mxu0 0.0
    %4246 = vmatpush1.msra.mxu0 %v4220
    %4247 = vmatprep.subr.mxu0 0.0
    %4248 = vmatpush1.msra.mxu0 %v4221
    %4249 = vmatprep.subr.mxu0 0.0
    %4250 = vmatpush1.msra.mxu0 %v4222
    %4251 = vmatprep.subr.mxu0 0.0
    %4252 = vmatpush1.msra.mxu0 %v4223
    %4253 = vmatprep.subr.mxu0 0.0
    %4254 = vmatpush1.msra.mxu0 0.0
    %4255 = vmatprep.subr.mxu0 0.0
    %4256 = vmatpush1.msra.mxu0 0.0
    %4257 = vmatprep.subr.mxu0 0.0
    %4258 = vmatpush1.msra.mxu0 0.0
    %4259 = vmatprep.subr.mxu0 0.0
    %4260 = vmatpush1.msra.mxu0 0.0
    %4261 = vmatprep.subr.mxu0 0.0
    %4262 = vmatpush1.msra.mxu0 0.0
    %4263 = vmatprep.subr.mxu0 0.0
    %4264 = vmatpush1.msra.mxu0 0.0
    %4265 = vmatprep.subr.mxu0 0.0
    %4266 = vmatpush1.msra.mxu0 0.0
    %4267 = vmatprep.subr.mxu0 0.0
    %4268 = vmatpush1.msra.mxu0 0.0
    %4269 = vmatprep.subr.mxu0 0.0
    %4270 = vmatpush1.msra.mxu0 0.0
    %4271 = vmatprep.subr.mxu0 0.0
    %4272 = vmatpush1.msra.mxu0 0.0
    %4273 = vmatprep.subr.mxu0 0.0
    %4274 = vmatpush1.msra.mxu0 0.0
    %4275 = vmatprep.subr.mxu0 0.0
    %4276 = vmatpush1.msra.mxu0 0.0
    %4277 = vmatprep.subr.mxu0 0.0
    %4278 = vmatpush1.msra.mxu0 0.0
    %4279 = vmatprep.subr.mxu0 0.0
    %4280 = vmatpush1.msra.mxu0 0.0
    %4281 = vmatprep.subr.mxu0 0.0
    %4282 = vmatpush1.msra.mxu0 0.0
    %4283 = vmatprep.subr.mxu0 0.0
    %4284 = vmatpush1.msra.mxu0 0.0
    %4285 = vmatprep.subr.mxu0 0.0
    %4286 = vmatpush1.msra.mxu0 0.0
    %4287 = vmatprep.subr.mxu0 0.0
    %4288 = vmatpush1.msra.mxu0 0.0
    %4289 = vmatprep.subr.mxu0 0.0
    %4290 = vmatpush1.msra.mxu0 0.0
    %4291 = vmatprep.subr.mxu0 0.0
    %4292 = vmatpush1.msra.mxu0 0.0
    %4293 = vmatprep.subr.mxu0 0.0
    %4294 = vmatpush1.msra.mxu0 0.0
    %4295 = vmatprep.subr.mxu0 0.0
    %4296 = vmatpush1.msra.mxu0 0.0
    %4297 = vmatprep.subr.mxu0 0.0
    %4298 = vmatpush1.msra.mxu0 0.0
    %4299 = vmatprep.subr.mxu0 0.0
    %4300 = vmatpush1.msra.mxu0 0.0
    %4301 = vmatprep.mubr.f32.mxu0 0.0
    %4302 = vmatmul.mubr.f32.gmra.mrb[0].mxu0 %v4224
    %v4303 = vpop.f32.mrb[0].mxu0
    %v4304 = vadd.f32 0.0, %v4303
    %v4305 = vpop.f32.mrb[0].mxu0
    %4306 = vmatprep.mubr.f32.mxu0 0.0
    %4307 = vmatmul.mubr.f32.gmra.mrb[0].mxu0 %v4226
    %v4308 = vpop.f32.mrb[0].mxu0
    %v4309 = vadd.f32 0.0, %v4308
    %v4310 = vpop.f32.mrb[0].mxu0
    %4311 = vmatprep.mubr.f32.mxu0 0.0
    %4312 = vmatmul.mubr.f32.gmra.mrb[0].mxu0 %v4228
    %v4313 = vpop.f32.mrb[0].mxu0
    %v4314 = vadd.f32 0.0, %v4313
    %v4315 = vpop.f32.mrb[0].mxu0
    %4316 = vmatprep.mubr.f32.mxu0 0.0
    %4317 = vmatmul.mubr.f32.gmra.mrb[0].mxu0 %v4230
    %v4318 = vpop.f32.mrb[0].mxu0
    %v4319 = vadd.f32 0.0, %v4318
    %v4320 = vpop.f32.mrb[0].mxu0
    %4321 = vmatprep.mubr.f32.mxu0 0.0
    %4322 = vmatmul.mubr.f32.gmra.mrb[0].mxu0 %v4232
    %v4323 = vpop.f32.mrb[0].mxu0
    %v4324 = vadd.f32 0.0, %v4323
    %v4325 = vpop.f32.mrb[0].mxu0
    %4326 = vmatprep.mubr.f32.mxu0 0.0
    %4327 = vmatmul.mubr.f32.gmra.mrb[0].mxu0 %v4235
    %v4328 = vpop.f32.mrb[0].mxu0
    %v4329 = vadd.f32 0.0, %v4328
    %v4330 = vpop.f32.mrb[0].mxu0
    %4331 = vdwg.mxu0
    %v4332 = vadd.f32 %v4195, %v4304
    %v4333 = vadd.f32 %v4196, %v4309
    %v4334 = vadd.f32 %v4197, %v4314
    %v4335 = vadd.f32 %v4198, %v4319
    %v4336 = vadd.f32 %v4199, %v4324
    %v4337 = vadd.f32 %v4200, %v4329
    %v4338 = vrot.slane %v3510, 6
    %v4339 = vrot.slane %v3515, 6
    %v4340 = vsel %vm1207, %v4338, %v4339
    %v4341 = vrot.slane %v3520, 6
    %v4342 = vsel %vm1207, %v4339, %v4341
    %v4343 = vrot.slane %v3525, 6
    %v4344 = vsel %vm1207, %v4341, %v4343
    %v4345 = vrot.slane %v3530, 6
    %v4346 = vsel %vm1207, %v4343, %v4345
    %v4347 = vrot.slane %v3535, 6
    %v4348 = vsel %vm1207, %v4345, %v4347
    %v4351 = vsel %vm1207, %v4347, %v4338
    %s4352 = scalar_lea.vmem %s11, 384
    %v4353 = vld [vmem:[%s4352] sm:$0xff]
    %v4354 = vld [vmem:[%s4352 + $0x8] sm:$0xff]
    %v4355 = vld [vmem:[%s4352 + $0x10] sm:$0xff]
    %v4356 = vld [vmem:[%s4352 + $0x18] sm:$0xff]
    %v4357 = vld [vmem:[%s4352 + $0x20] sm:$0xff]
    %v4358 = vld [vmem:[%s4352 + $0x28] sm:$0xff]
    %v4359 = vld [vmem:[%s4352 + $0x30] sm:$0xff]
    %v4360 = vld [vmem:[%s4352 + $0x38] sm:$0xff]
    %v4361 = vsel %vm3272, %v4340, 0
    %v4363 = vsel %vm3272, %v4342, 0
    %v4365 = vsel %vm3272, %v4344, 0
    %v4367 = vsel %vm3272, %v4346, 0
    %v4369 = vsel %vm3272, %v4348, 0
    %v4372 = vsel %vm3272, %v4351, 0
    %4374 = vmatprep.subr.mxu0 0.0
    %4375 = vmatpush1.msra.mxu0 %v4353
    %4376 = vmatprep.subr.mxu0 0.0
    %4377 = vmatpush1.msra.mxu0 %v4354
    %4378 = vmatprep.subr.mxu0 0.0
    %4379 = vmatpush1.msra.mxu0 %v4355
    %4380 = vmatprep.subr.mxu0 0.0
    %4381 = vmatpush1.msra.mxu0 %v4356
    %4382 = vmatprep.subr.mxu0 0.0
    %4383 = vmatpush1.msra.mxu0 %v4357
    %4384 = vmatprep.subr.mxu0 0.0
    %4385 = vmatpush1.msra.mxu0 %v4358
    %4386 = vmatprep.subr.mxu0 0.0
    %4387 = vmatpush1.msra.mxu0 %v4359
    %4388 = vmatprep.subr.mxu0 0.0
    %4389 = vmatpush1.msra.mxu0 %v4360
    %4390 = vmatprep.subr.mxu0 0.0
    %4391 = vmatpush1.msra.mxu0 0.0
    %4392 = vmatprep.subr.mxu0 0.0
    %4393 = vmatpush1.msra.mxu0 0.0
    %4394 = vmatprep.subr.mxu0 0.0
    %4395 = vmatpush1.msra.mxu0 0.0
    %4396 = vmatprep.subr.mxu0 0.0
    %4397 = vmatpush1.msra.mxu0 0.0
    %4398 = vmatprep.subr.mxu0 0.0
    %4399 = vmatpush1.msra.mxu0 0.0
    %4400 = vmatprep.subr.mxu0 0.0
    %4401 = vmatpush1.msra.mxu0 0.0
    %4402 = vmatprep.subr.mxu0 0.0
    %4403 = vmatpush1.msra.mxu0 0.0
    %4404 = vmatprep.subr.mxu0 0.0
    %4405 = vmatpush1.msra.mxu0 0.0
    %4406 = vmatprep.subr.mxu0 0.0
    %4407 = vmatpush1.msra.mxu0 0.0
    %4408 = vmatprep.subr.mxu0 0.0
    %4409 = vmatpush1.msra.mxu0 0.0
    %4410 = vmatprep.subr.mxu0 0.0
    %4411 = vmatpush1.msra.mxu0 0.0
    %4412 = vmatprep.subr.mxu0 0.0
    %4413 = vmatpush1.msra.mxu0 0.0
    %4414 = vmatprep.subr.mxu0 0.0
    %4415 = vmatpush1.msra.mxu0 0.0
    %4416 = vmatprep.subr.mxu0 0.0
    %4417 = vmatpush1.msra.mxu0 0.0
    %4418 = vmatprep.subr.mxu0 0.0
    %4419 = vmatpush1.msra.mxu0 0.0
    %4420 = vmatprep.subr.mxu0 0.0
    %4421 = vmatpush1.msra.mxu0 0.0
    %4422 = vmatprep.subr.mxu0 0.0
    %4423 = vmatpush1.msra.mxu0 0.0
    %4424 = vmatprep.subr.mxu0 0.0
    %4425 = vmatpush1.msra.mxu0 0.0
    %4426 = vmatprep.subr.mxu0 0.0
    %4427 = vmatpush1.msra.mxu0 0.0
    %4428 = vmatprep.subr.mxu0 0.0
    %4429 = vmatpush1.msra.mxu0 0.0
    %4430 = vmatprep.subr.mxu0 0.0
    %4431 = vmatpush1.msra.mxu0 0.0
    %4432 = vmatprep.subr.mxu0 0.0
    %4433 = vmatpush1.msra.mxu0 0.0
    %4434 = vmatprep.subr.mxu0 0.0
    %4435 = vmatpush1.msra.mxu0 0.0
    %4436 = vmatprep.subr.mxu0 0.0
    %4437 = vmatpush1.msra.mxu0 0.0
    %4438 = vmatprep.mubr.f32.mxu0 0.0
    %4439 = vmatmul.mubr.f32.gmra.mrb[0].mxu0 %v4361
    %v4440 = vpop.f32.mrb[0].mxu0
    %v4441 = vadd.f32 0.0, %v4440
    %v4442 = vpop.f32.mrb[0].mxu0
    %4443 = vmatprep.mubr.f32.mxu0 0.0
    %4444 = vmatmul.mubr.f32.gmra.mrb[0].mxu0 %v4363
    %v4445 = vpop.f32.mrb[0].mxu0
    %v4446 = vadd.f32 0.0, %v4445
    %v4447 = vpop.f32.mrb[0].mxu0
    %4448 = vmatprep.mubr.f32.mxu0 0.0
    %4449 = vmatmul.mubr.f32.gmra.mrb[0].mxu0 %v4365
    %v4450 = vpop.f32.mrb[0].mxu0
    %v4451 = vadd.f32 0.0, %v4450
    %v4452 = vpop.f32.mrb[0].mxu0
    %4453 = vmatprep.mubr.f32.mxu0 0.0
    %4454 = vmatmul.mubr.f32.gmra.mrb[0].mxu0 %v4367
    %v4455 = vpop.f32.mrb[0].mxu0
    %v4456 = vadd.f32 0.0, %v4455
    %v4457 = vpop.f32.mrb[0].mxu0
    %4458 = vmatprep.mubr.f32.mxu0 0.0
    %4459 = vmatmul.mubr.f32.gmra.mrb[0].mxu0 %v4369
    %v4460 = vpop.f32.mrb[0].mxu0
    %v4461 = vadd.f32 0.0, %v4460
    %v4462 = vpop.f32.mrb[0].mxu0
    %4463 = vmatprep.mubr.f32.mxu0 0.0
    %4464 = vmatmul.mubr.f32.gmra.mrb[0].mxu0 %v4372
    %v4465 = vpop.f32.mrb[0].mxu0
    %v4466 = vadd.f32 0.0, %v4465
    %v4467 = vpop.f32.mrb[0].mxu0
    %4468 = vdwg.mxu0
    %v4469 = vadd.f32 %v4332, %v4441
    %v4470 = vadd.f32 %v4333, %v4446
    %v4471 = vadd.f32 %v4334, %v4451
    %v4472 = vadd.f32 %v4335, %v4456
    %v4473 = vadd.f32 %v4336, %v4461
    %v4474 = vadd.f32 %v4337, %v4466
    %v4475 = vrot.slane %v3510, 7
    %v4476 = vrot.slane %v3515, 7
    %v4477 = vsel %vm1401, %v4475, %v4476
    %v4478 = vrot.slane %v3520, 7
    %v4479 = vsel %vm1401, %v4476, %v4478
    %v4480 = vrot.slane %v3525, 7
    %v4481 = vsel %vm1401, %v4478, %v4480
    %v4482 = vrot.slane %v3530, 7
    %v4483 = vsel %vm1401, %v4480, %v4482
    %v4484 = vrot.slane %v3535, 7
    %v4485 = vsel %vm1401, %v4482, %v4484
    %v4488 = vsel %vm1401, %v4484, %v4475
    %s4489 = scalar_lea.vmem %s11, 448
    %v4490 = vld [vmem:[%s4489] sm:$0xff]
    %v4491 = vld [vmem:[%s4489 + $0x8] sm:$0xff]
    %v4492 = vld [vmem:[%s4489 + $0x10] sm:$0xff]
    %v4493 = vld [vmem:[%s4489 + $0x18] sm:$0xff]
    %v4494 = vld [vmem:[%s4489 + $0x20] sm:$0xff]
    %v4495 = vld [vmem:[%s4489 + $0x28] sm:$0xff]
    %v4496 = vld [vmem:[%s4489 + $0x30] sm:$0xff]
    %v4497 = vld [vmem:[%s4489 + $0x38] sm:$0xff]
    %v4498 = vsel %vm3272, %v4477, 0
    %v4500 = vsel %vm3272, %v4479, 0
    %v4502 = vsel %vm3272, %v4481, 0
    %v4504 = vsel %vm3272, %v4483, 0
    %v4506 = vsel %vm3272, %v4485, 0
    %v4509 = vsel %vm3272, %v4488, 0
    %4511 = vmatprep.subr.mxu0 0.0
    %4512 = vmatpush1.msra.mxu0 %v4490
    %4513 = vmatprep.subr.mxu0 0.0
    %4514 = vmatpush1.msra.mxu0 %v4491
    %4515 = vmatprep.subr.mxu0 0.0
    %4516 = vmatpush1.msra.mxu0 %v4492
    %4517 = vmatprep.subr.mxu0 0.0
    %4518 = vmatpush1.msra.mxu0 %v4493
    %4519 = vmatprep.subr.mxu0 0.0
    %4520 = vmatpush1.msra.mxu0 %v4494
    %4521 = vmatprep.subr.mxu0 0.0
    %4522 = vmatpush1.msra.mxu0 %v4495
    %4523 = vmatprep.subr.mxu0 0.0
    %4524 = vmatpush1.msra.mxu0 %v4496
    %4525 = vmatprep.subr.mxu0 0.0
    %4526 = vmatpush1.msra.mxu0 %v4497
    %4527 = vmatprep.subr.mxu0 0.0
    %4528 = vmatpush1.msra.mxu0 0.0
    %4529 = vmatprep.subr.mxu0 0.0
    %4530 = vmatpush1.msra.mxu0 0.0
    %4531 = vmatprep.subr.mxu0 0.0
    %4532 = vmatpush1.msra.mxu0 0.0
    %4533 = vmatprep.subr.mxu0 0.0
    %4534 = vmatpush1.msra.mxu0 0.0
    %4535 = vmatprep.subr.mxu0 0.0
    %4536 = vmatpush1.msra.mxu0 0.0
    %4537 = vmatprep.subr.mxu0 0.0
    %4538 = vmatpush1.msra.mxu0 0.0
    %4539 = vmatprep.subr.mxu0 0.0
    %4540 = vmatpush1.msra.mxu0 0.0
    %4541 = vmatprep.subr.mxu0 0.0
    %4542 = vmatpush1.msra.mxu0 0.0
    %4543 = vmatprep.subr.mxu0 0.0
    %4544 = vmatpush1.msra.mxu0 0.0
    %4545 = vmatprep.subr.mxu0 0.0
    %4546 = vmatpush1.msra.mxu0 0.0
    %4547 = vmatprep.subr.mxu0 0.0
    %4548 = vmatpush1.msra.mxu0 0.0
    %4549 = vmatprep.subr.mxu0 0.0
    %4550 = vmatpush1.msra.mxu0 0.0
    %4551 = vmatprep.subr.mxu0 0.0
    %4552 = vmatpush1.msra.mxu0 0.0
    %4553 = vmatprep.subr.mxu0 0.0
    %4554 = vmatpush1.msra.mxu0 0.0
    %4555 = vmatprep.subr.mxu0 0.0
    %4556 = vmatpush1.msra.mxu0 0.0
    %4557 = vmatprep.subr.mxu0 0.0
    %4558 = vmatpush1.msra.mxu0 0.0
    %4559 = vmatprep.subr.mxu0 0.0
    %4560 = vmatpush1.msra.mxu0 0.0
    %4561 = vmatprep.subr.mxu0 0.0
    %4562 = vmatpush1.msra.mxu0 0.0
    %4563 = vmatprep.subr.mxu0 0.0
    %4564 = vmatpush1.msra.mxu0 0.0
    %4565 = vmatprep.subr.mxu0 0.0
    %4566 = vmatpush1.msra.mxu0 0.0
    %4567 = vmatprep.subr.mxu0 0.0
    %4568 = vmatpush1.msra.mxu0 0.0
    %4569 = vmatprep.subr.mxu0 0.0
    %4570 = vmatpush1.msra.mxu0 0.0
    %4571 = vmatprep.subr.mxu0 0.0
    %4572 = vmatpush1.msra.mxu0 0.0
    %4573 = vmatprep.subr.mxu0 0.0
    %4574 = vmatpush1.msra.mxu0 0.0
    %4575 = vmatprep.mubr.f32.mxu0 0.0
    %4576 = vmatmul.mubr.f32.gmra.mrb[0].mxu0 %v4498
    %v4577 = vpop.f32.mrb[0].mxu0
    %v4578 = vadd.f32 0.0, %v4577
    %v4579 = vpop.f32.mrb[0].mxu0
    %4580 = vmatprep.mubr.f32.mxu0 0.0
    %4581 = vmatmul.mubr.f32.gmra.mrb[0].mxu0 %v4500
    %v4582 = vpop.f32.mrb[0].mxu0
    %v4583 = vadd.f32 0.0, %v4582
    %v4584 = vpop.f32.mrb[0].mxu0
    %4585 = vmatprep.mubr.f32.mxu0 0.0
    %4586 = vmatmul.mubr.f32.gmra.mrb[0].mxu0 %v4502
    %v4587 = vpop.f32.mrb[0].mxu0
    %v4588 = vadd.f32 0.0, %v4587
    %v4589 = vpop.f32.mrb[0].mxu0
    %4590 = vmatprep.mubr.f32.mxu0 0.0
    %4591 = vmatmul.mubr.f32.gmra.mrb[0].mxu0 %v4504
    %v4592 = vpop.f32.mrb[0].mxu0
    %v4593 = vadd.f32 0.0, %v4592
    %v4594 = vpop.f32.mrb[0].mxu0
    %4595 = vmatprep.mubr.f32.mxu0 0.0
    %4596 = vmatmul.mubr.f32.gmra.mrb[0].mxu0 %v4506
    %v4597 = vpop.f32.mrb[0].mxu0
    %v4598 = vadd.f32 0.0, %v4597
    %v4599 = vpop.f32.mrb[0].mxu0
    %4600 = vmatprep.mubr.f32.mxu0 0.0
    %4601 = vmatmul.mubr.f32.gmra.mrb[0].mxu0 %v4509
    %v4602 = vpop.f32.mrb[0].mxu0
    %v4603 = vadd.f32 0.0, %v4602
    %v4604 = vpop.f32.mrb[0].mxu0
    %4605 = vdwg.mxu0
    %v4606 = vadd.f32 %v4469, %v4578
    %v4607 = vadd.f32 %v4470, %v4583
    %v4608 = vadd.f32 %v4471, %v4588
    %v4609 = vadd.f32 %v4472, %v4593
    %v4610 = vadd.f32 %v4473, %v4598
    %v4611 = vadd.f32 %v4474, %v4603
    %v4612 = vld [vmem:[%s14] sm:$0xff]
    %v4613 = vld [vmem:[%s14 + $0x8] sm:$0xff]
    %v4614 = vld [vmem:[%s14 + $0x10] sm:$0xff]
    %v4615 = vld [vmem:[%s14 + $0x18] sm:$0xff]
    %v4616 = vld [vmem:[%s14 + $0x20] sm:$0xff]
    %v4617 = vld [vmem:[%s14 + $0x28] sm:$0xff]
    %4619 = vset.pattern.permute.xlu0 0
    %4620 = vperm.xlu0 %4619, %v4612
    %v4621 = vpop.permute.xlu0 %4620
    %4624 = vset.pattern.permute.xlu0 0
    %4625 = vperm.xlu0 %4624, %v4613
    %v4626 = vpop.permute.xlu0 %4625
    %4629 = vset.pattern.permute.xlu0 0
    %4630 = vperm.xlu0 %4629, %v4614
    %v4631 = vpop.permute.xlu0 %4630
    %4634 = vset.pattern.permute.xlu0 0
    %4635 = vperm.xlu0 %4634, %v4615
    %v4636 = vpop.permute.xlu0 %4635
    %4639 = vset.pattern.permute.xlu0 0
    %4640 = vperm.xlu0 %4639, %v4616
    %v4641 = vpop.permute.xlu0 %4640
    %4644 = vset.pattern.permute.xlu0 0
    %4645 = vperm.xlu0 %4644, %v4617
    %v4646 = vpop.permute.xlu0 %4645
    %v4648 = vmul.f32 %v4606, %v4621
    %v4649 = vmul.f32 %v4607, %v4626
    %v4650 = vmul.f32 %v4608, %v4631
    %v4651 = vmul.f32 %v4609, %v4636
    %v4652 = vmul.f32 %v4610, %v4641
    %v4653 = vmul.f32 %v4611, %v4646
    %vm4654 = vcmask 130048
    %v4655 = vsel %vm4654, %v4648, 0.0
    %v4656 = vsel %vm4654, %v4649, 0.0
    %v4657 = vadd.f32 %v4655, %v4656
    %v4658 = vsel %vm4654, %v4650, 0.0
    %v4659 = vadd.f32 %v4657, %v4658
    %v4660 = vsel %vm4654, %v4651, 0.0
    %v4661 = vadd.f32 %v4659, %v4660
    %v4662 = vsel %vm4654, %v4652, 0.0
    %v4663 = vadd.f32 %v4661, %v4662
    %v4664 = vsel %vm4654, %v4653, 0.0
    %v4665 = vadd.f32 %v4663, %v4664
    %v4666 = vrot.slane %v4665, 4
    %v4667 = vadd.f32 %v4665, %v4666
    %v4668 = vrot.slane %v4667, 2
    %v4669 = vadd.f32 %v4667, %v4668
    %v4670 = vrot.slane %v4669, 1
    %v4671 = vadd.f32 %v4669, %v4670
    %v4672 = vmul.f32 %v4671, 0.045454547
    %v4673 = vmul.f32 %v4648, %v4606
    %v4674 = vmul.f32 %v4649, %v4607
    %v4675 = vmul.f32 %v4650, %v4608
    %v4676 = vmul.f32 %v4651, %v4609
    %v4677 = vmul.f32 %v4652, %v4610
    %v4678 = vmul.f32 %v4653, %v4611
    %v4679 = vsel %vm4654, %v4673, 0.0
    %v4680 = vsel %vm4654, %v4674, 0.0
    %v4681 = vadd.f32 %v4679, %v4680
    %v4682 = vsel %vm4654, %v4675, 0.0
    %v4683 = vadd.f32 %v4681, %v4682
    %v4684 = vsel %vm4654, %v4676, 0.0
    %v4685 = vadd.f32 %v4683, %v4684
    %v4686 = vsel %vm4654, %v4677, 0.0
    %v4687 = vadd.f32 %v4685, %v4686
    %v4688 = vsel %vm4654, %v4678, 0.0
    %v4689 = vadd.f32 %v4687, %v4688
    %v4690 = vrot.slane %v4689, 4
    %v4691 = vadd.f32 %v4689, %v4690
    %v4692 = vrot.slane %v4691, 2
    %v4693 = vadd.f32 %v4691, %v4692
    %v4694 = vrot.slane %v4693, 1
    %v4695 = vadd.f32 %v4693, %v4694
    %v4696 = vmul.f32 %v4695, 0.045454547
    %v4697 = vmul.f32 %v4672, %v4672
    %v4698 = vsub.f32 %v4696, %v4697
    %v4699 = vld [vmem:[%s12] sm:$0x1]
    %v4700 = vadd.f32 %v4698, 1e-05
    %v4701 = vrsqrt.pop %v4700
    %v4702 = vmul.f32 %v4699, %v4701
    %v4703 = vld [vmem:[%s13] sm:$0x1]
    %v4704 = vmul.f32 %v4672, %v4702
    %v4705 = vsub.f32 %v4703, %v4704
    %v4707 = vlaneseq
    %v4708 = vshrl.u32 %v4707, 7
    %v4709 = vsub.s32 0, %v4708
    %v4710 = vrot.slane %v4702, %v4709
    %v4712 = vmul.f32 %v4606, %v4710
    %v4713 = vmul.f32 %v4607, %v4710
    %v4714 = vmul.f32 %v4608, %v4710
    %v4715 = vmul.f32 %v4609, %v4710
    %v4716 = vmul.f32 %v4610, %v4710
    %v4717 = vmul.f32 %v4611, %v4710
    %v4719 = vlaneseq
    %v4720 = vshrl.u32 %v4719, 7
    %v4721 = vsub.s32 0, %v4720
    %v4722 = vrot.slane %v4705, %v4721
    %v4724 = vadd.f32 %v4712, %v4722
    %v4725 = vadd.f32 %v4713, %v4722
    %v4726 = vadd.f32 %v4714, %v4722
    %v4727 = vadd.f32 %v4715, %v4722
    %v4728 = vadd.f32 %v4716, %v4722
    %v4729 = vadd.f32 %v4717, %v4722
    %v4730 = vmax.f32 %v4724, 0.0
    %v4731 = vmax.f32 %v4725, 0.0
    %v4732 = vmax.f32 %v4726, 0.0
    %v4733 = vmax.f32 %v4727, 0.0
    %v4734 = vmax.f32 %v4728, 0.0
    %v4735 = vmax.f32 %v4729, 0.0
    %v4736 = vmul.f32 %v4730, %v4621
    %v4737 = vmul.f32 %v4731, %v4626
    %v4738 = vmul.f32 %v4732, %v4631
    %v4739 = vmul.f32 %v4733, %v4636
    %v4740 = vmul.f32 %v4734, %v4641
    %v4741 = vmul.f32 %v4735, %v4646
    %v4748 = vrot.slane %v4736, 1
    %v4749 = vrot.slane %v4737, 1
    %v4750 = vsel %vm96, %v4748, %v4749
    %v4751 = vrot.slane %v4738, 1
    %v4752 = vsel %vm96, %v4749, %v4751
    %v4753 = vrot.slane %v4739, 1
    %v4754 = vsel %vm96, %v4751, %v4753
    %v4755 = vrot.slane %v4740, 1
    %v4756 = vsel %vm96, %v4753, %v4755
    %v4757 = vrot.slane %v4741, 1
    %v4758 = vsel %vm96, %v4755, %v4757
    %v4766 = vsel %vm96, %v4757, %v4748
    %v4767 = vmax.f32 %v4736, %v4750
    %v4768 = vmax.f32 %v4737, %v4752
    %v4769 = vmax.f32 %v4738, %v4754
    %v4770 = vmax.f32 %v4739, %v4756
    %v4771 = vmax.f32 %v4740, %v4758
    %v4772 = vmax.f32 %v4741, %v4766
    %v4773 = vld [vmem:[%s15] sm:$0xff]
    %v4774 = vld [vmem:[%s15 + $0x8] sm:$0xff]
    %vm4775 = vcmask 392192
    %v4777 = vsel %vm4775, %v4773, 0
    %v4780 = vsel %vm4775, %v4774, 0
    %4782 = vmatprep.subr.mxu0 0.0
    %4783 = vmatpush1.msra.mxu0 %v4767
    %4784 = vmatprep.subr.mxu0 0.0
    %4785 = vmatpush1.msra.mxu0 %v4768
    %4786 = vmatprep.subr.mxu0 0.0
    %4787 = vmatpush1.msra.mxu0 %v4769
    %4788 = vmatprep.subr.mxu0 0.0
    %4789 = vmatpush1.msra.mxu0 %v4770
    %4790 = vmatprep.subr.mxu0 0.0
    %4791 = vmatpush1.msra.mxu0 %v4771
    %4792 = vmatprep.subr.mxu0 0.0
    %4793 = vmatpush1.msra.mxu0 %v4772
    %4794 = vmatprep.subr.mxu0 0.0
    %4795 = vmatpush1.msra.mxu0 0.0
    %4796 = vmatprep.subr.mxu0 0.0
    %4797 = vmatpush1.msra.mxu0 0.0
    %4798 = vmatprep.subr.mxu0 0.0
    %4799 = vmatpush1.msra.mxu0 0.0
    %4800 = vmatprep.subr.mxu0 0.0
    %4801 = vmatpush1.msra.mxu0 0.0
    %4802 = vmatprep.subr.mxu0 0.0
    %4803 = vmatpush1.msra.mxu0 0.0
    %4804 = vmatprep.subr.mxu0 0.0
    %4805 = vmatpush1.msra.mxu0 0.0
    %4806 = vmatprep.subr.mxu0 0.0
    %4807 = vmatpush1.msra.mxu0 0.0
    %4808 = vmatprep.subr.mxu0 0.0
    %4809 = vmatpush1.msra.mxu0 0.0
    %4810 = vmatprep.subr.mxu0 0.0
    %4811 = vmatpush1.msra.mxu0 0.0
    %4812 = vmatprep.subr.mxu0 0.0
    %4813 = vmatpush1.msra.mxu0 0.0
    %4814 = vmatprep.subr.mxu0 0.0
    %4815 = vmatpush1.msra.mxu0 0.0
    %4816 = vmatprep.subr.mxu0 0.0
    %4817 = vmatpush1.msra.mxu0 0.0
    %4818 = vmatprep.subr.mxu0 0.0
    %4819 = vmatpush1.msra.mxu0 0.0
    %4820 = vmatprep.subr.mxu0 0.0
    %4821 = vmatpush1.msra.mxu0 0.0
    %4822 = vmatprep.subr.mxu0 0.0
    %4823 = vmatpush1.msra.mxu0 0.0
    %4824 = vmatprep.subr.mxu0 0.0
    %4825 = vmatpush1.msra.mxu0 0.0
    %4826 = vmatprep.subr.mxu0 0.0
    %4827 = vmatpush1.msra.mxu0 0.0
    %4828 = vmatprep.subr.mxu0 0.0
    %4829 = vmatpush1.msra.mxu0 0.0
    %4830 = vmatprep.subr.mxu0 0.0
    %4831 = vmatpush1.msra.mxu0 0.0
    %4832 = vmatprep.subr.mxu0 0.0
    %4833 = vmatpush1.msra.mxu0 0.0
    %4834 = vmatprep.subr.mxu0 0.0
    %4835 = vmatpush1.msra.mxu0 0.0
    %4836 = vmatprep.subr.mxu0 0.0
    %4837 = vmatpush1.msra.mxu0 0.0
    %4838 = vmatprep.subr.mxu0 0.0
    %4839 = vmatpush1.msra.mxu0 0.0
    %4840 = vmatprep.subr.mxu0 0.0
    %4841 = vmatpush1.msra.mxu0 0.0
    %4842 = vmatprep.subr.mxu0 0.0
    %4843 = vmatpush1.msra.mxu0 0.0
    %4844 = vmatprep.subr.mxu0 0.0
    %4845 = vmatpush1.msra.mxu0 0.0
    %4846 = vmatprep.mubr.f32.mxu0 0.0
    %4847 = vmatmul.mubr.f32.gmra.mrb[0].mxu0 %v4777
    %v4848 = vpop.f32.mrb[0].mxu0
    %v4849 = vadd.f32 0.0, %v4848
    %v4850 = vpop.f32.mrb[0].mxu0
    %4851 = vmatprep.mubr.f32.mxu0 0.0
    %4852 = vmatmul.mubr.f32.gmra.mrb[0].mxu0 %v4780
    %v4853 = vpop.f32.mrb[0].mxu0
    %v4854 = vadd.f32 0.0, %v4853
    %v4855 = vpop.f32.mrb[0].mxu0
    %4856 = vdwg.mxu0
    %4857 = vst.msk [vmem:[%s22] sm:$0xff] %vm4654, %v4849
    %4858 = vst.msk [vmem:[%s22 + $0x8] sm:$0xff] %vm4654, %v4854
    %v4859 = vld [vmem:[%s16] sm:$0xff]
    %v4860 = vld [vmem:[%s16 + $0x8] sm:$0xff]
    %v4862 = vsel %vm4654, %v4849, 0
    %v4865 = vsel %vm4654, %v4854, 0
    %4867 = vmatprep.subr.mxu0 0.0
    %4868 = vmatpush1.msra.mxu0 %v4859
    %4869 = vmatprep.subr.mxu0 0.0
    %4870 = vmatpush1.msra.mxu0 %v4860
    %4871 = vmatprep.subr.mxu0 0.0
    %4872 = vmatpush1.msra.mxu0 0.0
    %4873 = vmatprep.subr.mxu0 0.0
    %4874 = vmatpush1.msra.mxu0 0.0
    %4875 = vmatprep.subr.mxu0 0.0
    %4876 = vmatpush1.msra.mxu0 0.0
    %4877 = vmatprep.subr.mxu0 0.0
    %4878 = vmatpush1.msra.mxu0 0.0
    %4879 = vmatprep.subr.mxu0 0.0
    %4880 = vmatpush1.msra.mxu0 0.0
    %4881 = vmatprep.subr.mxu0 0.0
    %4882 = vmatpush1.msra.mxu0 0.0
    %4883 = vmatprep.subr.mxu0 0.0
    %4884 = vmatpush1.msra.mxu0 0.0
    %4885 = vmatprep.subr.mxu0 0.0
    %4886 = vmatpush1.msra.mxu0 0.0
    %4887 = vmatprep.subr.mxu0 0.0
    %4888 = vmatpush1.msra.mxu0 0.0
    %4889 = vmatprep.subr.mxu0 0.0
    %4890 = vmatpush1.msra.mxu0 0.0
    %4891 = vmatprep.subr.mxu0 0.0
    %4892 = vmatpush1.msra.mxu0 0.0
    %4893 = vmatprep.subr.mxu0 0.0
    %4894 = vmatpush1.msra.mxu0 0.0
    %4895 = vmatprep.subr.mxu0 0.0
    %4896 = vmatpush1.msra.mxu0 0.0
    %4897 = vmatprep.subr.mxu0 0.0
    %4898 = vmatpush1.msra.mxu0 0.0
    %4899 = vmatprep.subr.mxu0 0.0
    %4900 = vmatpush1.msra.mxu0 0.0
    %4901 = vmatprep.subr.mxu0 0.0
    %4902 = vmatpush1.msra.mxu0 0.0
    %4903 = vmatprep.subr.mxu0 0.0
    %4904 = vmatpush1.msra.mxu0 0.0
    %4905 = vmatprep.subr.mxu0 0.0
    %4906 = vmatpush1.msra.mxu0 0.0
    %4907 = vmatprep.subr.mxu0 0.0
    %4908 = vmatpush1.msra.mxu0 0.0
    %4909 = vmatprep.subr.mxu0 0.0
    %4910 = vmatpush1.msra.mxu0 0.0
    %4911 = vmatprep.subr.mxu0 0.0
    %4912 = vmatpush1.msra.mxu0 0.0
    %4913 = vmatprep.subr.mxu0 0.0
    %4914 = vmatpush1.msra.mxu0 0.0
    %4915 = vmatprep.subr.mxu0 0.0
    %4916 = vmatpush1.msra.mxu0 0.0
    %4917 = vmatprep.subr.mxu0 0.0
    %4918 = vmatpush1.msra.mxu0 0.0
    %4919 = vmatprep.subr.mxu0 0.0
    %4920 = vmatpush1.msra.mxu0 0.0
    %4921 = vmatprep.subr.mxu0 0.0
    %4922 = vmatpush1.msra.mxu0 0.0
    %4923 = vmatprep.subr.mxu0 0.0
    %4924 = vmatpush1.msra.mxu0 0.0
    %4925 = vmatprep.subr.mxu0 0.0
    %4926 = vmatpush1.msra.mxu0 0.0
    %4927 = vmatprep.subr.mxu0 0.0
    %4928 = vmatpush1.msra.mxu0 0.0
    %4929 = vmatprep.subr.mxu0 0.0
    %4930 = vmatpush1.msra.mxu0 0.0
    %4931 = vmatprep.mubr.f32.mxu0 0.0
    %4932 = vmatmul.mubr.f32.gmra.mrb[0].mxu0 %v4862
    %v4933 = vpop.f32.mrb[0].mxu0
    %v4934 = vadd.f32 0.0, %v4933
    %v4935 = vpop.f32.mrb[0].mxu0
    %4936 = vmatprep.mubr.f32.mxu0 0.0
    %4937 = vmatmul.mubr.f32.gmra.mrb[0].mxu0 %v4865
    %v4938 = vpop.f32.mrb[0].mxu0
    %v4939 = vadd.f32 0.0, %v4938
    %v4940 = vpop.f32.mrb[0].mxu0
    %4941 = vdwg.mxu0
    %v4942 = vld [vmem:[%s17] sm:$0xff]
    %v4943 = vld [vmem:[%s17 + $0x8] sm:$0xff]
    %v4944 = vmul.f32 %v4934, %v4942
    %v4945 = vmul.f32 %v4939, %v4943
    %v4946 = vld [vmem:[%s18] sm:$0xff]
    %v4947 = vld [vmem:[%s18 + $0x8] sm:$0xff]
    %v4948 = vld [vmem:[%s18 + $0x10] sm:$0xff]
    %v4949 = vld [vmem:[%s18 + $0x18] sm:$0xff]
    %v4950 = vld [vmem:[%s18 + $0x20] sm:$0xff]
    %vm4951 = vcmask 326656
    %v4953 = vsel %vm4951, %v4944, 0
    %v4956 = vsel %vm4951, %v4945, 0
    %4958 = vmatprep.subr.mxu0 0.0
    %4959 = vmatpush1.msra.mxu0 %v4946
    %4960 = vmatprep.subr.mxu0 0.0
    %4961 = vmatpush1.msra.mxu0 %v4947
    %4962 = vmatprep.subr.mxu0 0.0
    %4963 = vmatpush1.msra.mxu0 %v4948
    %4964 = vmatprep.subr.mxu0 0.0
    %4965 = vmatpush1.msra.mxu0 %v4949
    %4966 = vmatprep.subr.mxu0 0.0
    %4967 = vmatpush1.msra.mxu0 %v4950
    %4968 = vmatprep.subr.mxu0 0.0
    %4969 = vmatpush1.msra.mxu0 0.0
    %4970 = vmatprep.subr.mxu0 0.0
    %4971 = vmatpush1.msra.mxu0 0.0
    %4972 = vmatprep.subr.mxu0 0.0
    %4973 = vmatpush1.msra.mxu0 0.0
    %4974 = vmatprep.subr.mxu0 0.0
    %4975 = vmatpush1.msra.mxu0 0.0
    %4976 = vmatprep.subr.mxu0 0.0
    %4977 = vmatpush1.msra.mxu0 0.0
    %4978 = vmatprep.subr.mxu0 0.0
    %4979 = vmatpush1.msra.mxu0 0.0
    %4980 = vmatprep.subr.mxu0 0.0
    %4981 = vmatpush1.msra.mxu0 0.0
    %4982 = vmatprep.subr.mxu0 0.0
    %4983 = vmatpush1.msra.mxu0 0.0
    %4984 = vmatprep.subr.mxu0 0.0
    %4985 = vmatpush1.msra.mxu0 0.0
    %4986 = vmatprep.subr.mxu0 0.0
    %4987 = vmatpush1.msra.mxu0 0.0
    %4988 = vmatprep.subr.mxu0 0.0
    %4989 = vmatpush1.msra.mxu0 0.0
    %4990 = vmatprep.subr.mxu0 0.0
    %4991 = vmatpush1.msra.mxu0 0.0
    %4992 = vmatprep.subr.mxu0 0.0
    %4993 = vmatpush1.msra.mxu0 0.0
    %4994 = vmatprep.subr.mxu0 0.0
    %4995 = vmatpush1.msra.mxu0 0.0
    %4996 = vmatprep.subr.mxu0 0.0
    %4997 = vmatpush1.msra.mxu0 0.0
    %4998 = vmatprep.subr.mxu0 0.0
    %4999 = vmatpush1.msra.mxu0 0.0
    %5000 = vmatprep.subr.mxu0 0.0
    %5001 = vmatpush1.msra.mxu0 0.0
    %5002 = vmatprep.subr.mxu0 0.0
    %5003 = vmatpush1.msra.mxu0 0.0
    %5004 = vmatprep.subr.mxu0 0.0
    %5005 = vmatpush1.msra.mxu0 0.0
    %5006 = vmatprep.subr.mxu0 0.0
    %5007 = vmatpush1.msra.mxu0 0.0
    %5008 = vmatprep.subr.mxu0 0.0
    %5009 = vmatpush1.msra.mxu0 0.0
    %5010 = vmatprep.subr.mxu0 0.0
    %5011 = vmatpush1.msra.mxu0 0.0
    %5012 = vmatprep.subr.mxu0 0.0
    %5013 = vmatpush1.msra.mxu0 0.0
    %5014 = vmatprep.subr.mxu0 0.0
    %5015 = vmatpush1.msra.mxu0 0.0
    %5016 = vmatprep.subr.mxu0 0.0
    %5017 = vmatpush1.msra.mxu0 0.0
    %5018 = vmatprep.subr.mxu0 0.0
    %5019 = vmatpush1.msra.mxu0 0.0
    %5020 = vmatprep.subr.mxu0 0.0
    %5021 = vmatpush1.msra.mxu0 0.0
    %5022 = vmatprep.mubr.f32.mxu0 0.0
    %5023 = vmatmul.mubr.f32.gmra.mrb[0].mxu0 %v4953
    %v5024 = vpop.f32.mrb[0].mxu0
    %v5025 = vadd.f32 0.0, %v5024
    %v5026 = vpop.f32.mrb[0].mxu0
    %5027 = vmatprep.mubr.f32.mxu0 0.0
    %5028 = vmatmul.mubr.f32.gmra.mrb[0].mxu0 %v4956
    %v5029 = vpop.f32.mrb[0].mxu0
    %v5030 = vadd.f32 0.0, %v5029
    %v5031 = vpop.f32.mrb[0].mxu0
    %5032 = vdwg.mxu0
    %v5033 = vld [vmem:[%s19] sm:$0x3]
    %v5034 = vld [vmem:[%s20] sm:$0x1]
    %v5036 = vlaneseq
    %v5037 = vshrl.u32 %v5036, 7
    %v5038 = vsub.s32 0, %v5037
    %v5039 = vrot.slane %v5034, %v5038
    %v5042 = vsel %vm4654, %v5033, 0
    %5044 = vmatprep.subr.mxu0 0.0
    %5045 = vmatpush1.msra.mxu0 %v5025
    %5046 = vmatprep.subr.mxu0 0.0
    %5047 = vmatpush1.msra.mxu0 %v5030
    %5048 = vmatprep.subr.mxu0 0.0
    %5049 = vmatpush1.msra.mxu0 0.0
    %5050 = vmatprep.subr.mxu0 0.0
    %5051 = vmatpush1.msra.mxu0 0.0
    %5052 = vmatprep.subr.mxu0 0.0
    %5053 = vmatpush1.msra.mxu0 0.0
    %5054 = vmatprep.subr.mxu0 0.0
    %5055 = vmatpush1.msra.mxu0 0.0
    %5056 = vmatprep.subr.mxu0 0.0
    %5057 = vmatpush1.msra.mxu0 0.0
    %5058 = vmatprep.subr.mxu0 0.0
    %5059 = vmatpush1.msra.mxu0 0.0
    %5060 = vmatprep.subr.mxu0 0.0
    %5061 = vmatpush1.msra.mxu0 0.0
    %5062 = vmatprep.subr.mxu0 0.0
    %5063 = vmatpush1.msra.mxu0 0.0
    %5064 = vmatprep.subr.mxu0 0.0
    %5065 = vmatpush1.msra.mxu0 0.0
    %5066 = vmatprep.subr.mxu0 0.0
    %5067 = vmatpush1.msra.mxu0 0.0
    %5068 = vmatprep.subr.mxu0 0.0
    %5069 = vmatpush1.msra.mxu0 0.0
    %5070 = vmatprep.subr.mxu0 0.0
    %5071 = vmatpush1.msra.mxu0 0.0
    %5072 = vmatprep.subr.mxu0 0.0
    %5073 = vmatpush1.msra.mxu0 0.0
    %5074 = vmatprep.subr.mxu0 0.0
    %5075 = vmatpush1.msra.mxu0 0.0
    %5076 = vmatprep.subr.mxu0 0.0
    %5077 = vmatpush1.msra.mxu0 0.0
    %5078 = vmatprep.subr.mxu0 0.0
    %5079 = vmatpush1.msra.mxu0 0.0
    %5080 = vmatprep.subr.mxu0 0.0
    %5081 = vmatpush1.msra.mxu0 0.0
    %5082 = vmatprep.subr.mxu0 0.0
    %5083 = vmatpush1.msra.mxu0 0.0
    %5084 = vmatprep.subr.mxu0 0.0
    %5085 = vmatpush1.msra.mxu0 0.0
    %5086 = vmatprep.subr.mxu0 0.0
    %5087 = vmatpush1.msra.mxu0 0.0
    %5088 = vmatprep.subr.mxu0 0.0
    %5089 = vmatpush1.msra.mxu0 0.0
    %5090 = vmatprep.subr.mxu0 0.0
    %5091 = vmatpush1.msra.mxu0 0.0
    %5092 = vmatprep.subr.mxu0 0.0
    %5093 = vmatpush1.msra.mxu0 0.0
    %5094 = vmatprep.subr.mxu0 0.0
    %5095 = vmatpush1.msra.mxu0 0.0
    %5096 = vmatprep.subr.mxu0 0.0
    %5097 = vmatpush1.msra.mxu0 0.0
    %5098 = vmatprep.subr.mxu0 0.0
    %5099 = vmatpush1.msra.mxu0 0.0
    %5100 = vmatprep.subr.mxu0 0.0
    %5101 = vmatpush1.msra.mxu0 0.0
    %5102 = vmatprep.subr.mxu0 0.0
    %5103 = vmatpush1.msra.mxu0 0.0
    %5104 = vmatprep.subr.mxu0 0.0
    %5105 = vmatpush1.msra.mxu0 0.0
    %5106 = vmatprep.subr.mxu0 0.0
    %5107 = vmatpush1.msra.mxu0 0.0
    %5108 = vmatprep.mubr.f32.mxu0 0.0
    %5109 = vmatmul.mubr.f32.gmra.mrb[0].mxu0 %v5042
    %v5110 = vpop.f32.mrb[0].mxu0
    %v5111 = vadd.f32 %v5039, %v5110
    %v5112 = vpop.f32.mrb[0].mxu0
    %5113 = vdwg.mxu0
    %vm5114 = vcmask 33792
    %5115 = vst.msk [vmem:[#allocation2] sm:$0x3] %vm5114, %v5111
    // Predicated region
    $region86: #{forward.1} parent=1 // pred_check
      _
    $region87: #{forward.1} parent=1 // pred_check_branch
      %5117 = sbr.rel (0) target = $region89
    $region88: #{forward.1} parent=1 // pred_region
      %s5119 = ssub.s32 32, 32
      %5120 = vsyncadd [#allocation3], %s5119
      %s5122 = sshll.u32 [#allocation2], 4
      %s5123 = int_to_ptr.vmem [resolvable:$true] %s5122
      %5125 = dma.vmem_to_hbm [thread:$0]  %s5123, 32, %s21, [#allocation3]
    $region89: #{forward.1} parent=1 // pred_fallthru
      _
    // Predicated region
    $region90: #{forward.1} parent=1 // pred_check
      _
    $region91: #{forward.1} parent=1 // pred_check_branch
      %5127 = sbr.rel (0) target = $region93
    $region92: #{forward.1} parent=1 // pred_region
      _
    $region93: #{forward.1} parent=1 // pred_fallthru
      _
    // Predicated region
    $region94: #{forward.1} parent=1 // pred_check
      _
    $region95: #{forward.1} parent=1 // pred_check_branch
      %5129 = sbr.rel (0) target = $region97
    $region96: #{forward.1} parent=1 // pred_region
      %5130 = dma.done [#allocation3], 32
    $region97: #{forward.1} parent=1 // pred_fallthru
      _
    // Predicated region
    $region98: #{forward.1} parent=1 // pred_check
      _
    $region99: #{forward.1} parent=1 // pred_check_branch
      %5132 = sbr.rel (0) target = $region101
    $region100: #{forward.1} parent=1 // pred_region
      _
    $region101: #{forward.1} parent=1 // pred_fallthru
      _
    %5133 = vsyncpa [#allocation3], 1

</llo_original>
